<compile_context>
chip_gen: v5e
topology: v5e:2x2
jax: 0.10.0
libtpu: 0.0.40
codegen_flags: <defaults>
</compile_context>

<pallas_src>
import math
from functools import partial

import jax
import jax.numpy as jnp
from jax.experimental import pallas as pl
from jax.experimental.pallas import tpu as pltpu

_PRELU_A = 0.25  # fresh nn.PReLU() slope


# ---------------------------------------------------------------------------
# Fused whole-model Pallas kernel
# ---------------------------------------------------------------------------

def _fused_model_kernel(*refs, n_st, n_txc, kh, batch, prelu_a):
    """Entire Model.forward in one kernel; every intermediate stays in VMEM.

    refs = (x, [ZT, M1a, M2, resA, bias] * n_st, Hmats, [B, brow] * n_txc, out)

    Activations are carried per batch element as (C, T*V) tiles: channels on
    sublanes, the flattened (time, joint) index on lanes (T*V = 128 here).
    """
    x_ref = refs[0]
    out_ref = refs[-1]
    w = refs[1:-1]

    st_w = [w[5 * i:5 * i + 5] for i in range(n_st)]
    hmat_ref = w[5 * n_st]
    txc_w = [w[5 * n_st + 1 + 2 * j:5 * n_st + 3 + 2 * j] for j in range(n_txc)]

    def prelu(v):
        return jnp.where(v >= 0.0, v, prelu_a * v)

    def mm(a, b):
        return jnp.dot(a, b, preferred_element_type=jnp.float32)

    # ----- ST-GCNN stack: GCNII propagation with all 1x1 convs / BN / theta
    #       pre-folded into  y = M1a @ (x @ Z^T) + M2 @ x0 + resA @ x + bias.
    xs = [x_ref[n] for n in range(batch)]                 # (Cin, T*V) per batch
    x0s = xs
    for li, (zt_ref, m1a_ref, m2_ref, resa_ref, bias_ref) in enumerate(st_w):
        zt = zt_ref[...]
        m1a, m2, ra, b = m1a_ref[...], m2_ref[...], resa_ref[...], bias_ref[...]
        new_xs = []
        for n in range(batch):
            xn, x0n = xs[n], x0s[n]
            hi = mm(xn, zt)                               # contraction over T*V lanes
            y = mm(m1a, hi) + mm(m2, x0n) + mm(ra, xn) + b
            new_xs.append(prelu(y))
        xs = new_xs
        if li == 0:
            x0s = xs                                      # x_0 <- first layer output

    # ----- temporal CNN stack: (kh, kw) 'same' Conv2d + BN + PReLU (+ skip),
    #       as  sum_dh (H-shift_dh @ x) @ B_dh  with banded B_dh precomputed.
    ph = (kh - 1) // 2
    for j in range(n_txc):
        b_ref, brow_ref = txc_w[j]
        brow = brow_ref[...]
        new_xs = []
        for n in range(batch):
            g = xs[n]                                     # (H=3, T*V)
            acc = None
            for dh in range(kh):
                gs = g if dh == ph else mm(hmat_ref[dh], g)   # zero-padded H shift
                term = mm(gs, b_ref[dh])
                acc = term if acc is None else acc + term
            y = prelu(acc + brow)
            if j > 0:
                y = y + g                                 # prelu(conv(x)) + x
            new_xs.append(y)
        xs = new_xs

    for n in range(batch):
        out_ref[n] = xs[n]


# ---------------------------------------------------------------------------
# Forward wrapper (single pallas_call, whole-array VMEM blocks, no grid)
# ---------------------------------------------------------------------------

def model_forward(x, params):
    """x: (N, 3, T_in, V) -> (N, T_out, 3, V)."""
    N, C, T_in, V = x.shape
    n_st = len(params["st"])
    n_txc = len(params["txc"])
    kh = params["hmats"].shape[0]
    T_out = params["txc"][0][1].shape[1] // V

    flat = []
    for layer in params["st"]:
        flat.extend(layer)
    flat.append(params["hmats"])
    for layer in params["txc"]:
        flat.extend(layer)

    out = pl.pallas_call(
        partial(_fused_model_kernel, n_st=n_st, n_txc=n_txc, kh=kh,
                batch=N, prelu_a=_PRELU_A),
        out_shape=jax.ShapeDtypeStruct((N, C, T_out * V), jnp.float32),
        compiler_params=pltpu.CompilerParams(vmem_limit_bytes=32 * 1024 * 1024),
    )(x.reshape(N, C, T_in * V), *flat)

    # kernel layout (N, 3, T_out*V) -> (N, T_out, 3, V)
    return jnp.transpose(out.reshape(N, C, T_out, V), (0, 2, 1, 3))


# ---------------------------------------------------------------------------
# Deterministic parameter init (Conv + eval-BN folded) and weight pre-folding
# ---------------------------------------------------------------------------

def _fold_conv_bn_1x1(key, cin, cout, eps=1e-5):
    k_w, k_b = jax.random.split(key)
    bound = 1.0 / math.sqrt(cin)
    w = jax.random.uniform(k_w, (cout, cin), jnp.float32, -bound, bound)
    b = jax.random.uniform(k_b, (cout,), jnp.float32, -bound, bound)
    scale = 1.0 / math.sqrt(1.0 + eps)   # fresh BN: gamma=1, beta=0, mean=0, var=1
    return scale * w, scale * b


def _fold_conv_bn_2d(key, cin, cout, kh, kw, eps=1e-5):
    k_w, k_b = jax.random.split(key)
    bound = 1.0 / math.sqrt(cin * kh * kw)
    w = jax.random.uniform(k_w, (cout, cin, kh, kw), jnp.float32, -bound, bound)
    b = jax.random.uniform(k_b, (cout,), jnp.float32, -bound, bound)
    scale = 1.0 / math.sqrt(1.0 + eps)
    return scale * w, scale * b


def init_raw_params(key, T_in, T_out, V, kh, kw, n_txc):
    st_cfg = [(3, 3, 64), (64, 64, 32), (32, 64, 64), (64, 64, 3)]
    TV = T_in * V
    raw = {"st": [], "txc": []}
    for (cin, cin0, cout) in st_cfg:
        key, k1, k2, k3, k4, k5 = jax.random.split(key, 6)
        res_A, res_b = _fold_conv_bn_1x1(k1, cin, cout)     # residual: Conv1x1+BN
        res2_A, res2_b = _fold_conv_bn_1x1(k2, cin0, cin)   # residual2: Conv1x1+BN
        tcn_A, tcn_b = _fold_conv_bn_1x1(k3, cin, cout)     # tcn: Conv1x1+BN
        sz = 1.0 / math.sqrt(T_in)
        Z = jax.random.uniform(k4, (TV, TV), jnp.float32, -sz, sz)
        sw = 1.0 / math.sqrt(cin)
        W = jax.random.uniform(k5, (cin, cin), jnp.float32, -sw, sw)
        raw["st"].append(dict(res_A=res_A, res_b=res_b, res2_A=res2_A, res2_b=res2_b,
                              tcn_A=tcn_A, tcn_b=tcn_b, Z=Z, W=W))
    for j in range(n_txc):
        cin_t = T_in if j == 0 else T_out
        key, k1 = jax.random.split(key)
        Wc, bc = _fold_conv_bn_2d(k1, cin_t, T_out, kh, kw)
        raw["txc"].append(dict(W=Wc, b=bc))
    return raw


def fold_params(raw, V, kh, kw, coords=3, lamda=0.5, alpha=0.1):
    """Fold theta/W/residual2/tcn/residual algebra + conv-as-matmul matrices."""
    params = {"st": [], "txc": []}
    for l, p in enumerate(raw["st"], start=1):
        theta = math.log(lamda / l + 1.0)
        M1 = theta * (p["tcn_A"] @ p["W"].T) + (1.0 - theta) * p["tcn_A"]
        M1a = (1.0 - alpha) * M1
        M2 = alpha * (M1 @ p["res2_A"])
        bias = (p["tcn_b"] + p["res_b"] + alpha * (M1 @ p["res2_b"]))[:, None]
        params["st"].append((p["Z"].T, M1a, M2, p["res_A"], bias))

    ph, pw = (kh - 1) // 2, (kw - 1) // 2
    params["hmats"] = jnp.stack(
        [jnp.eye(coords, coords, k=dh - ph, dtype=jnp.float32) for dh in range(kh)])
    for p in raw["txc"]:
        Wc, bc = p["W"], p["b"]
        cout, cin_t = Wc.shape[0], Wc.shape[1]
        Bs = []
        for dh in range(kh):
            Bd = jnp.zeros((cin_t * V, cout * V), jnp.float32)
            for dw in range(kw):
                Bd = Bd + jnp.kron(Wc[:, :, dh, dw].T,
                                   jnp.eye(V, V, k=pw - dw, dtype=jnp.float32))
            Bs.append(Bd)
        params["txc"].append((jnp.stack(Bs), jnp.repeat(bc, V)[None, :]))
    return params


# ---------------------------------------------------------------------------
# Pure-JAX reference (mirrors the PyTorch forward, eval mode) for validation
# ---------------------------------------------------------------------------

def reference_forward(x, raw, lamda=0.5, alpha=0.1):
    def prelu(z):
        return jnp.where(z >= 0.0, z, _PRELU_A * z)

    def conv1x1(z, A, b):  # z: (N, C, T, V)
        return jnp.einsum('oc,nctv->notv', A, z) + b[None, :, None, None]

    def st_layer(xx, x0, p, l):
        N, C, T, V = xx.shape
        res = conv1x1(xx, p['res_A'], p['res_b'])
        h0 = conv1x1(x0, p['res2_A'], p['res2_b'])
        xv = xx.reshape(N, C, T * V).transpose(0, 2, 1)
        h0v = h0.reshape(N, C, T * V).transpose(0, 2, 1)
        theta = math.log(lamda / l + 1.0)
        hi = jnp.einsum('pq,nqc->npc', p['Z'], xv)
        support = (1.0 - alpha) * hi + alpha * h0v
        og = theta * jnp.einsum('npc,cd->npd', support, p['W']) + (1.0 - theta) * support
        og = og.transpose(0, 2, 1).reshape(N, C, T, V)
        return prelu(conv1x1(og, p['tcn_A'], p['tcn_b']) + res)

    def conv2d_same(z, Wc, b):
        y = jax.lax.conv_general_dilated(
            z, Wc, window_strides=(1, 1), padding='SAME',
            dimension_numbers=('NCHW', 'OIHW', 'NCHW'))
        return y + b[None, :, None, None]

    x0 = x
    xx = st_layer(x, x0, raw['st'][0], 1)
    x0 = xx
    for i in range(1, len(raw['st'])):
        xx = st_layer(xx, x0, raw['st'][i], i + 1)
    xx = xx.transpose(0, 2, 1, 3)                       # (N, T_in, 3, V)
    t0 = raw['txc'][0]
    xx = prelu(conv2d_same(xx, t0['W'], t0['b']))
    for i in range(1, len(raw['txc'])):
        ti = raw['txc'][i]
        xx = prelu(conv2d_same(xx, ti['W'], ti['b'])) + xx
    return xx


# ---------------------------------------------------------------------------

if __name__ == "__main__":
    # batch N=2, coords C=3, input frames T_in=8, output frames T_out=10,
    # joints V=16, 2 temporal-CNN layers with 3x3 kernels  (T_in*V = 128 lanes).
    N, C, T_in, T_out, V = 2, 3, 8, 10, 16
    n_txc, (kh, kw) = 2, (3, 3)

    key = jax.random.PRNGKey(0)
    kp, kx = jax.random.split(key)
    raw = init_raw_params(kp, T_in, T_out, V, kh, kw, n_txc)
    params = fold_params(raw, V, kh, kw)
    x = jax.random.normal(kx, (N, C, T_in, V), jnp.float32)

    out = jax.block_until_ready(jax.jit(model_forward)(x, params))
    assert out.shape == (N, T_out, C, V), out.shape
    assert bool(jnp.isfinite(out).all())

    # numerical check of the fused/folded kernel against a straightforward
    # pure-JAX implementation of the PyTorch forward (eval semantics).
    ref = jax.block_until_ready(jax.jit(reference_forward)(x, raw))
    scale = float(jnp.max(jnp.abs(ref))) + 1e-6
    err = float(jnp.max(jnp.abs(out - ref)))
    assert err <= 8e-2 * scale + 1e-3, (err, scale)

    print("KERNEL_OK")
</pallas_src>

<mosaic_0001>
module attributes {stable_mosaic.version = 11 : i64} {
  func.func @_fused_model_kernel(%arg0: memref<2x3x128xf32, #tpu.memory_space<vmem>>, %arg1: memref<128x128xf32, #tpu.memory_space<vmem>>, %arg2: memref<64x3xf32, #tpu.memory_space<vmem>>, %arg3: memref<64x3xf32, #tpu.memory_space<vmem>>, %arg4: memref<64x3xf32, #tpu.memory_space<vmem>>, %arg5: memref<64x1xf32, #tpu.memory_space<vmem>>, %arg6: memref<128x128xf32, #tpu.memory_space<vmem>>, %arg7: memref<32x64xf32, #tpu.memory_space<vmem>>, %arg8: memref<32x64xf32, #tpu.memory_space<vmem>>, %arg9: memref<32x64xf32, #tpu.memory_space<vmem>>, %arg10: memref<32x1xf32, #tpu.memory_space<vmem>>, %arg11: memref<128x128xf32, #tpu.memory_space<vmem>>, %arg12: memref<64x32xf32, #tpu.memory_space<vmem>>, %arg13: memref<64x64xf32, #tpu.memory_space<vmem>>, %arg14: memref<64x32xf32, #tpu.memory_space<vmem>>, %arg15: memref<64x1xf32, #tpu.memory_space<vmem>>, %arg16: memref<128x128xf32, #tpu.memory_space<vmem>>, %arg17: memref<3x64xf32, #tpu.memory_space<vmem>>, %arg18: memref<3x64xf32, #tpu.memory_space<vmem>>, %arg19: memref<3x64xf32, #tpu.memory_space<vmem>>, %arg20: memref<3x1xf32, #tpu.memory_space<vmem>>, %arg21: memref<3x3x3xf32, #tpu.memory_space<vmem>>, %arg22: memref<3x128x160xf32, #tpu.memory_space<vmem>>, %arg23: memref<1x160xf32, #tpu.memory_space<vmem>>, %arg24: memref<3x160x160xf32, #tpu.memory_space<vmem>>, %arg25: memref<1x160xf32, #tpu.memory_space<vmem>>, %arg26: memref<2x3x160xf32, #tpu.memory_space<vmem>>) attributes {dimension_semantics = [], scalar_prefetch = 0 : i64, scratch_operands = 0 : i64, tpu.core_type = #tpu.core_type<tc>} {
    %c0 = arith.constant 0 : index
    %c0_0 = arith.constant 0 : index
    %c0_1 = arith.constant 0 : index
    %0 = vector.load %arg0[%c0, %c0_0, %c0_1] : memref<2x3x128xf32, #tpu.memory_space<vmem>>, vector<1x3x128xf32>
    %1 = vector.shape_cast %0 : vector<1x3x128xf32> to vector<3x128xf32>
    %c1 = arith.constant 1 : index
    %c0_2 = arith.constant 0 : index
    %c0_3 = arith.constant 0 : index
    %2 = vector.load %arg0[%c1, %c0_2, %c0_3] : memref<2x3x128xf32, #tpu.memory_space<vmem>>, vector<1x3x128xf32>
    %3 = vector.shape_cast %2 : vector<1x3x128xf32> to vector<3x128xf32>
    %c0_4 = arith.constant 0 : index
    %c0_5 = arith.constant 0 : index
    %4 = vector.load %arg1[%c0_4, %c0_5] : memref<128x128xf32, #tpu.memory_space<vmem>>, vector<128x128xf32>
    %c0_6 = arith.constant 0 : index
    %c0_7 = arith.constant 0 : index
    %5 = vector.load %arg2[%c0_6, %c0_7] : memref<64x3xf32, #tpu.memory_space<vmem>>, vector<64x3xf32>
    %c0_8 = arith.constant 0 : index
    %c0_9 = arith.constant 0 : index
    %6 = vector.load %arg3[%c0_8, %c0_9] : memref<64x3xf32, #tpu.memory_space<vmem>>, vector<64x3xf32>
    %c0_10 = arith.constant 0 : index
    %c0_11 = arith.constant 0 : index
    %7 = vector.load %arg4[%c0_10, %c0_11] : memref<64x3xf32, #tpu.memory_space<vmem>>, vector<64x3xf32>
    %c0_12 = arith.constant 0 : index
    %c0_13 = arith.constant 0 : index
    %8 = vector.load %arg5[%c0_12, %c0_13] : memref<64x1xf32, #tpu.memory_space<vmem>>, vector<64x1xf32>
    %cst = arith.constant dense<0.000000e+00> : vector<3x128xf32>
    %9 = tpu.matmul %1, %4, %cst {dimension_numbers = #tpu.dot_dimension_numbers<[1], [0], [0], [1], [0, 0, 1, 1], [], []>} : vector<3x128xf32>, vector<128x128xf32>, vector<3x128xf32> -> vector<3x128xf32>
    %cst_14 = arith.constant dense<0.000000e+00> : vector<64x128xf32>
    %10 = tpu.matmul %5, %9, %cst_14 {dimension_numbers = #tpu.dot_dimension_numbers<[1], [0], [0], [1], [0, 0, 1, 1], [], []>} : vector<64x3xf32>, vector<3x128xf32>, vector<64x128xf32> -> vector<64x128xf32>
    %cst_15 = arith.constant dense<0.000000e+00> : vector<64x128xf32>
    %11 = tpu.matmul %6, %1, %cst_15 {dimension_numbers = #tpu.dot_dimension_numbers<[1], [0], [0], [1], [0, 0, 1, 1], [], []>} : vector<64x3xf32>, vector<3x128xf32>, vector<64x128xf32> -> vector<64x128xf32>
    %12 = arith.addf %10, %11 : vector<64x128xf32>
    %cst_16 = arith.constant dense<0.000000e+00> : vector<64x128xf32>
    %13 = tpu.matmul %7, %1, %cst_16 {dimension_numbers = #tpu.dot_dimension_numbers<[1], [0], [0], [1], [0, 0, 1, 1], [], []>} : vector<64x3xf32>, vector<3x128xf32>, vector<64x128xf32> -> vector<64x128xf32>
    %14 = arith.addf %12, %13 : vector<64x128xf32>
    %15 = vector.broadcast %8 : vector<64x1xf32> to vector<64x128xf32>
    %16 = arith.addf %14, %15 : vector<64x128xf32>
    %cst_17 = arith.constant 0.000000e+00 : f32
    %17 = vector.broadcast %cst_17 : f32 to vector<64x128xf32>
    %18 = arith.cmpf oge, %16, %17 : vector<64x128xf32>
    %cst_18 = arith.constant 2.500000e-01 : f32
    %19 = vector.broadcast %cst_18 : f32 to vector<64x128xf32>
    %20 = arith.mulf %19, %16 : vector<64x128xf32>
    %21 = arith.select %18, %16, %20 : vector<64x128xi1>, vector<64x128xf32>
    %cst_19 = arith.constant dense<0.000000e+00> : vector<3x128xf32>
    %22 = tpu.matmul %3, %4, %cst_19 {dimension_numbers = #tpu.dot_dimension_numbers<[1], [0], [0], [1], [0, 0, 1, 1], [], []>} : vector<3x128xf32>, vector<128x128xf32>, vector<3x128xf32> -> vector<3x128xf32>
    %cst_20 = arith.constant dense<0.000000e+00> : vector<64x128xf32>
    %23 = tpu.matmul %5, %22, %cst_20 {dimension_numbers = #tpu.dot_dimension_numbers<[1], [0], [0], [1], [0, 0, 1, 1], [], []>} : vector<64x3xf32>, vector<3x128xf32>, vector<64x128xf32> -> vector<64x128xf32>
    %cst_21 = arith.constant dense<0.000000e+00> : vector<64x128xf32>
    %24 = tpu.matmul %6, %3, %cst_21 {dimension_numbers = #tpu.dot_dimension_numbers<[1], [0], [0], [1], [0, 0, 1, 1], [], []>} : vector<64x3xf32>, vector<3x128xf32>, vector<64x128xf32> -> vector<64x128xf32>
    %25 = arith.addf %23, %24 : vector<64x128xf32>
    %cst_22 = arith.constant dense<0.000000e+00> : vector<64x128xf32>
    %26 = tpu.matmul %7, %3, %cst_22 {dimension_numbers = #tpu.dot_dimension_numbers<[1], [0], [0], [1], [0, 0, 1, 1], [], []>} : vector<64x3xf32>, vector<3x128xf32>, vector<64x128xf32> -> vector<64x128xf32>
    %27 = arith.addf %25, %26 : vector<64x128xf32>
    %28 = vector.broadcast %8 : vector<64x1xf32> to vector<64x128xf32>
    %29 = arith.addf %27, %28 : vector<64x128xf32>
    %cst_23 = arith.constant 0.000000e+00 : f32
    %30 = vector.broadcast %cst_23 : f32 to vector<64x128xf32>
    %31 = arith.cmpf oge, %29, %30 : vector<64x128xf32>
    %cst_24 = arith.constant 2.500000e-01 : f32
    %32 = vector.broadcast %cst_24 : f32 to vector<64x128xf32>
    %33 = arith.mulf %32, %29 : vector<64x128xf32>
    %34 = arith.select %31, %29, %33 : vector<64x128xi1>, vector<64x128xf32>
    %c0_25 = arith.constant 0 : index
    %c0_26 = arith.constant 0 : index
    %35 = vector.load %arg6[%c0_25, %c0_26] : memref<128x128xf32, #tpu.memory_space<vmem>>, vector<128x128xf32>
    %c0_27 = arith.constant 0 : index
    %c0_28 = arith.constant 0 : index
    %36 = vector.load %arg7[%c0_27, %c0_28] : memref<32x64xf32, #tpu.memory_space<vmem>>, vector<32x64xf32>
    %c0_29 = arith.constant 0 : index
    %c0_30 = arith.constant 0 : index
    %37 = vector.load %arg8[%c0_29, %c0_30] : memref<32x64xf32, #tpu.memory_space<vmem>>, vector<32x64xf32>
    %c0_31 = arith.constant 0 : index
    %c0_32 = arith.constant 0 : index
    %38 = vector.load %arg9[%c0_31, %c0_32] : memref<32x64xf32, #tpu.memory_space<vmem>>, vector<32x64xf32>
    %c0_33 = arith.constant 0 : index
    %c0_34 = arith.constant 0 : index
    %39 = vector.load %arg10[%c0_33, %c0_34] : memref<32x1xf32, #tpu.memory_space<vmem>>, vector<32x1xf32>
    %cst_35 = arith.constant dense<0.000000e+00> : vector<64x128xf32>
    %40 = tpu.matmul %21, %35, %cst_35 {dimension_numbers = #tpu.dot_dimension_numbers<[1], [0], [0], [1], [0, 0, 1, 1], [], []>} : vector<64x128xf32>, vector<128x128xf32>, vector<64x128xf32> -> vector<64x128xf32>
    %cst_36 = arith.constant dense<0.000000e+00> : vector<32x128xf32>
    %41 = tpu.matmul %36, %40, %cst_36 {dimension_numbers = #tpu.dot_dimension_numbers<[1], [0], [0], [1], [0, 0, 1, 1], [], []>} : vector<32x64xf32>, vector<64x128xf32>, vector<32x128xf32> -> vector<32x128xf32>
    %cst_37 = arith.constant dense<0.000000e+00> : vector<32x128xf32>
    %42 = tpu.matmul %37, %21, %cst_37 {dimension_numbers = #tpu.dot_dimension_numbers<[1], [0], [0], [1], [0, 0, 1, 1], [], []>} : vector<32x64xf32>, vector<64x128xf32>, vector<32x128xf32> -> vector<32x128xf32>
    %43 = arith.addf %41, %42 : vector<32x128xf32>
    %cst_38 = arith.constant dense<0.000000e+00> : vector<32x128xf32>
    %44 = tpu.matmul %38, %21, %cst_38 {dimension_numbers = #tpu.dot_dimension_numbers<[1], [0], [0], [1], [0, 0, 1, 1], [], []>} : vector<32x64xf32>, vector<64x128xf32>, vector<32x128xf32> -> vector<32x128xf32>
    %45 = arith.addf %43, %44 : vector<32x128xf32>
    %46 = vector.broadcast %39 : vector<32x1xf32> to vector<32x128xf32>
    %47 = arith.addf %45, %46 : vector<32x128xf32>
    %cst_39 = arith.constant 0.000000e+00 : f32
    %48 = vector.broadcast %cst_39 : f32 to vector<32x128xf32>
    %49 = arith.cmpf oge, %47, %48 : vector<32x128xf32>
    %cst_40 = arith.constant 2.500000e-01 : f32
    %50 = vector.broadcast %cst_40 : f32 to vector<32x128xf32>
    %51 = arith.mulf %50, %47 : vector<32x128xf32>
    %52 = arith.select %49, %47, %51 : vector<32x128xi1>, vector<32x128xf32>
    %cst_41 = arith.constant dense<0.000000e+00> : vector<64x128xf32>
    %53 = tpu.matmul %34, %35, %cst_41 {dimension_numbers = #tpu.dot_dimension_numbers<[1], [0], [0], [1], [0, 0, 1, 1], [], []>} : vector<64x128xf32>, vector<128x128xf32>, vector<64x128xf32> -> vector<64x128xf32>
    %cst_42 = arith.constant dense<0.000000e+00> : vector<32x128xf32>
    %54 = tpu.matmul %36, %53, %cst_42 {dimension_numbers = #tpu.dot_dimension_numbers<[1], [0], [0], [1], [0, 0, 1, 1], [], []>} : vector<32x64xf32>, vector<64x128xf32>, vector<32x128xf32> -> vector<32x128xf32>
    %cst_43 = arith.constant dense<0.000000e+00> : vector<32x128xf32>
    %55 = tpu.matmul %37, %34, %cst_43 {dimension_numbers = #tpu.dot_dimension_numbers<[1], [0], [0], [1], [0, 0, 1, 1], [], []>} : vector<32x64xf32>, vector<64x128xf32>, vector<32x128xf32> -> vector<32x128xf32>
    %56 = arith.addf %54, %55 : vector<32x128xf32>
    %cst_44 = arith.constant dense<0.000000e+00> : vector<32x128xf32>
    %57 = tpu.matmul %38, %34, %cst_44 {dimension_numbers = #tpu.dot_dimension_numbers<[1], [0], [0], [1], [0, 0, 1, 1], [], []>} : vector<32x64xf32>, vector<64x128xf32>, vector<32x128xf32> -> vector<32x128xf32>
    %58 = arith.addf %56, %57 : vector<32x128xf32>
    %59 = vector.broadcast %39 : vector<32x1xf32> to vector<32x128xf32>
    %60 = arith.addf %58, %59 : vector<32x128xf32>
    %cst_45 = arith.constant 0.000000e+00 : f32
    %61 = vector.broadcast %cst_45 : f32 to vector<32x128xf32>
    %62 = arith.cmpf oge, %60, %61 : vector<32x128xf32>
    %cst_46 = arith.constant 2.500000e-01 : f32
    %63 = vector.broadcast %cst_46 : f32 to vector<32x128xf32>
    %64 = arith.mulf %63, %60 : vector<32x128xf32>
    %65 = arith.select %62, %60, %64 : vector<32x128xi1>, vector<32x128xf32>
    %c0_47 = arith.constant 0 : index
    %c0_48 = arith.constant 0 : index
    %66 = vector.load %arg11[%c0_47, %c0_48] : memref<128x128xf32, #tpu.memory_space<vmem>>, vector<128x128xf32>
    %c0_49 = arith.constant 0 : index
    %c0_50 = arith.constant 0 : index
    %67 = vector.load %arg12[%c0_49, %c0_50] : memref<64x32xf32, #tpu.memory_space<vmem>>, vector<64x32xf32>
    %c0_51 = arith.constant 0 : index
    %c0_52 = arith.constant 0 : index
    %68 = vector.load %arg13[%c0_51, %c0_52] : memref<64x64xf32, #tpu.memory_space<vmem>>, vector<64x64xf32>
    %c0_53 = arith.constant 0 : index
    %c0_54 = arith.constant 0 : index
    %69 = vector.load %arg14[%c0_53, %c0_54] : memref<64x32xf32, #tpu.memory_space<vmem>>, vector<64x32xf32>
    %c0_55 = arith.constant 0 : index
    %c0_56 = arith.constant 0 : index
    %70 = vector.load %arg15[%c0_55, %c0_56] : memref<64x1xf32, #tpu.memory_space<vmem>>, vector<64x1xf32>
    %cst_57 = arith.constant dense<0.000000e+00> : vector<32x128xf32>
    %71 = tpu.matmul %52, %66, %cst_57 {dimension_numbers = #tpu.dot_dimension_numbers<[1], [0], [0], [1], [0, 0, 1, 1], [], []>} : vector<32x128xf32>, vector<128x128xf32>, vector<32x128xf32> -> vector<32x128xf32>
    %cst_58 = arith.constant dense<0.000000e+00> : vector<64x128xf32>
    %72 = tpu.matmul %67, %71, %cst_58 {dimension_numbers = #tpu.dot_dimension_numbers<[1], [0], [0], [1], [0, 0, 1, 1], [], []>} : vector<64x32xf32>, vector<32x128xf32>, vector<64x128xf32> -> vector<64x128xf32>
    %cst_59 = arith.constant dense<0.000000e+00> : vector<64x128xf32>
    %73 = tpu.matmul %68, %21, %cst_59 {dimension_numbers = #tpu.dot_dimension_numbers<[1], [0], [0], [1], [0, 0, 1, 1], [], []>} : vector<64x64xf32>, vector<64x128xf32>, vector<64x128xf32> -> vector<64x128xf32>
    %74 = arith.addf %72, %73 : vector<64x128xf32>
    %cst_60 = arith.constant dense<0.000000e+00> : vector<64x128xf32>
    %75 = tpu.matmul %69, %52, %cst_60 {dimension_numbers = #tpu.dot_dimension_numbers<[1], [0], [0], [1], [0, 0, 1, 1], [], []>} : vector<64x32xf32>, vector<32x128xf32>, vector<64x128xf32> -> vector<64x128xf32>
    %76 = arith.addf %74, %75 : vector<64x128xf32>
    %77 = vector.broadcast %70 : vector<64x1xf32> to vector<64x128xf32>
    %78 = arith.addf %76, %77 : vector<64x128xf32>
    %cst_61 = arith.constant 0.000000e+00 : f32
    %79 = vector.broadcast %cst_61 : f32 to vector<64x128xf32>
    %80 = arith.cmpf oge, %78, %79 : vector<64x128xf32>
    %cst_62 = arith.constant 2.500000e-01 : f32
    %81 = vector.broadcast %cst_62 : f32 to vector<64x128xf32>
    %82 = arith.mulf %81, %78 : vector<64x128xf32>
    %83 = arith.select %80, %78, %82 : vector<64x128xi1>, vector<64x128xf32>
    %cst_63 = arith.constant dense<0.000000e+00> : vector<32x128xf32>
    %84 = tpu.matmul %65, %66, %cst_63 {dimension_numbers = #tpu.dot_dimension_numbers<[1], [0], [0], [1], [0, 0, 1, 1], [], []>} : vector<32x128xf32>, vector<128x128xf32>, vector<32x128xf32> -> vector<32x128xf32>
    %cst_64 = arith.constant dense<0.000000e+00> : vector<64x128xf32>
    %85 = tpu.matmul %67, %84, %cst_64 {dimension_numbers = #tpu.dot_dimension_numbers<[1], [0], [0], [1], [0, 0, 1, 1], [], []>} : vector<64x32xf32>, vector<32x128xf32>, vector<64x128xf32> -> vector<64x128xf32>
    %cst_65 = arith.constant dense<0.000000e+00> : vector<64x128xf32>
    %86 = tpu.matmul %68, %34, %cst_65 {dimension_numbers = #tpu.dot_dimension_numbers<[1], [0], [0], [1], [0, 0, 1, 1], [], []>} : vector<64x64xf32>, vector<64x128xf32>, vector<64x128xf32> -> vector<64x128xf32>
    %87 = arith.addf %85, %86 : vector<64x128xf32>
    %cst_66 = arith.constant dense<0.000000e+00> : vector<64x128xf32>
    %88 = tpu.matmul %69, %65, %cst_66 {dimension_numbers = #tpu.dot_dimension_numbers<[1], [0], [0], [1], [0, 0, 1, 1], [], []>} : vector<64x32xf32>, vector<32x128xf32>, vector<64x128xf32> -> vector<64x128xf32>
    %89 = arith.addf %87, %88 : vector<64x128xf32>
    %90 = vector.broadcast %70 : vector<64x1xf32> to vector<64x128xf32>
    %91 = arith.addf %89, %90 : vector<64x128xf32>
    %cst_67 = arith.constant 0.000000e+00 : f32
    %92 = vector.broadcast %cst_67 : f32 to vector<64x128xf32>
    %93 = arith.cmpf oge, %91, %92 : vector<64x128xf32>
    %cst_68 = arith.constant 2.500000e-01 : f32
    %94 = vector.broadcast %cst_68 : f32 to vector<64x128xf32>
    %95 = arith.mulf %94, %91 : vector<64x128xf32>
    %96 = arith.select %93, %91, %95 : vector<64x128xi1>, vector<64x128xf32>
    %c0_69 = arith.constant 0 : index
    %c0_70 = arith.constant 0 : index
    %97 = vector.load %arg16[%c0_69, %c0_70] : memref<128x128xf32, #tpu.memory_space<vmem>>, vector<128x128xf32>
    %c0_71 = arith.constant 0 : index
    %c0_72 = arith.constant 0 : index
    %98 = vector.load %arg17[%c0_71, %c0_72] : memref<3x64xf32, #tpu.memory_space<vmem>>, vector<3x64xf32>
    %c0_73 = arith.constant 0 : index
    %c0_74 = arith.constant 0 : index
    %99 = vector.load %arg18[%c0_73, %c0_74] : memref<3x64xf32, #tpu.memory_space<vmem>>, vector<3x64xf32>
    %c0_75 = arith.constant 0 : index
    %c0_76 = arith.constant 0 : index
    %100 = vector.load %arg19[%c0_75, %c0_76] : memref<3x64xf32, #tpu.memory_space<vmem>>, vector<3x64xf32>
    %c0_77 = arith.constant 0 : index
    %c0_78 = arith.constant 0 : index
    %101 = vector.load %arg20[%c0_77, %c0_78] : memref<3x1xf32, #tpu.memory_space<vmem>>, vector<3x1xf32>
    %cst_79 = arith.constant dense<0.000000e+00> : vector<64x128xf32>
    %102 = tpu.matmul %83, %97, %cst_79 {dimension_numbers = #tpu.dot_dimension_numbers<[1], [0], [0], [1], [0, 0, 1, 1], [], []>} : vector<64x128xf32>, vector<128x128xf32>, vector<64x128xf32> -> vector<64x128xf32>
    %cst_80 = arith.constant dense<0.000000e+00> : vector<3x128xf32>
    %103 = tpu.matmul %98, %102, %cst_80 {dimension_numbers = #tpu.dot_dimension_numbers<[1], [0], [0], [1], [0, 0, 1, 1], [], []>} : vector<3x64xf32>, vector<64x128xf32>, vector<3x128xf32> -> vector<3x128xf32>
    %cst_81 = arith.constant dense<0.000000e+00> : vector<3x128xf32>
    %104 = tpu.matmul %99, %21, %cst_81 {dimension_numbers = #tpu.dot_dimension_numbers<[1], [0], [0], [1], [0, 0, 1, 1], [], []>} : vector<3x64xf32>, vector<64x128xf32>, vector<3x128xf32> -> vector<3x128xf32>
    %105 = arith.addf %103, %104 : vector<3x128xf32>
    %cst_82 = arith.constant dense<0.000000e+00> : vector<3x128xf32>
    %106 = tpu.matmul %100, %83, %cst_82 {dimension_numbers = #tpu.dot_dimension_numbers<[1], [0], [0], [1], [0, 0, 1, 1], [], []>} : vector<3x64xf32>, vector<64x128xf32>, vector<3x128xf32> -> vector<3x128xf32>
    %107 = arith.addf %105, %106 : vector<3x128xf32>
    %108 = vector.broadcast %101 : vector<3x1xf32> to vector<3x128xf32>
    %109 = arith.addf %107, %108 : vector<3x128xf32>
    %cst_83 = arith.constant 0.000000e+00 : f32
    %110 = vector.broadcast %cst_83 : f32 to vector<3x128xf32>
    %111 = arith.cmpf oge, %109, %110 : vector<3x128xf32>
    %cst_84 = arith.constant 2.500000e-01 : f32
    %112 = vector.broadcast %cst_84 : f32 to vector<3x128xf32>
    %113 = arith.mulf %112, %109 : vector<3x128xf32>
    %114 = arith.select %111, %109, %113 : vector<3x128xi1>, vector<3x128xf32>
    %cst_85 = arith.constant dense<0.000000e+00> : vector<64x128xf32>
    %115 = tpu.matmul %96, %97, %cst_85 {dimension_numbers = #tpu.dot_dimension_numbers<[1], [0], [0], [1], [0, 0, 1, 1], [], []>} : vector<64x128xf32>, vector<128x128xf32>, vector<64x128xf32> -> vector<64x128xf32>
    %cst_86 = arith.constant dense<0.000000e+00> : vector<3x128xf32>
    %116 = tpu.matmul %98, %115, %cst_86 {dimension_numbers = #tpu.dot_dimension_numbers<[1], [0], [0], [1], [0, 0, 1, 1], [], []>} : vector<3x64xf32>, vector<64x128xf32>, vector<3x128xf32> -> vector<3x128xf32>
    %cst_87 = arith.constant dense<0.000000e+00> : vector<3x128xf32>
    %117 = tpu.matmul %99, %34, %cst_87 {dimension_numbers = #tpu.dot_dimension_numbers<[1], [0], [0], [1], [0, 0, 1, 1], [], []>} : vector<3x64xf32>, vector<64x128xf32>, vector<3x128xf32> -> vector<3x128xf32>
    %118 = arith.addf %116, %117 : vector<3x128xf32>
    %cst_88 = arith.constant dense<0.000000e+00> : vector<3x128xf32>
    %119 = tpu.matmul %100, %96, %cst_88 {dimension_numbers = #tpu.dot_dimension_numbers<[1], [0], [0], [1], [0, 0, 1, 1], [], []>} : vector<3x64xf32>, vector<64x128xf32>, vector<3x128xf32> -> vector<3x128xf32>
    %120 = arith.addf %118, %119 : vector<3x128xf32>
    %121 = vector.broadcast %101 : vector<3x1xf32> to vector<3x128xf32>
    %122 = arith.addf %120, %121 : vector<3x128xf32>
    %cst_89 = arith.constant 0.000000e+00 : f32
    %123 = vector.broadcast %cst_89 : f32 to vector<3x128xf32>
    %124 = arith.cmpf oge, %122, %123 : vector<3x128xf32>
    %cst_90 = arith.constant 2.500000e-01 : f32
    %125 = vector.broadcast %cst_90 : f32 to vector<3x128xf32>
    %126 = arith.mulf %125, %122 : vector<3x128xf32>
    %127 = arith.select %124, %122, %126 : vector<3x128xi1>, vector<3x128xf32>
    %c0_91 = arith.constant 0 : index
    %c0_92 = arith.constant 0 : index
    %128 = vector.load %arg23[%c0_91, %c0_92] : memref<1x160xf32, #tpu.memory_space<vmem>>, vector<1x160xf32>
    %c0_93 = arith.constant 0 : index
    %c0_94 = arith.constant 0 : index
    %c0_95 = arith.constant 0 : index
    %129 = vector.load %arg21[%c0_93, %c0_94, %c0_95] : memref<3x3x3xf32, #tpu.memory_space<vmem>>, vector<1x3x3xf32>
    %130 = vector.shape_cast %129 : vector<1x3x3xf32> to vector<3x3xf32>
    %cst_96 = arith.constant dense<0.000000e+00> : vector<3x128xf32>
    %131 = tpu.matmul %130, %114, %cst_96 {dimension_numbers = #tpu.dot_dimension_numbers<[1], [0], [0], [1], [0, 0, 1, 1], [], []>} : vector<3x3xf32>, vector<3x128xf32>, vector<3x128xf32> -> vector<3x128xf32>
    %c0_97 = arith.constant 0 : index
    %c0_98 = arith.constant 0 : index
    %c0_99 = arith.constant 0 : index
    %132 = vector.load %arg22[%c0_97, %c0_98, %c0_99] : memref<3x128x160xf32, #tpu.memory_space<vmem>>, vector<1x128x160xf32>
    %133 = vector.shape_cast %132 : vector<1x128x160xf32> to vector<128x160xf32>
    %cst_100 = arith.constant dense<0.000000e+00> : vector<3x160xf32>
    %134 = tpu.matmul %131, %133, %cst_100 {dimension_numbers = #tpu.dot_dimension_numbers<[1], [0], [0], [1], [0, 0, 1, 1], [], []>} : vector<3x128xf32>, vector<128x160xf32>, vector<3x160xf32> -> vector<3x160xf32>
    %c1_101 = arith.constant 1 : index
    %c0_102 = arith.constant 0 : index
    %c0_103 = arith.constant 0 : index
    %135 = vector.load %arg22[%c1_101, %c0_102, %c0_103] : memref<3x128x160xf32, #tpu.memory_space<vmem>>, vector<1x128x160xf32>
    %136 = vector.shape_cast %135 : vector<1x128x160xf32> to vector<128x160xf32>
    %cst_104 = arith.constant dense<0.000000e+00> : vector<3x160xf32>
    %137 = tpu.matmul %114, %136, %cst_104 {dimension_numbers = #tpu.dot_dimension_numbers<[1], [0], [0], [1], [0, 0, 1, 1], [], []>} : vector<3x128xf32>, vector<128x160xf32>, vector<3x160xf32> -> vector<3x160xf32>
    %138 = arith.addf %134, %137 : vector<3x160xf32>
    %c2 = arith.constant 2 : index
    %c0_105 = arith.constant 0 : index
    %c0_106 = arith.constant 0 : index
    %139 = vector.load %arg21[%c2, %c0_105, %c0_106] : memref<3x3x3xf32, #tpu.memory_space<vmem>>, vector<1x3x3xf32>
    %140 = vector.shape_cast %139 : vector<1x3x3xf32> to vector<3x3xf32>
    %cst_107 = arith.constant dense<0.000000e+00> : vector<3x128xf32>
    %141 = tpu.matmul %140, %114, %cst_107 {dimension_numbers = #tpu.dot_dimension_numbers<[1], [0], [0], [1], [0, 0, 1, 1], [], []>} : vector<3x3xf32>, vector<3x128xf32>, vector<3x128xf32> -> vector<3x128xf32>
    %c2_108 = arith.constant 2 : index
    %c0_109 = arith.constant 0 : index
    %c0_110 = arith.constant 0 : index
    %142 = vector.load %arg22[%c2_108, %c0_109, %c0_110] : memref<3x128x160xf32, #tpu.memory_space<vmem>>, vector<1x128x160xf32>
    %143 = vector.shape_cast %142 : vector<1x128x160xf32> to vector<128x160xf32>
    %cst_111 = arith.constant dense<0.000000e+00> : vector<3x160xf32>
    %144 = tpu.matmul %141, %143, %cst_111 {dimension_numbers = #tpu.dot_dimension_numbers<[1], [0], [0], [1], [0, 0, 1, 1], [], []>} : vector<3x128xf32>, vector<128x160xf32>, vector<3x160xf32> -> vector<3x160xf32>
    %145 = arith.addf %138, %144 : vector<3x160xf32>
    %146 = vector.broadcast %128 : vector<1x160xf32> to vector<3x160xf32>
    %147 = arith.addf %145, %146 : vector<3x160xf32>
    %cst_112 = arith.constant 0.000000e+00 : f32
    %148 = vector.broadcast %cst_112 : f32 to vector<3x160xf32>
    %149 = arith.cmpf oge, %147, %148 : vector<3x160xf32>
    %cst_113 = arith.constant 2.500000e-01 : f32
    %150 = vector.broadcast %cst_113 : f32 to vector<3x160xf32>
    %151 = arith.mulf %150, %147 : vector<3x160xf32>
    %152 = arith.select %149, %147, %151 : vector<3x160xi1>, vector<3x160xf32>
    %c0_114 = arith.constant 0 : index
    %c0_115 = arith.constant 0 : index
    %c0_116 = arith.constant 0 : index
    %153 = vector.load %arg21[%c0_114, %c0_115, %c0_116] : memref<3x3x3xf32, #tpu.memory_space<vmem>>, vector<1x3x3xf32>
    %154 = vector.shape_cast %153 : vector<1x3x3xf32> to vector<3x3xf32>
    %cst_117 = arith.constant dense<0.000000e+00> : vector<3x128xf32>
    %155 = tpu.matmul %154, %127, %cst_117 {dimension_numbers = #tpu.dot_dimension_numbers<[1], [0], [0], [1], [0, 0, 1, 1], [], []>} : vector<3x3xf32>, vector<3x128xf32>, vector<3x128xf32> -> vector<3x128xf32>
    %c0_118 = arith.constant 0 : index
    %c0_119 = arith.constant 0 : index
    %c0_120 = arith.constant 0 : index
    %156 = vector.load %arg22[%c0_118, %c0_119, %c0_120] : memref<3x128x160xf32, #tpu.memory_space<vmem>>, vector<1x128x160xf32>
    %157 = vector.shape_cast %156 : vector<1x128x160xf32> to vector<128x160xf32>
    %cst_121 = arith.constant dense<0.000000e+00> : vector<3x160xf32>
    %158 = tpu.matmul %155, %157, %cst_121 {dimension_numbers = #tpu.dot_dimension_numbers<[1], [0], [0], [1], [0, 0, 1, 1], [], []>} : vector<3x128xf32>, vector<128x160xf32>, vector<3x160xf32> -> vector<3x160xf32>
    %c1_122 = arith.constant 1 : index
    %c0_123 = arith.constant 0 : index
    %c0_124 = arith.constant 0 : index
    %159 = vector.load %arg22[%c1_122, %c0_123, %c0_124] : memref<3x128x160xf32, #tpu.memory_space<vmem>>, vector<1x128x160xf32>
    %160 = vector.shape_cast %159 : vector<1x128x160xf32> to vector<128x160xf32>
    %cst_125 = arith.constant dense<0.000000e+00> : vector<3x160xf32>
    %161 = tpu.matmul %127, %160, %cst_125 {dimension_numbers = #tpu.dot_dimension_numbers<[1], [0], [0], [1], [0, 0, 1, 1], [], []>} : vector<3x128xf32>, vector<128x160xf32>, vector<3x160xf32> -> vector<3x160xf32>
    %162 = arith.addf %158, %161 : vector<3x160xf32>
    %c2_126 = arith.constant 2 : index
    %c0_127 = arith.constant 0 : index
    %c0_128 = arith.constant 0 : index
    %163 = vector.load %arg21[%c2_126, %c0_127, %c0_128] : memref<3x3x3xf32, #tpu.memory_space<vmem>>, vector<1x3x3xf32>
    %164 = vector.shape_cast %163 : vector<1x3x3xf32> to vector<3x3xf32>
    %cst_129 = arith.constant dense<0.000000e+00> : vector<3x128xf32>
    %165 = tpu.matmul %164, %127, %cst_129 {dimension_numbers = #tpu.dot_dimension_numbers<[1], [0], [0], [1], [0, 0, 1, 1], [], []>} : vector<3x3xf32>, vector<3x128xf32>, vector<3x128xf32> -> vector<3x128xf32>
    %c2_130 = arith.constant 2 : index
    %c0_131 = arith.constant 0 : index
    %c0_132 = arith.constant 0 : index
    %166 = vector.load %arg22[%c2_130, %c0_131, %c0_132] : memref<3x128x160xf32, #tpu.memory_space<vmem>>, vector<1x128x160xf32>
    %167 = vector.shape_cast %166 : vector<1x128x160xf32> to vector<128x160xf32>
    %cst_133 = arith.constant dense<0.000000e+00> : vector<3x160xf32>
    %168 = tpu.matmul %165, %167, %cst_133 {dimension_numbers = #tpu.dot_dimension_numbers<[1], [0], [0], [1], [0, 0, 1, 1], [], []>} : vector<3x128xf32>, vector<128x160xf32>, vector<3x160xf32> -> vector<3x160xf32>
    %169 = arith.addf %162, %168 : vector<3x160xf32>
    %170 = vector.broadcast %128 : vector<1x160xf32> to vector<3x160xf32>
    %171 = arith.addf %169, %170 : vector<3x160xf32>
    %cst_134 = arith.constant 0.000000e+00 : f32
    %172 = vector.broadcast %cst_134 : f32 to vector<3x160xf32>
    %173 = arith.cmpf oge, %171, %172 : vector<3x160xf32>
    %cst_135 = arith.constant 2.500000e-01 : f32
    %174 = vector.broadcast %cst_135 : f32 to vector<3x160xf32>
    %175 = arith.mulf %174, %171 : vector<3x160xf32>
    %176 = arith.select %173, %171, %175 : vector<3x160xi1>, vector<3x160xf32>
    %c0_136 = arith.constant 0 : index
    %c0_137 = arith.constant 0 : index
    %177 = vector.load %arg25[%c0_136, %c0_137] : memref<1x160xf32, #tpu.memory_space<vmem>>, vector<1x160xf32>
    %c0_138 = arith.constant 0 : index
    %c0_139 = arith.constant 0 : index
    %c0_140 = arith.constant 0 : index
    %178 = vector.load %arg21[%c0_138, %c0_139, %c0_140] : memref<3x3x3xf32, #tpu.memory_space<vmem>>, vector<1x3x3xf32>
    %179 = vector.shape_cast %178 : vector<1x3x3xf32> to vector<3x3xf32>
    %cst_141 = arith.constant dense<0.000000e+00> : vector<3x160xf32>
    %180 = tpu.matmul %179, %152, %cst_141 {dimension_numbers = #tpu.dot_dimension_numbers<[1], [0], [0], [1], [0, 0, 1, 1], [], []>} : vector<3x3xf32>, vector<3x160xf32>, vector<3x160xf32> -> vector<3x160xf32>
    %c0_142 = arith.constant 0 : index
    %c0_143 = arith.constant 0 : index
    %c0_144 = arith.constant 0 : index
    %181 = vector.load %arg24[%c0_142, %c0_143, %c0_144] : memref<3x160x160xf32, #tpu.memory_space<vmem>>, vector<1x160x160xf32>
    %182 = vector.shape_cast %181 : vector<1x160x160xf32> to vector<160x160xf32>
    %cst_145 = arith.constant dense<0.000000e+00> : vector<3x160xf32>
    %183 = tpu.matmul %180, %182, %cst_145 {dimension_numbers = #tpu.dot_dimension_numbers<[1], [0], [0], [1], [0, 0, 1, 1], [], []>} : vector<3x160xf32>, vector<160x160xf32>, vector<3x160xf32> -> vector<3x160xf32>
    %c1_146 = arith.constant 1 : index
    %c0_147 = arith.constant 0 : index
    %c0_148 = arith.constant 0 : index
    %184 = vector.load %arg24[%c1_146, %c0_147, %c0_148] : memref<3x160x160xf32, #tpu.memory_space<vmem>>, vector<1x160x160xf32>
    %185 = vector.shape_cast %184 : vector<1x160x160xf32> to vector<160x160xf32>
    %cst_149 = arith.constant dense<0.000000e+00> : vector<3x160xf32>
    %186 = tpu.matmul %152, %185, %cst_149 {dimension_numbers = #tpu.dot_dimension_numbers<[1], [0], [0], [1], [0, 0, 1, 1], [], []>} : vector<3x160xf32>, vector<160x160xf32>, vector<3x160xf32> -> vector<3x160xf32>
    %187 = arith.addf %183, %186 : vector<3x160xf32>
    %c2_150 = arith.constant 2 : index
    %c0_151 = arith.constant 0 : index
    %c0_152 = arith.constant 0 : index
    %188 = vector.load %arg21[%c2_150, %c0_151, %c0_152] : memref<3x3x3xf32, #tpu.memory_space<vmem>>, vector<1x3x3xf32>
    %189 = vector.shape_cast %188 : vector<1x3x3xf32> to vector<3x3xf32>
    %cst_153 = arith.constant dense<0.000000e+00> : vector<3x160xf32>
    %190 = tpu.matmul %189, %152, %cst_153 {dimension_numbers = #tpu.dot_dimension_numbers<[1], [0], [0], [1], [0, 0, 1, 1], [], []>} : vector<3x3xf32>, vector<3x160xf32>, vector<3x160xf32> -> vector<3x160xf32>
    %c2_154 = arith.constant 2 : index
    %c0_155 = arith.constant 0 : index
    %c0_156 = arith.constant 0 : index
    %191 = vector.load %arg24[%c2_154, %c0_155, %c0_156] : memref<3x160x160xf32, #tpu.memory_space<vmem>>, vector<1x160x160xf32>
    %192 = vector.shape_cast %191 : vector<1x160x160xf32> to vector<160x160xf32>
    %cst_157 = arith.constant dense<0.000000e+00> : vector<3x160xf32>
    %193 = tpu.matmul %190, %192, %cst_157 {dimension_numbers = #tpu.dot_dimension_numbers<[1], [0], [0], [1], [0, 0, 1, 1], [], []>} : vector<3x160xf32>, vector<160x160xf32>, vector<3x160xf32> -> vector<3x160xf32>
    %194 = arith.addf %187, %193 : vector<3x160xf32>
    %195 = vector.broadcast %177 : vector<1x160xf32> to vector<3x160xf32>
    %196 = arith.addf %194, %195 : vector<3x160xf32>
    %cst_158 = arith.constant 0.000000e+00 : f32
    %197 = vector.broadcast %cst_158 : f32 to vector<3x160xf32>
    %198 = arith.cmpf oge, %196, %197 : vector<3x160xf32>
    %cst_159 = arith.constant 2.500000e-01 : f32
    %199 = vector.broadcast %cst_159 : f32 to vector<3x160xf32>
    %200 = arith.mulf %199, %196 : vector<3x160xf32>
    %201 = arith.select %198, %196, %200 : vector<3x160xi1>, vector<3x160xf32>
    %202 = arith.addf %201, %152 : vector<3x160xf32>
    %c0_160 = arith.constant 0 : index
    %c0_161 = arith.constant 0 : index
    %c0_162 = arith.constant 0 : index
    %203 = vector.load %arg21[%c0_160, %c0_161, %c0_162] : memref<3x3x3xf32, #tpu.memory_space<vmem>>, vector<1x3x3xf32>
    %204 = vector.shape_cast %203 : vector<1x3x3xf32> to vector<3x3xf32>
    %cst_163 = arith.constant dense<0.000000e+00> : vector<3x160xf32>
    %205 = tpu.matmul %204, %176, %cst_163 {dimension_numbers = #tpu.dot_dimension_numbers<[1], [0], [0], [1], [0, 0, 1, 1], [], []>} : vector<3x3xf32>, vector<3x160xf32>, vector<3x160xf32> -> vector<3x160xf32>
    %c0_164 = arith.constant 0 : index
    %c0_165 = arith.constant 0 : index
    %c0_166 = arith.constant 0 : index
    %206 = vector.load %arg24[%c0_164, %c0_165, %c0_166] : memref<3x160x160xf32, #tpu.memory_space<vmem>>, vector<1x160x160xf32>
    %207 = vector.shape_cast %206 : vector<1x160x160xf32> to vector<160x160xf32>
    %cst_167 = arith.constant dense<0.000000e+00> : vector<3x160xf32>
    %208 = tpu.matmul %205, %207, %cst_167 {dimension_numbers = #tpu.dot_dimension_numbers<[1], [0], [0], [1], [0, 0, 1, 1], [], []>} : vector<3x160xf32>, vector<160x160xf32>, vector<3x160xf32> -> vector<3x160xf32>
    %c1_168 = arith.constant 1 : index
    %c0_169 = arith.constant 0 : index
    %c0_170 = arith.constant 0 : index
    %209 = vector.load %arg24[%c1_168, %c0_169, %c0_170] : memref<3x160x160xf32, #tpu.memory_space<vmem>>, vector<1x160x160xf32>
    %210 = vector.shape_cast %209 : vector<1x160x160xf32> to vector<160x160xf32>
    %cst_171 = arith.constant dense<0.000000e+00> : vector<3x160xf32>
    %211 = tpu.matmul %176, %210, %cst_171 {dimension_numbers = #tpu.dot_dimension_numbers<[1], [0], [0], [1], [0, 0, 1, 1], [], []>} : vector<3x160xf32>, vector<160x160xf32>, vector<3x160xf32> -> vector<3x160xf32>
    %212 = arith.addf %208, %211 : vector<3x160xf32>
    %c2_172 = arith.constant 2 : index
    %c0_173 = arith.constant 0 : index
    %c0_174 = arith.constant 0 : index
    %213 = vector.load %arg21[%c2_172, %c0_173, %c0_174] : memref<3x3x3xf32, #tpu.memory_space<vmem>>, vector<1x3x3xf32>
    %214 = vector.shape_cast %213 : vector<1x3x3xf32> to vector<3x3xf32>
    %cst_175 = arith.constant dense<0.000000e+00> : vector<3x160xf32>
    %215 = tpu.matmul %214, %176, %cst_175 {dimension_numbers = #tpu.dot_dimension_numbers<[1], [0], [0], [1], [0, 0, 1, 1], [], []>} : vector<3x3xf32>, vector<3x160xf32>, vector<3x160xf32> -> vector<3x160xf32>
    %c2_176 = arith.constant 2 : index
    %c0_177 = arith.constant 0 : index
    %c0_178 = arith.constant 0 : index
    %216 = vector.load %arg24[%c2_176, %c0_177, %c0_178] : memref<3x160x160xf32, #tpu.memory_space<vmem>>, vector<1x160x160xf32>
    %217 = vector.shape_cast %216 : vector<1x160x160xf32> to vector<160x160xf32>
    %cst_179 = arith.constant dense<0.000000e+00> : vector<3x160xf32>
    %218 = tpu.matmul %215, %217, %cst_179 {dimension_numbers = #tpu.dot_dimension_numbers<[1], [0], [0], [1], [0, 0, 1, 1], [], []>} : vector<3x160xf32>, vector<160x160xf32>, vector<3x160xf32> -> vector<3x160xf32>
    %219 = arith.addf %212, %218 : vector<3x160xf32>
    %220 = vector.broadcast %177 : vector<1x160xf32> to vector<3x160xf32>
    %221 = arith.addf %219, %220 : vector<3x160xf32>
    %cst_180 = arith.constant 0.000000e+00 : f32
    %222 = vector.broadcast %cst_180 : f32 to vector<3x160xf32>
    %223 = arith.cmpf oge, %221, %222 : vector<3x160xf32>
    %cst_181 = arith.constant 2.500000e-01 : f32
    %224 = vector.broadcast %cst_181 : f32 to vector<3x160xf32>
    %225 = arith.mulf %224, %221 : vector<3x160xf32>
    %226 = arith.select %223, %221, %225 : vector<3x160xi1>, vector<3x160xf32>
    %227 = arith.addf %226, %176 : vector<3x160xf32>
    %c0_182 = arith.constant 0 : index
    %c0_183 = arith.constant 0 : index
    %c0_184 = arith.constant 0 : index
    %228 = vector.load %arg26[%c0_182, %c0_183, %c0_184] : memref<2x3x160xf32, #tpu.memory_space<vmem>>, vector<1x3x160xf32>
    %229 = vector.shape_cast %228 : vector<1x3x160xf32> to vector<3x160xf32>
    %230 = vector.shape_cast %202 : vector<3x160xf32> to vector<1x3x160xf32>
    tpu.vector_store %arg26[%c0_182, %c0_183, %c0_184], %230 {strides = array<i32>} : memref<2x3x160xf32, #tpu.memory_space<vmem>>, vector<1x3x160xf32>,
    %c1_185 = arith.constant 1 : index
    %c0_186 = arith.constant 0 : index
    %c0_187 = arith.constant 0 : index
    %231 = vector.load %arg26[%c1_185, %c0_186, %c0_187] : memref<2x3x160xf32, #tpu.memory_space<vmem>>, vector<1x3x160xf32>
    %232 = vector.shape_cast %231 : vector<1x3x160xf32> to vector<3x160xf32>
    %233 = vector.shape_cast %227 : vector<3x160xf32> to vector<1x3x160xf32>
    tpu.vector_store %arg26[%c1_185, %c0_186, %c0_187], %233 {strides = array<i32>} : memref<2x3x160xf32, #tpu.memory_space<vmem>>, vector<1x3x160xf32>,
    return
  }
}

</mosaic_0001>

<llo_original>
// kernel: model_forward.1
$region0: #{model_forward.1}
  #allocation0 [shape = 'u32[]', space=smem, size = 0x4, offset = 0x4, fixed_abs, tag = 'smem constant byte address 0x4 - core index']
  #allocation1 [shape = 'u32[72,128]{1,0:T(1,128)}', space=vmem, size = 0x9000, scoped, tag = 'internal scratch']
  %s0 = inlined_call_operand.vmem [shape: f32[2,3,128], index: 0, kind: input, shape index: {}]
  %s1 = inlined_call_operand.vmem [shape: f32[128,128], index: 1, kind: input, shape index: {}]
  %s2 = inlined_call_operand.vmem [shape: f32[64,3], index: 2, kind: input, shape index: {}]
  %s3 = inlined_call_operand.vmem [shape: f32[64,3], index: 3, kind: input, shape index: {}]
  %s4 = inlined_call_operand.vmem [shape: f32[64,3], index: 4, kind: input, shape index: {}]
  %s5 = inlined_call_operand.vmem [shape: f32[64,1], index: 5, kind: input, shape index: {}]
  %s6 = inlined_call_operand.vmem [shape: f32[128,128], index: 6, kind: input, shape index: {}]
  %s7 = inlined_call_operand.hbm [shape: f32[32,64], index: 7, kind: input, shape index: {}]
  %s8 = inlined_call_operand.hbm [shape: f32[32,64], index: 8, kind: input, shape index: {}]
  %s9 = inlined_call_operand.hbm [shape: f32[32,64], index: 9, kind: input, shape index: {}]
  %s10 = inlined_call_operand.vmem [shape: f32[32,1], index: 10, kind: input, shape index: {}]
  %s11 = inlined_call_operand.vmem [shape: f32[128,128], index: 11, kind: input, shape index: {}]
  %s12 = inlined_call_operand.vmem [shape: f32[64,32], index: 12, kind: input, shape index: {}]
  %s13 = inlined_call_operand.vmem [shape: f32[64,64], index: 13, kind: input, shape index: {}]
  %s14 = inlined_call_operand.vmem [shape: f32[64,32], index: 14, kind: input, shape index: {}]
  %s15 = inlined_call_operand.vmem [shape: f32[64,1], index: 15, kind: input, shape index: {}]
  %s16 = inlined_call_operand.hbm [shape: f32[128,128], index: 16, kind: input, shape index: {}]
  %s17 = inlined_call_operand.hbm [shape: f32[3,64], index: 17, kind: input, shape index: {}]
  %s18 = inlined_call_operand.hbm [shape: f32[3,64], index: 18, kind: input, shape index: {}]
  %s19 = inlined_call_operand.hbm [shape: f32[3,64], index: 19, kind: input, shape index: {}]
  %s20 = inlined_call_operand.vmem [shape: f32[3,1], index: 20, kind: input, shape index: {}]
  %s21 = inlined_call_operand.hbm [shape: f32[3,3,3], index: 21, kind: input, shape index: {}]
  %s22 = inlined_call_operand.vmem [shape: f32[3,128,160], index: 22, kind: input, shape index: {}]
  %s23 = inlined_call_operand.hbm [shape: f32[1,160], index: 23, kind: input, shape index: {}]
  %s24 = inlined_call_operand.vmem [shape: f32[3,160,160], index: 24, kind: input, shape index: {}]
  %s25 = inlined_call_operand.hbm [shape: f32[1,160], index: 25, kind: input, shape index: {}]
  %s26 = inlined_call_operand.vmem [shape: f32[2,3,160], index: 26, kind: output, shape index: {}]
  %s27 = sld [smem:[#allocation0]]
  $region154: #{model_forward.1} parent=0
    _
  %s29 = ssub.s32 1, %s27
  %s30 = scalar_select 0, %s29, %s27
  $region1: #{model_forward.1} parent=0
    #allocation2 [shape = 'u8[16384]{0}', space=vmem, size = 0x4000, scoped, tag = 'input window, operand 7, single buffered']
    #allocation3 [shape = 's32[1]{0}', space=sflag, size = 0x4, scoped, tag = 'scoped memory for model_forward.1']
    #allocation4 [shape = 'u8[16384]{0}', space=vmem, size = 0x4000, scoped, tag = 'input window, operand 8, single buffered']
    #allocation5 [shape = 's32[1]{0}', space=sflag, size = 0x4, scoped, tag = 'scoped memory for model_forward.1']
    #allocation6 [shape = 'u8[16384]{0}', space=vmem, size = 0x4000, scoped, tag = 'input window, operand 9, single buffered']
    #allocation7 [shape = 'u8[65536]{0}', space=vmem, size = 0x10000, scoped, tag = 'input window, operand 16, single buffered']
    #allocation8 [shape = 's32[1]{0}', space=sflag, size = 0x4, scoped, tag = 'scoped memory for model_forward.1']
    #allocation9 [shape = 'u8[2048]{0}', space=vmem, size = 0x800, scoped, tag = 'input window, operand 17, single buffered']
    #allocation10 [shape = 'u8[2048]{0}', space=vmem, size = 0x800, scoped, tag = 'input window, operand 18, single buffered']
    #allocation11 [shape = 's32[1]{0}', space=sflag, size = 0x4, scoped, tag = 'scoped memory for model_forward.1']
    #allocation12 [shape = 'u8[2048]{0}', space=vmem, size = 0x800, scoped, tag = 'input window, operand 19, single buffered']
    #allocation13 [shape = 'u8[6144]{0}', space=vmem, size = 0x1800, scoped, tag = 'input window, operand 21, single buffered']
    #allocation14 [shape = 's32[1]{0}', space=sflag, size = 0x4, scoped, tag = 'scoped memory for model_forward.1']
    #allocation15 [shape = 'u8[1024]{0}', space=vmem, size = 0x400, scoped, tag = 'input window, operand 23, single buffered']
    #allocation16 [shape = 'u8[1024]{0}', space=vmem, size = 0x400, scoped, tag = 'input window, operand 25, single buffered']
    #allocation17 [shape = 's32[1]{0}', space=sflag, size = 0x4, scoped, tag = 'scoped memory for model_forward.1']
    %31 = vsyncpa [#allocation3], 0
    %32 = vsyncpa [#allocation5], 0
    %33 = vsyncpa [#allocation8], 0
    %34 = vsyncpa [#allocation11], 0
    %35 = vsyncpa [#allocation14], 0
    %36 = vsyncpa [#allocation17], 0
    // Predicated region
    $region2: #{model_forward.1} parent=1 // pred_check
      _
    $region3: #{model_forward.1} parent=1 // pred_check_branch
      %38 = sbr.rel (0) target = $region5
    $region4: #{model_forward.1} parent=1 // pred_region
      _
    $region5: #{model_forward.1} parent=1 // pred_fallthru
      _
    // Predicated region
    $region6: #{model_forward.1} parent=1 // pred_check
      _
    $region7: #{model_forward.1} parent=1 // pred_check_branch
      %40 = sbr.rel (0) target = $region9
    $region8: #{model_forward.1} parent=1 // pred_region
      _
    $region9: #{model_forward.1} parent=1 // pred_fallthru
      _
    // Predicated region
    $region10: #{model_forward.1} parent=1 // pred_check
      _
    $region11: #{model_forward.1} parent=1 // pred_check_branch
      %42 = sbr.rel (0) target = $region13
    $region12: #{model_forward.1} parent=1 // pred_region
      _
    $region13: #{model_forward.1} parent=1 // pred_fallthru
      _
    // Predicated region
    $region14: #{model_forward.1} parent=1 // pred_check
      _
    $region15: #{model_forward.1} parent=1 // pred_check_branch
      %44 = sbr.rel (0) target = $region17
    $region16: #{model_forward.1} parent=1 // pred_region
      _
    $region17: #{model_forward.1} parent=1 // pred_fallthru
      _
    // Predicated region
    $region18: #{model_forward.1} parent=1 // pred_check
      _
    $region19: #{model_forward.1} parent=1 // pred_check_branch
      %46 = sbr.rel (0) target = $region21
    $region20: #{model_forward.1} parent=1 // pred_region
      _
    $region21: #{model_forward.1} parent=1 // pred_fallthru
      _
    // Predicated region
    $region22: #{model_forward.1} parent=1 // pred_check
      _
    $region23: #{model_forward.1} parent=1 // pred_check_branch
      %48 = sbr.rel (0) target = $region25
    $region24: #{model_forward.1} parent=1 // pred_region
      _
    $region25: #{model_forward.1} parent=1 // pred_fallthru
      _
    // Predicated region
    $region26: #{model_forward.1} parent=1 // pred_check
      _
    $region27: #{model_forward.1} parent=1 // pred_check_branch
      %50 = sbr.rel (0) target = $region29
    $region28: #{model_forward.1} parent=1 // pred_region
      _
    $region29: #{model_forward.1} parent=1 // pred_fallthru
      _
    // Predicated region
    $region30: #{model_forward.1} parent=1 // pred_check
      _
    $region31: #{model_forward.1} parent=1 // pred_check_branch
      %52 = sbr.rel (0) target = $region33
    $region32: #{model_forward.1} parent=1 // pred_region
      %54 = vsyncadd [#allocation3], 0
      %s55 = sshll.u32 %s7, 4
      %s56 = int_to_ptr.hbm [resolvable:$true] %s55
      %s57 = sshll.u32 [#allocation2], 4
      %s58 = int_to_ptr.vmem [resolvable:$true] %s57
      %63 = dma.hbm_to_vmem [thread:$0]  %s56, 512, %s58, [#allocation3], 128, 128, 8
    $region33: #{model_forward.1} parent=1 // pred_fallthru
      _
    // Predicated region
    $region34: #{model_forward.1} parent=1 // pred_check
      _
    $region35: #{model_forward.1} parent=1 // pred_check_branch
      %65 = sbr.rel (0) target = $region37
    $region36: #{model_forward.1} parent=1 // pred_region
      %67 = vsyncadd [#allocation5], 0
      %s68 = sshll.u32 %s8, 4
      %s69 = int_to_ptr.hbm [resolvable:$true] %s68
      %s70 = sshll.u32 [#allocation4], 4
      %s71 = int_to_ptr.vmem [resolvable:$true] %s70
      %76 = dma.hbm_to_vmem [thread:$0]  %s69, 512, %s71, [#allocation5], 128, 128, 8
    $region37: #{model_forward.1} parent=1 // pred_fallthru
      _
    // Predicated region
    $region38: #{model_forward.1} parent=1 // pred_check
      _
    $region39: #{model_forward.1} parent=1 // pred_check_branch
      %78 = sbr.rel (0) target = $region41
    $region40: #{model_forward.1} parent=1 // pred_region
      %80 = vsyncadd [#allocation5], 0
      %s81 = sshll.u32 %s9, 4
      %s82 = int_to_ptr.hbm [resolvable:$true] %s81
      %s83 = sshll.u32 [#allocation6], 4
      %s84 = int_to_ptr.vmem [resolvable:$true] %s83
      %89 = dma.hbm_to_vmem [thread:$0]  %s82, 512, %s84, [#allocation5], 128, 128, 8
    $region41: #{model_forward.1} parent=1 // pred_fallthru
      _
    // Predicated region
    $region42: #{model_forward.1} parent=1 // pred_check
      _
    $region43: #{model_forward.1} parent=1 // pred_check_branch
      %91 = sbr.rel (0) target = $region45
    $region44: #{model_forward.1} parent=1 // pred_region
      _
    $region45: #{model_forward.1} parent=1 // pred_fallthru
      _
    // Predicated region
    $region46: #{model_forward.1} parent=1 // pred_check
      _
    $region47: #{model_forward.1} parent=1 // pred_check_branch
      %93 = sbr.rel (0) target = $region49
    $region48: #{model_forward.1} parent=1 // pred_region
      _
    $region49: #{model_forward.1} parent=1 // pred_fallthru
      _
    // Predicated region
    $region50: #{model_forward.1} parent=1 // pred_check
      _
    $region51: #{model_forward.1} parent=1 // pred_check_branch
      %95 = sbr.rel (0) target = $region53
    $region52: #{model_forward.1} parent=1 // pred_region
      _
    $region53: #{model_forward.1} parent=1 // pred_fallthru
      _
    // Predicated region
    $region54: #{model_forward.1} parent=1 // pred_check
      _
    $region55: #{model_forward.1} parent=1 // pred_check_branch
      %97 = sbr.rel (0) target = $region57
    $region56: #{model_forward.1} parent=1 // pred_region
      _
    $region57: #{model_forward.1} parent=1 // pred_fallthru
      _
    // Predicated region
    $region58: #{model_forward.1} parent=1 // pred_check
      _
    $region59: #{model_forward.1} parent=1 // pred_check_branch
      %99 = sbr.rel (0) target = $region61
    $region60: #{model_forward.1} parent=1 // pred_region
      _
    $region61: #{model_forward.1} parent=1 // pred_fallthru
      _
    // Predicated region
    $region62: #{model_forward.1} parent=1 // pred_check
      _
    $region63: #{model_forward.1} parent=1 // pred_check_branch
      %101 = sbr.rel (0) target = $region65
    $region64: #{model_forward.1} parent=1 // pred_region
      _
    $region65: #{model_forward.1} parent=1 // pred_fallthru
      _
    // Predicated region
    $region66: #{model_forward.1} parent=1 // pred_check
      _
    $region67: #{model_forward.1} parent=1 // pred_check_branch
      %103 = sbr.rel (0) target = $region69
    $region68: #{model_forward.1} parent=1 // pred_region
      %105 = vsyncadd [#allocation8], 0
      %s106 = sshll.u32 %s16, 4
      %s107 = int_to_ptr.hbm [resolvable:$true] %s106
      %s108 = sshll.u32 [#allocation7], 4
      %s109 = int_to_ptr.vmem [resolvable:$true] %s108
      %114 = dma.hbm_to_vmem [thread:$0]  %s107, 2048, %s109, [#allocation8], 128, 128, 8
    $region69: #{model_forward.1} parent=1 // pred_fallthru
      _
    // Predicated region
    $region70: #{model_forward.1} parent=1 // pred_check
      _
    $region71: #{model_forward.1} parent=1 // pred_check_branch
      %116 = sbr.rel (0) target = $region73
    $region72: #{model_forward.1} parent=1 // pred_region
      %118 = vsyncadd [#allocation8], 0
      %s120 = sshll.u32 %s17, 4
      %s121 = int_to_ptr.hbm [resolvable:$true] %s120
      %s122 = sshll.u32 [#allocation9], 4
      %s123 = int_to_ptr.vmem [resolvable:$true] %s122
      %125 = dma.hbm_to_vmem [thread:$0]  %s121, 64, %s123, [#allocation8]
    $region73: #{model_forward.1} parent=1 // pred_fallthru
      _
    // Predicated region
    $region74: #{model_forward.1} parent=1 // pred_check
      _
    $region75: #{model_forward.1} parent=1 // pred_check_branch
      %127 = sbr.rel (0) target = $region77
    $region76: #{model_forward.1} parent=1 // pred_region
      %129 = vsyncadd [#allocation11], 0
      %s131 = sshll.u32 %s18, 4
      %s132 = int_to_ptr.hbm [resolvable:$true] %s131
      %s133 = sshll.u32 [#allocation10], 4
      %s134 = int_to_ptr.vmem [resolvable:$true] %s133
      %136 = dma.hbm_to_vmem [thread:$0]  %s132, 64, %s134, [#allocation11]
    $region77: #{model_forward.1} parent=1 // pred_fallthru
      _
    // Predicated region
    $region78: #{model_forward.1} parent=1 // pred_check
      _
    $region79: #{model_forward.1} parent=1 // pred_check_branch
      %138 = sbr.rel (0) target = $region81
    $region80: #{model_forward.1} parent=1 // pred_region
      %140 = vsyncadd [#allocation11], 0
      %s142 = sshll.u32 %s19, 4
      %s143 = int_to_ptr.hbm [resolvable:$true] %s142
      %s144 = sshll.u32 [#allocation12], 4
      %s145 = int_to_ptr.vmem [resolvable:$true] %s144
      %147 = dma.hbm_to_vmem [thread:$0]  %s143, 64, %s145, [#allocation11]
    $region81: #{model_forward.1} parent=1 // pred_fallthru
      _
    // Predicated region
    $region82: #{model_forward.1} parent=1 // pred_check
      _
    $region83: #{model_forward.1} parent=1 // pred_check_branch
      %149 = sbr.rel (0) target = $region85
    $region84: #{model_forward.1} parent=1 // pred_region
      _
    $region85: #{model_forward.1} parent=1 // pred_fallthru
      _
    // Predicated region
    $region86: #{model_forward.1} parent=1 // pred_check
      _
    $region87: #{model_forward.1} parent=1 // pred_check_branch
      %151 = sbr.rel (0) target = $region89
    $region88: #{model_forward.1} parent=1 // pred_region
      %153 = vsyncadd [#allocation14], 0
      %s154 = sshll.u32 %s21, 4
      %s155 = int_to_ptr.hbm [resolvable:$true] %s154
      %s156 = sshll.u32 [#allocation13], 4
      %s157 = int_to_ptr.vmem [resolvable:$true] %s156
      %162 = dma.hbm_to_vmem [thread:$0]  %s155, 192, %s157, [#allocation14], 64, 64, 4
    $region89: #{model_forward.1} parent=1 // pred_fallthru
      _
    // Predicated region
    $region90: #{model_forward.1} parent=1 // pred_check
      _
    $region91: #{model_forward.1} parent=1 // pred_check_branch
      %164 = sbr.rel (0) target = $region93
    $region92: #{model_forward.1} parent=1 // pred_region
      _
    $region93: #{model_forward.1} parent=1 // pred_fallthru
      _
    // Predicated region
    $region94: #{model_forward.1} parent=1 // pred_check
      _
    $region95: #{model_forward.1} parent=1 // pred_check_branch
      %166 = sbr.rel (0) target = $region97
    $region96: #{model_forward.1} parent=1 // pred_region
      %168 = vsyncadd [#allocation14], 0
      %s170 = sshll.u32 %s23, 4
      %s171 = int_to_ptr.hbm [resolvable:$true] %s170
      %s172 = sshll.u32 [#allocation15], 4
      %s173 = int_to_ptr.vmem [resolvable:$true] %s172
      %175 = dma.hbm_to_vmem [thread:$0]  %s171, 32, %s173, [#allocation14]
    $region97: #{model_forward.1} parent=1 // pred_fallthru
      _
    // Predicated region
    $region98: #{model_forward.1} parent=1 // pred_check
      _
    $region99: #{model_forward.1} parent=1 // pred_check_branch
      %177 = sbr.rel (0) target = $region101
    $region100: #{model_forward.1} parent=1 // pred_region
      _
    $region101: #{model_forward.1} parent=1 // pred_fallthru
      _
    // Predicated region
    $region102: #{model_forward.1} parent=1 // pred_check
      _
    $region103: #{model_forward.1} parent=1 // pred_check_branch
      %179 = sbr.rel (0) target = $region105
    $region104: #{model_forward.1} parent=1 // pred_region
      %181 = vsyncadd [#allocation17], 0
      %s183 = sshll.u32 %s25, 4
      %s184 = int_to_ptr.hbm [resolvable:$true] %s183
      %s185 = sshll.u32 [#allocation16], 4
      %s186 = int_to_ptr.vmem [resolvable:$true] %s185
      %188 = dma.hbm_to_vmem [thread:$0]  %s184, 32, %s186, [#allocation17]
    $region105: #{model_forward.1} parent=1 // pred_fallthru
      _
    // Predicated region
    $region106: #{model_forward.1} parent=1 // pred_check
      _
    $region107: #{model_forward.1} parent=1 // pred_check_branch
      %190 = sbr.rel (0) target = $region109
    $region108: #{model_forward.1} parent=1 // pred_region
      %192 = dma.done [#allocation3], 512
    $region109: #{model_forward.1} parent=1 // pred_fallthru
      _
    // Predicated region
    $region110: #{model_forward.1} parent=1 // pred_check
      _
    $region111: #{model_forward.1} parent=1 // pred_check_branch
      %194 = sbr.rel (0) target = $region113
    $region112: #{model_forward.1} parent=1 // pred_region
      %196 = dma.done [#allocation5], 512
    $region113: #{model_forward.1} parent=1 // pred_fallthru
      _
    // Predicated region
    $region114: #{model_forward.1} parent=1 // pred_check
      _
    $region115: #{model_forward.1} parent=1 // pred_check_branch
      %198 = sbr.rel (0) target = $region117
    $region116: #{model_forward.1} parent=1 // pred_region
      %200 = dma.done [#allocation5], 512
    $region117: #{model_forward.1} parent=1 // pred_fallthru
      _
    // Predicated region
    $region118: #{model_forward.1} parent=1 // pred_check
      _
    $region119: #{model_forward.1} parent=1 // pred_check_branch
      %202 = sbr.rel (0) target = $region121
    $region120: #{model_forward.1} parent=1 // pred_region
      %204 = dma.done [#allocation8], 2048
    $region121: #{model_forward.1} parent=1 // pred_fallthru
      _
    // Predicated region
    $region122: #{model_forward.1} parent=1 // pred_check
      _
    $region123: #{model_forward.1} parent=1 // pred_check_branch
      %206 = sbr.rel (0) target = $region125
    $region124: #{model_forward.1} parent=1 // pred_region
      %208 = dma.done [#allocation8], 64
    $region125: #{model_forward.1} parent=1 // pred_fallthru
      _
    // Predicated region
    $region126: #{model_forward.1} parent=1 // pred_check
      _
    $region127: #{model_forward.1} parent=1 // pred_check_branch
      %210 = sbr.rel (0) target = $region129
    $region128: #{model_forward.1} parent=1 // pred_region
      %212 = dma.done [#allocation11], 64
    $region129: #{model_forward.1} parent=1 // pred_fallthru
      _
    // Predicated region
    $region130: #{model_forward.1} parent=1 // pred_check
      _
    $region131: #{model_forward.1} parent=1 // pred_check_branch
      %214 = sbr.rel (0) target = $region133
    $region132: #{model_forward.1} parent=1 // pred_region
      %216 = dma.done [#allocation11], 64
    $region133: #{model_forward.1} parent=1 // pred_fallthru
      _
    // Predicated region
    $region134: #{model_forward.1} parent=1 // pred_check
      _
    $region135: #{model_forward.1} parent=1 // pred_check_branch
      %218 = sbr.rel (0) target = $region137
    $region136: #{model_forward.1} parent=1 // pred_region
      %220 = dma.done [#allocation14], 192
    $region137: #{model_forward.1} parent=1 // pred_fallthru
      _
    // Predicated region
    $region138: #{model_forward.1} parent=1 // pred_check
      _
    $region139: #{model_forward.1} parent=1 // pred_check_branch
      %222 = sbr.rel (0) target = $region141
    $region140: #{model_forward.1} parent=1 // pred_region
      %224 = dma.done [#allocation14], 32
    $region141: #{model_forward.1} parent=1 // pred_fallthru
      _
    // Predicated region
    $region142: #{model_forward.1} parent=1 // pred_check
      _
    $region143: #{model_forward.1} parent=1 // pred_check_branch
      %226 = sbr.rel (0) target = $region145
    $region144: #{model_forward.1} parent=1 // pred_region
      %228 = dma.done [#allocation17], 32
    $region145: #{model_forward.1} parent=1 // pred_fallthru
      _
    %v229 = vld [vmem:[%s0] sm:$0x7]
    %s230 = scalar_lea.vmem %s0, 4
    %v231 = vld [vmem:[%s230] sm:$0x7]
    %v232 = vld [vmem:[%s1] sm:$0xff]
    %v233 = vld [vmem:[%s1 + $0x8] sm:$0xff]
    %v234 = vld [vmem:[%s1 + $0x10] sm:$0xff]
    %v235 = vld [vmem:[%s1 + $0x18] sm:$0xff]
    %v236 = vld [vmem:[%s1 + $0x20] sm:$0xff]
    %v237 = vld [vmem:[%s1 + $0x28] sm:$0xff]
    %v238 = vld [vmem:[%s1 + $0x30] sm:$0xff]
    %v239 = vld [vmem:[%s1 + $0x38] sm:$0xff]
    %v240 = vld [vmem:[%s1 + $0x40] sm:$0xff]
    %v241 = vld [vmem:[%s1 + $0x48] sm:$0xff]
    %v242 = vld [vmem:[%s1 + $0x50] sm:$0xff]
    %v243 = vld [vmem:[%s1 + $0x58] sm:$0xff]
    %v244 = vld [vmem:[%s1 + $0x60] sm:$0xff]
    %v245 = vld [vmem:[%s1 + $0x68] sm:$0xff]
    %v246 = vld [vmem:[%s1 + $0x70] sm:$0xff]
    %v247 = vld [vmem:[%s1 + $0x78] sm:$0xff]
    %v248 = vld [vmem:[%s2] sm:$0xff]
    %v249 = vld [vmem:[%s2 + $0x8] sm:$0xff]
    %v250 = vld [vmem:[%s2 + $0x10] sm:$0xff]
    %v251 = vld [vmem:[%s2 + $0x18] sm:$0xff]
    %v252 = vld [vmem:[%s2 + $0x20] sm:$0xff]
    %v253 = vld [vmem:[%s2 + $0x28] sm:$0xff]
    %v254 = vld [vmem:[%s2 + $0x30] sm:$0xff]
    %v255 = vld [vmem:[%s2 + $0x38] sm:$0xff]
    %v256 = vld [vmem:[%s3] sm:$0xff]
    %v257 = vld [vmem:[%s3 + $0x8] sm:$0xff]
    %v258 = vld [vmem:[%s3 + $0x10] sm:$0xff]
    %v259 = vld [vmem:[%s3 + $0x18] sm:$0xff]
    %v260 = vld [vmem:[%s3 + $0x20] sm:$0xff]
    %v261 = vld [vmem:[%s3 + $0x28] sm:$0xff]
    %v262 = vld [vmem:[%s3 + $0x30] sm:$0xff]
    %v263 = vld [vmem:[%s3 + $0x38] sm:$0xff]
    %v264 = vld [vmem:[%s4] sm:$0xff]
    %v265 = vld [vmem:[%s4 + $0x8] sm:$0xff]
    %v266 = vld [vmem:[%s4 + $0x10] sm:$0xff]
    %v267 = vld [vmem:[%s4 + $0x18] sm:$0xff]
    %v268 = vld [vmem:[%s4 + $0x20] sm:$0xff]
    %v269 = vld [vmem:[%s4 + $0x28] sm:$0xff]
    %v270 = vld [vmem:[%s4 + $0x30] sm:$0xff]
    %v271 = vld [vmem:[%s4 + $0x38] sm:$0xff]
    %v272 = vld [vmem:[%s5] sm:$0xff]
    %v273 = vld [vmem:[%s5 + $0x8] sm:$0xff]
    %v274 = vld [vmem:[%s5 + $0x10] sm:$0xff]
    %v275 = vld [vmem:[%s5 + $0x18] sm:$0xff]
    %v276 = vld [vmem:[%s5 + $0x20] sm:$0xff]
    %v277 = vld [vmem:[%s5 + $0x28] sm:$0xff]
    %v278 = vld [vmem:[%s5 + $0x30] sm:$0xff]
    %v279 = vld [vmem:[%s5 + $0x38] sm:$0xff]
    %280 = vmatpush.msra.mxu0 %v247
    %281 = vmatpush.msra.mxu0 %v246
    %282 = vmatpush.msra.mxu0 %v245
    %283 = vmatpush.msra.mxu0 %v244
    %284 = vmatpush.msra.mxu0 %v243
    %285 = vmatpush.msra.mxu0 %v242
    %286 = vmatpush.msra.mxu0 %v241
    %287 = vmatpush.msra.mxu0 %v240
    %288 = vmatpush.msra.mxu0 %v239
    %289 = vmatpush.msra.mxu0 %v238
    %290 = vmatpush.msra.mxu0 %v237
    %291 = vmatpush.msra.mxu0 %v236
    %292 = vmatpush.msra.mxu0 %v235
    %293 = vmatpush.msra.mxu0 %v234
    %294 = vmatpush.msra.mxu0 %v233
    %295 = vmatpush.msra.mxu0 %v232
    %296 = vmatmul.f32.gmra.mxu0 %v229
    %v297 = vpop.f32.mrf.mxu0
    %v298 = vadd.f32 0.0, %v297
    %299 = vdwg.mxu0
    %vm300 = vcmask 23552
    %v302 = vsel %vm300, %v256, 0
    %v305 = vsel %vm300, %v257, 0
    %v308 = vsel %vm300, %v258, 0
    %v311 = vsel %vm300, %v259, 0
    %v314 = vsel %vm300, %v260, 0
    %v317 = vsel %vm300, %v261, 0
    %v320 = vsel %vm300, %v262, 0
    %v323 = vsel %vm300, %v263, 0
    %vm325 = vcmask 1042432
    %v327 = vsel %vm325, %v229, 0
    %329 = vmatpush.msra.mxu0 0.0
    %330 = vmatpush.msra.mxu0 0.0
    %331 = vmatpush.msra.mxu0 0.0
    %332 = vmatpush.msra.mxu0 0.0
    %333 = vmatpush.msra.mxu0 0.0
    %334 = vmatpush.msra.mxu0 0.0
    %335 = vmatpush.msra.mxu0 0.0
    %336 = vmatpush.msra.mxu0 0.0
    %337 = vmatpush.msra.mxu0 0.0
    %338 = vmatpush.msra.mxu0 0.0
    %339 = vmatpush.msra.mxu0 0.0
    %340 = vmatpush.msra.mxu0 0.0
    %341 = vmatpush.msra.mxu0 0.0
    %342 = vmatpush.msra.mxu0 0.0
    %343 = vmatpush.msra.mxu0 0.0
    %344 = vmatpush.msra.mxu0 %v327
    %345 = vmatmul.f32.gmra.mxu0 %v302
    %v346 = vpop.f32.mrf.mxu0
    %v347 = vadd.f32 0.0, %v346
    %348 = vmatmul.f32.gmra.mxu0 %v305
    %v349 = vpop.f32.mrf.mxu0
    %v350 = vadd.f32 0.0, %v349
    %351 = vmatmul.f32.gmra.mxu0 %v308
    %v352 = vpop.f32.mrf.mxu0
    %v353 = vadd.f32 0.0, %v352
    %354 = vmatmul.f32.gmra.mxu0 %v311
    %v355 = vpop.f32.mrf.mxu0
    %v356 = vadd.f32 0.0, %v355
    %357 = vmatmul.f32.gmra.mxu0 %v314
    %v358 = vpop.f32.mrf.mxu0
    %v359 = vadd.f32 0.0, %v358
    %360 = vmatmul.f32.gmra.mxu0 %v317
    %v361 = vpop.f32.mrf.mxu0
    %v362 = vadd.f32 0.0, %v361
    %363 = vmatmul.f32.gmra.mxu0 %v320
    %v364 = vpop.f32.mrf.mxu0
    %v365 = vadd.f32 0.0, %v364
    %366 = vmatmul.f32.gmra.mxu0 %v323
    %v367 = vpop.f32.mrf.mxu0
    %v368 = vadd.f32 0.0, %v367
    %369 = vdwg.mxu0
    %v371 = vsel %vm300, %v248, 0
    %v374 = vsel %vm300, %v249, 0
    %v377 = vsel %vm300, %v250, 0
    %v380 = vsel %vm300, %v251, 0
    %v383 = vsel %vm300, %v252, 0
    %v386 = vsel %vm300, %v253, 0
    %v389 = vsel %vm300, %v254, 0
    %v392 = vsel %vm300, %v255, 0
    %v395 = vsel %vm325, %v298, 0
    %397 = vmatpush.msra.mxu0 0.0
    %398 = vmatpush.msra.mxu0 0.0
    %399 = vmatpush.msra.mxu0 0.0
    %400 = vmatpush.msra.mxu0 0.0
    %401 = vmatpush.msra.mxu0 0.0
    %402 = vmatpush.msra.mxu0 0.0
    %403 = vmatpush.msra.mxu0 0.0
    %404 = vmatpush.msra.mxu0 0.0
    %405 = vmatpush.msra.mxu0 0.0
    %406 = vmatpush.msra.mxu0 0.0
    %407 = vmatpush.msra.mxu0 0.0
    %408 = vmatpush.msra.mxu0 0.0
    %409 = vmatpush.msra.mxu0 0.0
    %410 = vmatpush.msra.mxu0 0.0
    %411 = vmatpush.msra.mxu0 0.0
    %412 = vmatpush.msra.mxu0 %v395
    %413 = vmatmul.f32.gmra.mxu0 %v371
    %v414 = vpop.f32.mrf.mxu0
    %v415 = vadd.f32 %v347, %v414
    %416 = vmatmul.f32.gmra.mxu0 %v374
    %v417 = vpop.f32.mrf.mxu0
    %v418 = vadd.f32 %v350, %v417
    %419 = vmatmul.f32.gmra.mxu0 %v377
    %v420 = vpop.f32.mrf.mxu0
    %v421 = vadd.f32 %v353, %v420
    %422 = vmatmul.f32.gmra.mxu0 %v380
    %v423 = vpop.f32.mrf.mxu0
    %v424 = vadd.f32 %v356, %v423
    %425 = vmatmul.f32.gmra.mxu0 %v383
    %v426 = vpop.f32.mrf.mxu0
    %v427 = vadd.f32 %v359, %v426
    %428 = vmatmul.f32.gmra.mxu0 %v386
    %v429 = vpop.f32.mrf.mxu0
    %v430 = vadd.f32 %v362, %v429
    %431 = vmatmul.f32.gmra.mxu0 %v389
    %v432 = vpop.f32.mrf.mxu0
    %v433 = vadd.f32 %v365, %v432
    %434 = vmatmul.f32.gmra.mxu0 %v392
    %v435 = vpop.f32.mrf.mxu0
    %v436 = vadd.f32 %v368, %v435
    %437 = vdwg.mxu0
    %v439 = vsel %vm300, %v264, 0
    %v442 = vsel %vm300, %v265, 0
    %v445 = vsel %vm300, %v266, 0
    %v448 = vsel %vm300, %v267, 0
    %v451 = vsel %vm300, %v268, 0
    %v454 = vsel %vm300, %v269, 0
    %v457 = vsel %vm300, %v270, 0
    %v460 = vsel %vm300, %v271, 0
    %462 = vmatpush.msra.mxu0 0.0
    %463 = vmatpush.msra.mxu0 0.0
    %464 = vmatpush.msra.mxu0 0.0
    %465 = vmatpush.msra.mxu0 0.0
    %466 = vmatpush.msra.mxu0 0.0
    %467 = vmatpush.msra.mxu0 0.0
    %468 = vmatpush.msra.mxu0 0.0
    %469 = vmatpush.msra.mxu0 0.0
    %470 = vmatpush.msra.mxu0 0.0
    %471 = vmatpush.msra.mxu0 0.0
    %472 = vmatpush.msra.mxu0 0.0
    %473 = vmatpush.msra.mxu0 0.0
    %474 = vmatpush.msra.mxu0 0.0
    %475 = vmatpush.msra.mxu0 0.0
    %476 = vmatpush.msra.mxu0 0.0
    %477 = vmatpush.msra.mxu0 %v327
    %478 = vmatmul.f32.gmra.mxu0 %v439
    %v479 = vpop.f32.mrf.mxu0
    %v480 = vadd.f32 0.0, %v479
    %481 = vmatmul.f32.gmra.mxu0 %v442
    %v482 = vpop.f32.mrf.mxu0
    %v483 = vadd.f32 0.0, %v482
    %484 = vmatmul.f32.gmra.mxu0 %v445
    %v485 = vpop.f32.mrf.mxu0
    %v486 = vadd.f32 0.0, %v485
    %487 = vmatmul.f32.gmra.mxu0 %v448
    %v488 = vpop.f32.mrf.mxu0
    %v489 = vadd.f32 0.0, %v488
    %490 = vmatmul.f32.gmra.mxu0 %v451
    %v491 = vpop.f32.mrf.mxu0
    %v492 = vadd.f32 0.0, %v491
    %493 = vmatmul.f32.gmra.mxu0 %v454
    %v494 = vpop.f32.mrf.mxu0
    %v495 = vadd.f32 0.0, %v494
    %496 = vmatmul.f32.gmra.mxu0 %v457
    %v497 = vpop.f32.mrf.mxu0
    %v498 = vadd.f32 0.0, %v497
    %499 = vmatmul.f32.gmra.mxu0 %v460
    %v500 = vpop.f32.mrf.mxu0
    %v501 = vadd.f32 0.0, %v500
    %502 = vdwg.mxu0
    %v503 = vadd.f32 %v415, %v480
    %v504 = vadd.f32 %v418, %v483
    %v505 = vadd.f32 %v421, %v486
    %v506 = vadd.f32 %v424, %v489
    %v507 = vadd.f32 %v427, %v492
    %v508 = vadd.f32 %v430, %v495
    %v509 = vadd.f32 %v433, %v498
    %v510 = vadd.f32 %v436, %v501
    %512 = vset.pattern.permute.xlu0 0
    %513 = vperm.xlu0 %512, %v272
    %v514 = vpop.permute.xlu0 %513
    %517 = vset.pattern.permute.xlu0 0
    %518 = vperm.xlu0 %517, %v273
    %v519 = vpop.permute.xlu0 %518
    %522 = vset.pattern.permute.xlu0 0
    %523 = vperm.xlu0 %522, %v274
    %v524 = vpop.permute.xlu0 %523
    %527 = vset.pattern.permute.xlu0 0
    %528 = vperm.xlu0 %527, %v275
    %v529 = vpop.permute.xlu0 %528
    %532 = vset.pattern.permute.xlu0 0
    %533 = vperm.xlu0 %532, %v276
    %v534 = vpop.permute.xlu0 %533
    %537 = vset.pattern.permute.xlu0 0
    %538 = vperm.xlu0 %537, %v277
    %v539 = vpop.permute.xlu0 %538
    %542 = vset.pattern.permute.xlu0 0
    %543 = vperm.xlu0 %542, %v278
    %v544 = vpop.permute.xlu0 %543
    %547 = vset.pattern.permute.xlu0 0
    %548 = vperm.xlu0 %547, %v279
    %v549 = vpop.permute.xlu0 %548
    %v551 = vadd.f32 %v503, %v514
    %v552 = vadd.f32 %v504, %v519
    %v553 = vadd.f32 %v505, %v524
    %v554 = vadd.f32 %v506, %v529
    %v555 = vadd.f32 %v507, %v534
    %v556 = vadd.f32 %v508, %v539
    %v557 = vadd.f32 %v509, %v544
    %v558 = vadd.f32 %v510, %v549
    %vm559 = vcmp.ge.f32.partialorder %v551, 0.0
    %vm560 = vcmp.ge.f32.partialorder %v552, 0.0
    %vm561 = vcmp.ge.f32.partialorder %v553, 0.0
    %vm562 = vcmp.ge.f32.partialorder %v554, 0.0
    %vm563 = vcmp.ge.f32.partialorder %v555, 0.0
    %vm564 = vcmp.ge.f32.partialorder %v556, 0.0
    %vm565 = vcmp.ge.f32.partialorder %v557, 0.0
    %vm566 = vcmp.ge.f32.partialorder %v558, 0.0
    %v567 = vmul.f32 %v551, 0.25
    %v568 = vmul.f32 %v552, 0.25
    %v569 = vmul.f32 %v553, 0.25
    %v570 = vmul.f32 %v554, 0.25
    %v571 = vmul.f32 %v555, 0.25
    %v572 = vmul.f32 %v556, 0.25
    %v573 = vmul.f32 %v557, 0.25
    %v574 = vmul.f32 %v558, 0.25
    %v575 = vsel %vm559, %v551, %v567
    %v576 = vsel %vm560, %v552, %v568
    %v577 = vsel %vm561, %v553, %v569
    %v578 = vsel %vm562, %v554, %v570
    %v579 = vsel %vm563, %v555, %v571
    %v580 = vsel %vm564, %v556, %v572
    %v581 = vsel %vm565, %v557, %v573
    %v582 = vsel %vm566, %v558, %v574
    %583 = vmatpush.msra.mxu0 %v247
    %584 = vmatpush.msra.mxu0 %v246
    %585 = vmatpush.msra.mxu0 %v245
    %586 = vmatpush.msra.mxu0 %v244
    %587 = vmatpush.msra.mxu0 %v243
    %588 = vmatpush.msra.mxu0 %v242
    %589 = vmatpush.msra.mxu0 %v241
    %590 = vmatpush.msra.mxu0 %v240
    %591 = vmatpush.msra.mxu0 %v239
    %592 = vmatpush.msra.mxu0 %v238
    %593 = vmatpush.msra.mxu0 %v237
    %594 = vmatpush.msra.mxu0 %v236
    %595 = vmatpush.msra.mxu0 %v235
    %596 = vmatpush.msra.mxu0 %v234
    %597 = vmatpush.msra.mxu0 %v233
    %598 = vmatpush.msra.mxu0 %v232
    %599 = vmatmul.f32.gmra.mxu0 %v231
    %v600 = vpop.f32.mrf.mxu0
    %v601 = vadd.f32 0.0, %v600
    %602 = vdwg.mxu0
    %v604 = vsel %vm325, %v231, 0
    %606 = vmatpush.msra.mxu0 0.0
    %607 = vmatpush.msra.mxu0 0.0
    %608 = vmatpush.msra.mxu0 0.0
    %609 = vmatpush.msra.mxu0 0.0
    %610 = vmatpush.msra.mxu0 0.0
    %611 = vmatpush.msra.mxu0 0.0
    %612 = vmatpush.msra.mxu0 0.0
    %613 = vmatpush.msra.mxu0 0.0
    %614 = vmatpush.msra.mxu0 0.0
    %615 = vmatpush.msra.mxu0 0.0
    %616 = vmatpush.msra.mxu0 0.0
    %617 = vmatpush.msra.mxu0 0.0
    %618 = vmatpush.msra.mxu0 0.0
    %619 = vmatpush.msra.mxu0 0.0
    %620 = vmatpush.msra.mxu0 0.0
    %621 = vmatpush.msra.mxu0 %v604
    %622 = vmatmul.f32.gmra.mxu0 %v302
    %v623 = vpop.f32.mrf.mxu0
    %v624 = vadd.f32 0.0, %v623
    %625 = vmatmul.f32.gmra.mxu0 %v305
    %v626 = vpop.f32.mrf.mxu0
    %v627 = vadd.f32 0.0, %v626
    %628 = vmatmul.f32.gmra.mxu0 %v308
    %v629 = vpop.f32.mrf.mxu0
    %v630 = vadd.f32 0.0, %v629
    %631 = vmatmul.f32.gmra.mxu0 %v311
    %v632 = vpop.f32.mrf.mxu0
    %v633 = vadd.f32 0.0, %v632
    %634 = vmatmul.f32.gmra.mxu0 %v314
    %v635 = vpop.f32.mrf.mxu0
    %v636 = vadd.f32 0.0, %v635
    %637 = vmatmul.f32.gmra.mxu0 %v317
    %v638 = vpop.f32.mrf.mxu0
    %v639 = vadd.f32 0.0, %v638
    %640 = vmatmul.f32.gmra.mxu0 %v320
    %v641 = vpop.f32.mrf.mxu0
    %v642 = vadd.f32 0.0, %v641
    %643 = vmatmul.f32.gmra.mxu0 %v323
    %v644 = vpop.f32.mrf.mxu0
    %v645 = vadd.f32 0.0, %v644
    %646 = vdwg.mxu0
    %v648 = vsel %vm325, %v601, 0
    %650 = vmatpush.msra.mxu0 0.0
    %651 = vmatpush.msra.mxu0 0.0
    %652 = vmatpush.msra.mxu0 0.0
    %653 = vmatpush.msra.mxu0 0.0
    %654 = vmatpush.msra.mxu0 0.0
    %655 = vmatpush.msra.mxu0 0.0
    %656 = vmatpush.msra.mxu0 0.0
    %657 = vmatpush.msra.mxu0 0.0
    %658 = vmatpush.msra.mxu0 0.0
    %659 = vmatpush.msra.mxu0 0.0
    %660 = vmatpush.msra.mxu0 0.0
    %661 = vmatpush.msra.mxu0 0.0
    %662 = vmatpush.msra.mxu0 0.0
    %663 = vmatpush.msra.mxu0 0.0
    %664 = vmatpush.msra.mxu0 0.0
    %665 = vmatpush.msra.mxu0 %v648
    %666 = vmatmul.f32.gmra.mxu0 %v371
    %v667 = vpop.f32.mrf.mxu0
    %v668 = vadd.f32 %v624, %v667
    %669 = vmatmul.f32.gmra.mxu0 %v374
    %v670 = vpop.f32.mrf.mxu0
    %v671 = vadd.f32 %v627, %v670
    %672 = vmatmul.f32.gmra.mxu0 %v377
    %v673 = vpop.f32.mrf.mxu0
    %v674 = vadd.f32 %v630, %v673
    %675 = vmatmul.f32.gmra.mxu0 %v380
    %v676 = vpop.f32.mrf.mxu0
    %v677 = vadd.f32 %v633, %v676
    %678 = vmatmul.f32.gmra.mxu0 %v383
    %v679 = vpop.f32.mrf.mxu0
    %v680 = vadd.f32 %v636, %v679
    %681 = vmatmul.f32.gmra.mxu0 %v386
    %v682 = vpop.f32.mrf.mxu0
    %v683 = vadd.f32 %v639, %v682
    %684 = vmatmul.f32.gmra.mxu0 %v389
    %v685 = vpop.f32.mrf.mxu0
    %v686 = vadd.f32 %v642, %v685
    %687 = vmatmul.f32.gmra.mxu0 %v392
    %v688 = vpop.f32.mrf.mxu0
    %v689 = vadd.f32 %v645, %v688
    %690 = vdwg.mxu0
    %691 = vmatpush.msra.mxu0 0.0
    %692 = vmatpush.msra.mxu0 0.0
    %693 = vmatpush.msra.mxu0 0.0
    %694 = vmatpush.msra.mxu0 0.0
    %695 = vmatpush.msra.mxu0 0.0
    %696 = vmatpush.msra.mxu0 0.0
    %697 = vmatpush.msra.mxu0 0.0
    %698 = vmatpush.msra.mxu0 0.0
    %699 = vmatpush.msra.mxu0 0.0
    %700 = vmatpush.msra.mxu0 0.0
    %701 = vmatpush.msra.mxu0 0.0
    %702 = vmatpush.msra.mxu0 0.0
    %703 = vmatpush.msra.mxu0 0.0
    %704 = vmatpush.msra.mxu0 0.0
    %705 = vmatpush.msra.mxu0 0.0
    %706 = vmatpush.msra.mxu0 %v604
    %707 = vmatmul.f32.gmra.mxu0 %v439
    %v708 = vpop.f32.mrf.mxu0
    %v709 = vadd.f32 0.0, %v708
    %710 = vmatmul.f32.gmra.mxu0 %v442
    %v711 = vpop.f32.mrf.mxu0
    %v712 = vadd.f32 0.0, %v711
    %713 = vmatmul.f32.gmra.mxu0 %v445
    %v714 = vpop.f32.mrf.mxu0
    %v715 = vadd.f32 0.0, %v714
    %716 = vmatmul.f32.gmra.mxu0 %v448
    %v717 = vpop.f32.mrf.mxu0
    %v718 = vadd.f32 0.0, %v717
    %719 = vmatmul.f32.gmra.mxu0 %v451
    %v720 = vpop.f32.mrf.mxu0
    %v721 = vadd.f32 0.0, %v720
    %722 = vmatmul.f32.gmra.mxu0 %v454
    %v723 = vpop.f32.mrf.mxu0
    %v724 = vadd.f32 0.0, %v723
    %725 = vmatmul.f32.gmra.mxu0 %v457
    %v726 = vpop.f32.mrf.mxu0
    %v727 = vadd.f32 0.0, %v726
    %728 = vmatmul.f32.gmra.mxu0 %v460
    %v729 = vpop.f32.mrf.mxu0
    %v730 = vadd.f32 0.0, %v729
    %731 = vdwg.mxu0
    %v732 = vadd.f32 %v668, %v709
    %v733 = vadd.f32 %v671, %v712
    %v734 = vadd.f32 %v674, %v715
    %v735 = vadd.f32 %v677, %v718
    %v736 = vadd.f32 %v680, %v721
    %v737 = vadd.f32 %v683, %v724
    %v738 = vadd.f32 %v686, %v727
    %v739 = vadd.f32 %v689, %v730
    %v740 = vadd.f32 %v732, %v514
    %v741 = vadd.f32 %v733, %v519
    %v742 = vadd.f32 %v734, %v524
    %v743 = vadd.f32 %v735, %v529
    %v744 = vadd.f32 %v736, %v534
    %v745 = vadd.f32 %v737, %v539
    %v746 = vadd.f32 %v738, %v544
    %v747 = vadd.f32 %v739, %v549
    %vm748 = vcmp.ge.f32.partialorder %v740, 0.0
    %vm749 = vcmp.ge.f32.partialorder %v741, 0.0
    %vm750 = vcmp.ge.f32.partialorder %v742, 0.0
    %vm751 = vcmp.ge.f32.partialorder %v743, 0.0
    %vm752 = vcmp.ge.f32.partialorder %v744, 0.0
    %vm753 = vcmp.ge.f32.partialorder %v745, 0.0
    %vm754 = vcmp.ge.f32.partialorder %v746, 0.0
    %vm755 = vcmp.ge.f32.partialorder %v747, 0.0
    %v756 = vmul.f32 %v740, 0.25
    %v757 = vmul.f32 %v741, 0.25
    %v758 = vmul.f32 %v742, 0.25
    %v759 = vmul.f32 %v743, 0.25
    %v760 = vmul.f32 %v744, 0.25
    %v761 = vmul.f32 %v745, 0.25
    %v762 = vmul.f32 %v746, 0.25
    %v763 = vmul.f32 %v747, 0.25
    %v764 = vsel %vm748, %v740, %v756
    %v765 = vsel %vm749, %v741, %v757
    %v766 = vsel %vm750, %v742, %v758
    %v767 = vsel %vm751, %v743, %v759
    %v768 = vsel %vm752, %v744, %v760
    %v769 = vsel %vm753, %v745, %v761
    %v770 = vsel %vm754, %v746, %v762
    %v771 = vsel %vm755, %v747, %v763
    %v772 = vld [vmem:[%s6] sm:$0xff]
    %v773 = vld [vmem:[%s6 + $0x8] sm:$0xff]
    %v774 = vld [vmem:[%s6 + $0x10] sm:$0xff]
    %v775 = vld [vmem:[%s6 + $0x18] sm:$0xff]
    %v776 = vld [vmem:[%s6 + $0x20] sm:$0xff]
    %v777 = vld [vmem:[%s6 + $0x28] sm:$0xff]
    %v778 = vld [vmem:[%s6 + $0x30] sm:$0xff]
    %v779 = vld [vmem:[%s6 + $0x38] sm:$0xff]
    %v780 = vld [vmem:[%s6 + $0x40] sm:$0xff]
    %v781 = vld [vmem:[%s6 + $0x48] sm:$0xff]
    %v782 = vld [vmem:[%s6 + $0x50] sm:$0xff]
    %v783 = vld [vmem:[%s6 + $0x58] sm:$0xff]
    %v784 = vld [vmem:[%s6 + $0x60] sm:$0xff]
    %v785 = vld [vmem:[%s6 + $0x68] sm:$0xff]
    %v786 = vld [vmem:[%s6 + $0x70] sm:$0xff]
    %v787 = vld [vmem:[%s6 + $0x78] sm:$0xff]
    %v788 = vld [vmem:[#allocation2] sm:$0xff]
    %v789 = vld [vmem:[#allocation2 + $0x8] sm:$0xff]
    %v790 = vld [vmem:[#allocation2 + $0x10] sm:$0xff]
    %v791 = vld [vmem:[#allocation2 + $0x18] sm:$0xff]
    %v792 = vld [vmem:[#allocation4] sm:$0xff]
    %v793 = vld [vmem:[#allocation4 + $0x8] sm:$0xff]
    %v794 = vld [vmem:[#allocation4 + $0x10] sm:$0xff]
    %v795 = vld [vmem:[#allocation4 + $0x18] sm:$0xff]
    %v796 = vld [vmem:[#allocation6] sm:$0xff]
    %v797 = vld [vmem:[#allocation6 + $0x8] sm:$0xff]
    %v798 = vld [vmem:[#allocation6 + $0x10] sm:$0xff]
    %v799 = vld [vmem:[#allocation6 + $0x18] sm:$0xff]
    %v800 = vld [vmem:[%s10] sm:$0xff]
    %v801 = vld [vmem:[%s10 + $0x8] sm:$0xff]
    %v802 = vld [vmem:[%s10 + $0x10] sm:$0xff]
    %v803 = vld [vmem:[%s10 + $0x18] sm:$0xff]
    %804 = vmatpush.msra.mxu0 %v787
    %805 = vmatpush.msra.mxu0 %v786
    %806 = vmatpush.msra.mxu0 %v785
    %807 = vmatpush.msra.mxu0 %v784
    %808 = vmatpush.msra.mxu0 %v783
    %809 = vmatpush.msra.mxu0 %v782
    %810 = vmatpush.msra.mxu0 %v781
    %811 = vmatpush.msra.mxu0 %v780
    %812 = vmatpush.msra.mxu0 %v779
    %813 = vmatpush.msra.mxu0 %v778
    %814 = vmatpush.msra.mxu0 %v777
    %815 = vmatpush.msra.mxu0 %v776
    %816 = vmatpush.msra.mxu0 %v775
    %817 = vmatpush.msra.mxu0 %v774
    %818 = vmatpush.msra.mxu0 %v773
    %819 = vmatpush.msra.mxu0 %v772
    %820 = vmatmul.f32.gmra.mxu0 %v575
    %v821 = vpop.f32.mrf.mxu0
    %v822 = vadd.f32 0.0, %v821
    %823 = vmatmul.f32.gmra.mxu0 %v576
    %v824 = vpop.f32.mrf.mxu0
    %v825 = vadd.f32 0.0, %v824
    %826 = vmatmul.f32.gmra.mxu0 %v577
    %v827 = vpop.f32.mrf.mxu0
    %v828 = vadd.f32 0.0, %v827
    %829 = vmatmul.f32.gmra.mxu0 %v578
    %v830 = vpop.f32.mrf.mxu0
    %v831 = vadd.f32 0.0, %v830
    %832 = vmatmul.f32.gmra.mxu0 %v579
    %v833 = vpop.f32.mrf.mxu0
    %v834 = vadd.f32 0.0, %v833
    %835 = vmatmul.f32.gmra.mxu0 %v580
    %v836 = vpop.f32.mrf.mxu0
    %v837 = vadd.f32 0.0, %v836
    %838 = vmatmul.f32.gmra.mxu0 %v581
    %v839 = vpop.f32.mrf.mxu0
    %v840 = vadd.f32 0.0, %v839
    %841 = vmatmul.f32.gmra.mxu0 %v582
    %v842 = vpop.f32.mrf.mxu0
    %v843 = vadd.f32 0.0, %v842
    %844 = vdwg.mxu0
    %vm845 = vcmask 523264
    %v847 = vsel %vm845, %v792, 0
    %v850 = vsel %vm845, %v793, 0
    %v853 = vsel %vm845, %v794, 0
    %v856 = vsel %vm845, %v795, 0
    %858 = vmatpush.msra.mxu0 0.0
    %859 = vmatpush.msra.mxu0 0.0
    %860 = vmatpush.msra.mxu0 0.0
    %861 = vmatpush.msra.mxu0 0.0
    %862 = vmatpush.msra.mxu0 0.0
    %863 = vmatpush.msra.mxu0 0.0
    %864 = vmatpush.msra.mxu0 0.0
    %865 = vmatpush.msra.mxu0 0.0
    %866 = vmatpush.msra.mxu0 %v582
    %867 = vmatpush.msra.mxu0 %v581
    %868 = vmatpush.msra.mxu0 %v580
    %869 = vmatpush.msra.mxu0 %v579
    %870 = vmatpush.msra.mxu0 %v578
    %871 = vmatpush.msra.mxu0 %v577
    %872 = vmatpush.msra.mxu0 %v576
    %873 = vmatpush.msra.mxu0 %v575
    %874 = vmatmul.f32.gmra.mxu0 %v847
    %v875 = vpop.f32.mrf.mxu0
    %v876 = vadd.f32 0.0, %v875
    %877 = vmatmul.f32.gmra.mxu0 %v850
    %v878 = vpop.f32.mrf.mxu0
    %v879 = vadd.f32 0.0, %v878
    %880 = vmatmul.f32.gmra.mxu0 %v853
    %v881 = vpop.f32.mrf.mxu0
    %v882 = vadd.f32 0.0, %v881
    %883 = vmatmul.f32.gmra.mxu0 %v856
    %v884 = vpop.f32.mrf.mxu0
    %v885 = vadd.f32 0.0, %v884
    %886 = vdwg.mxu0
    %v888 = vsel %vm845, %v788, 0
    %v891 = vsel %vm845, %v789, 0
    %v894 = vsel %vm845, %v790, 0
    %v897 = vsel %vm845, %v791, 0
    %899 = vmatpush.msra.mxu0 0.0
    %900 = vmatpush.msra.mxu0 0.0
    %901 = vmatpush.msra.mxu0 0.0
    %902 = vmatpush.msra.mxu0 0.0
    %903 = vmatpush.msra.mxu0 0.0
    %904 = vmatpush.msra.mxu0 0.0
    %905 = vmatpush.msra.mxu0 0.0
    %906 = vmatpush.msra.mxu0 0.0
    %907 = vmatpush.msra.mxu0 %v843
    %908 = vmatpush.msra.mxu0 %v840
    %909 = vmatpush.msra.mxu0 %v837
    %910 = vmatpush.msra.mxu0 %v834
    %911 = vmatpush.msra.mxu0 %v831
    %912 = vmatpush.msra.mxu0 %v828
    %913 = vmatpush.msra.mxu0 %v825
    %914 = vmatpush.msra.mxu0 %v822
    %915 = vmatmul.f32.gmra.mxu0 %v888
    %v916 = vpop.f32.mrf.mxu0
    %v917 = vadd.f32 %v876, %v916
    %918 = vmatmul.f32.gmra.mxu0 %v891
    %v919 = vpop.f32.mrf.mxu0
    %v920 = vadd.f32 %v879, %v919
    %921 = vmatmul.f32.gmra.mxu0 %v894
    %v922 = vpop.f32.mrf.mxu0
    %v923 = vadd.f32 %v882, %v922
    %924 = vmatmul.f32.gmra.mxu0 %v897
    %v925 = vpop.f32.mrf.mxu0
    %v926 = vadd.f32 %v885, %v925
    %927 = vdwg.mxu0
    %v929 = vsel %vm845, %v796, 0
    %v932 = vsel %vm845, %v797, 0
    %v935 = vsel %vm845, %v798, 0
    %v938 = vsel %vm845, %v799, 0
    %940 = vmatpush.msra.mxu0 0.0
    %941 = vmatpush.msra.mxu0 0.0
    %942 = vmatpush.msra.mxu0 0.0
    %943 = vmatpush.msra.mxu0 0.0
    %944 = vmatpush.msra.mxu0 0.0
    %945 = vmatpush.msra.mxu0 0.0
    %946 = vmatpush.msra.mxu0 0.0
    %947 = vmatpush.msra.mxu0 0.0
    %948 = vmatpush.msra.mxu0 %v582
    %949 = vmatpush.msra.mxu0 %v581
    %950 = vmatpush.msra.mxu0 %v580
    %951 = vmatpush.msra.mxu0 %v579
    %952 = vmatpush.msra.mxu0 %v578
    %953 = vmatpush.msra.mxu0 %v577
    %954 = vmatpush.msra.mxu0 %v576
    %955 = vmatpush.msra.mxu0 %v575
    %956 = vmatmul.f32.gmra.mxu0 %v929
    %v957 = vpop.f32.mrf.mxu0
    %v958 = vadd.f32 0.0, %v957
    %959 = vmatmul.f32.gmra.mxu0 %v932
    %v960 = vpop.f32.mrf.mxu0
    %v961 = vadd.f32 0.0, %v960
    %962 = vmatmul.f32.gmra.mxu0 %v935
    %v963 = vpop.f32.mrf.mxu0
    %v964 = vadd.f32 0.0, %v963
    %965 = vmatmul.f32.gmra.mxu0 %v938
    %v966 = vpop.f32.mrf.mxu0
    %v967 = vadd.f32 0.0, %v966
    %968 = vdwg.mxu0
    %v969 = vadd.f32 %v917, %v958
    %v970 = vadd.f32 %v920, %v961
    %v971 = vadd.f32 %v923, %v964
    %v972 = vadd.f32 %v926, %v967
    %974 = vset.pattern.permute.xlu0 0
    %975 = vperm.xlu0 %974, %v800
    %v976 = vpop.permute.xlu0 %975
    %979 = vset.pattern.permute.xlu0 0
    %980 = vperm.xlu0 %979, %v801
    %v981 = vpop.permute.xlu0 %980
    %984 = vset.pattern.permute.xlu0 0
    %985 = vperm.xlu0 %984, %v802
    %v986 = vpop.permute.xlu0 %985
    %989 = vset.pattern.permute.xlu0 0
    %990 = vperm.xlu0 %989, %v803
    %v991 = vpop.permute.xlu0 %990
    %v993 = vadd.f32 %v969, %v976
    %v994 = vadd.f32 %v970, %v981
    %v995 = vadd.f32 %v971, %v986
    %v996 = vadd.f32 %v972, %v991
    %vm997 = vcmp.ge.f32.partialorder %v993, 0.0
    %vm998 = vcmp.ge.f32.partialorder %v994, 0.0
    %vm999 = vcmp.ge.f32.partialorder %v995, 0.0
    %vm1000 = vcmp.ge.f32.partialorder %v996, 0.0
    %v1001 = vmul.f32 %v993, 0.25
    %v1002 = vmul.f32 %v994, 0.25
    %v1003 = vmul.f32 %v995, 0.25
    %v1004 = vmul.f32 %v996, 0.25
    %v1005 = vsel %vm997, %v993, %v1001
    %v1006 = vsel %vm998, %v994, %v1002
    %v1007 = vsel %vm999, %v995, %v1003
    %v1008 = vsel %vm1000, %v996, %v1004
    %1009 = vmatpush.msra.mxu0 %v787
    %1010 = vmatpush.msra.mxu0 %v786
    %1011 = vmatpush.msra.mxu0 %v785
    %1012 = vmatpush.msra.mxu0 %v784
    %1013 = vmatpush.msra.mxu0 %v783
    %1014 = vmatpush.msra.mxu0 %v782
    %1015 = vmatpush.msra.mxu0 %v781
    %1016 = vmatpush.msra.mxu0 %v780
    %1017 = vmatpush.msra.mxu0 %v779
    %1018 = vmatpush.msra.mxu0 %v778
    %1019 = vmatpush.msra.mxu0 %v777
    %1020 = vmatpush.msra.mxu0 %v776
    %1021 = vmatpush.msra.mxu0 %v775
    %1022 = vmatpush.msra.mxu0 %v774
    %1023 = vmatpush.msra.mxu0 %v773
    %1024 = vmatpush.msra.mxu0 %v772
    %1025 = vmatmul.f32.gmra.mxu0 %v764
    %v1026 = vpop.f32.mrf.mxu0
    %v1027 = vadd.f32 0.0, %v1026
    %1028 = vmatmul.f32.gmra.mxu0 %v765
    %v1029 = vpop.f32.mrf.mxu0
    %v1030 = vadd.f32 0.0, %v1029
    %1031 = vmatmul.f32.gmra.mxu0 %v766
    %v1032 = vpop.f32.mrf.mxu0
    %v1033 = vadd.f32 0.0, %v1032
    %1034 = vmatmul.f32.gmra.mxu0 %v767
    %v1035 = vpop.f32.mrf.mxu0
    %v1036 = vadd.f32 0.0, %v1035
    %1037 = vmatmul.f32.gmra.mxu0 %v768
    %v1038 = vpop.f32.mrf.mxu0
    %v1039 = vadd.f32 0.0, %v1038
    %1040 = vmatmul.f32.gmra.mxu0 %v769
    %v1041 = vpop.f32.mrf.mxu0
    %v1042 = vadd.f32 0.0, %v1041
    %1043 = vmatmul.f32.gmra.mxu0 %v770
    %v1044 = vpop.f32.mrf.mxu0
    %v1045 = vadd.f32 0.0, %v1044
    %1046 = vmatmul.f32.gmra.mxu0 %v771
    %v1047 = vpop.f32.mrf.mxu0
    %v1048 = vadd.f32 0.0, %v1047
    %1049 = vdwg.mxu0
    %1050 = vmatpush.msra.mxu0 0.0
    %1051 = vmatpush.msra.mxu0 0.0
    %1052 = vmatpush.msra.mxu0 0.0
    %1053 = vmatpush.msra.mxu0 0.0
    %1054 = vmatpush.msra.mxu0 0.0
    %1055 = vmatpush.msra.mxu0 0.0
    %1056 = vmatpush.msra.mxu0 0.0
    %1057 = vmatpush.msra.mxu0 0.0
    %1058 = vmatpush.msra.mxu0 %v771
    %1059 = vmatpush.msra.mxu0 %v770
    %1060 = vmatpush.msra.mxu0 %v769
    %1061 = vmatpush.msra.mxu0 %v768
    %1062 = vmatpush.msra.mxu0 %v767
    %1063 = vmatpush.msra.mxu0 %v766
    %1064 = vmatpush.msra.mxu0 %v765
    %1065 = vmatpush.msra.mxu0 %v764
    %1066 = vmatmul.f32.gmra.mxu0 %v847
    %v1067 = vpop.f32.mrf.mxu0
    %v1068 = vadd.f32 0.0, %v1067
    %1069 = vmatmul.f32.gmra.mxu0 %v850
    %v1070 = vpop.f32.mrf.mxu0
    %v1071 = vadd.f32 0.0, %v1070
    %1072 = vmatmul.f32.gmra.mxu0 %v853
    %v1073 = vpop.f32.mrf.mxu0
    %v1074 = vadd.f32 0.0, %v1073
    %1075 = vmatmul.f32.gmra.mxu0 %v856
    %v1076 = vpop.f32.mrf.mxu0
    %v1077 = vadd.f32 0.0, %v1076
    %1078 = vdwg.mxu0
    %1079 = vmatpush.msra.mxu0 0.0
    %1080 = vmatpush.msra.mxu0 0.0
    %1081 = vmatpush.msra.mxu0 0.0
    %1082 = vmatpush.msra.mxu0 0.0
    %1083 = vmatpush.msra.mxu0 0.0
    %1084 = vmatpush.msra.mxu0 0.0
    %1085 = vmatpush.msra.mxu0 0.0
    %1086 = vmatpush.msra.mxu0 0.0
    %1087 = vmatpush.msra.mxu0 %v1048
    %1088 = vmatpush.msra.mxu0 %v1045
    %1089 = vmatpush.msra.mxu0 %v1042
    %1090 = vmatpush.msra.mxu0 %v1039
    %1091 = vmatpush.msra.mxu0 %v1036
    %1092 = vmatpush.msra.mxu0 %v1033
    %1093 = vmatpush.msra.mxu0 %v1030
    %1094 = vmatpush.msra.mxu0 %v1027
    %1095 = vmatmul.f32.gmra.mxu0 %v888
    %v1096 = vpop.f32.mrf.mxu0
    %v1097 = vadd.f32 %v1068, %v1096
    %1098 = vmatmul.f32.gmra.mxu0 %v891
    %v1099 = vpop.f32.mrf.mxu0
    %v1100 = vadd.f32 %v1071, %v1099
    %1101 = vmatmul.f32.gmra.mxu0 %v894
    %v1102 = vpop.f32.mrf.mxu0
    %v1103 = vadd.f32 %v1074, %v1102
    %1104 = vmatmul.f32.gmra.mxu0 %v897
    %v1105 = vpop.f32.mrf.mxu0
    %v1106 = vadd.f32 %v1077, %v1105
    %1107 = vdwg.mxu0
    %1108 = vmatpush.msra.mxu0 0.0
    %1109 = vmatpush.msra.mxu0 0.0
    %1110 = vmatpush.msra.mxu0 0.0
    %1111 = vmatpush.msra.mxu0 0.0
    %1112 = vmatpush.msra.mxu0 0.0
    %1113 = vmatpush.msra.mxu0 0.0
    %1114 = vmatpush.msra.mxu0 0.0
    %1115 = vmatpush.msra.mxu0 0.0
    %1116 = vmatpush.msra.mxu0 %v771
    %1117 = vmatpush.msra.mxu0 %v770
    %1118 = vmatpush.msra.mxu0 %v769
    %1119 = vmatpush.msra.mxu0 %v768
    %1120 = vmatpush.msra.mxu0 %v767
    %1121 = vmatpush.msra.mxu0 %v766
    %1122 = vmatpush.msra.mxu0 %v765
    %1123 = vmatpush.msra.mxu0 %v764
    %1124 = vmatmul.f32.gmra.mxu0 %v929
    %v1125 = vpop.f32.mrf.mxu0
    %v1126 = vadd.f32 0.0, %v1125
    %1127 = vmatmul.f32.gmra.mxu0 %v932
    %v1128 = vpop.f32.mrf.mxu0
    %v1129 = vadd.f32 0.0, %v1128
    %1130 = vmatmul.f32.gmra.mxu0 %v935
    %v1131 = vpop.f32.mrf.mxu0
    %v1132 = vadd.f32 0.0, %v1131
    %1133 = vmatmul.f32.gmra.mxu0 %v938
    %v1134 = vpop.f32.mrf.mxu0
    %v1135 = vadd.f32 0.0, %v1134
    %1136 = vdwg.mxu0
    %v1137 = vadd.f32 %v1097, %v1126
    %v1138 = vadd.f32 %v1100, %v1129
    %v1139 = vadd.f32 %v1103, %v1132
    %v1140 = vadd.f32 %v1106, %v1135
    %v1141 = vadd.f32 %v1137, %v976
    %v1142 = vadd.f32 %v1138, %v981
    %v1143 = vadd.f32 %v1139, %v986
    %v1144 = vadd.f32 %v1140, %v991
    %vm1145 = vcmp.ge.f32.partialorder %v1141, 0.0
    %vm1146 = vcmp.ge.f32.partialorder %v1142, 0.0
    %vm1147 = vcmp.ge.f32.partialorder %v1143, 0.0
    %vm1148 = vcmp.ge.f32.partialorder %v1144, 0.0
    %v1149 = vmul.f32 %v1141, 0.25
    %v1150 = vmul.f32 %v1142, 0.25
    %v1151 = vmul.f32 %v1143, 0.25
    %v1152 = vmul.f32 %v1144, 0.25
    %v1153 = vsel %vm1145, %v1141, %v1149
    %v1154 = vsel %vm1146, %v1142, %v1150
    %v1155 = vsel %vm1147, %v1143, %v1151
    %v1156 = vsel %vm1148, %v1144, %v1152
    %v1157 = vld [vmem:[%s11] sm:$0xff]
    %v1158 = vld [vmem:[%s11 + $0x8] sm:$0xff]
    %v1159 = vld [vmem:[%s11 + $0x10] sm:$0xff]
    %v1160 = vld [vmem:[%s11 + $0x18] sm:$0xff]
    %v1161 = vld [vmem:[%s11 + $0x20] sm:$0xff]
    %v1162 = vld [vmem:[%s11 + $0x28] sm:$0xff]
    %v1163 = vld [vmem:[%s11 + $0x30] sm:$0xff]
    %v1164 = vld [vmem:[%s11 + $0x38] sm:$0xff]
    %v1165 = vld [vmem:[%s11 + $0x40] sm:$0xff]
    %v1166 = vld [vmem:[%s11 + $0x48] sm:$0xff]
    %v1167 = vld [vmem:[%s11 + $0x50] sm:$0xff]
    %v1168 = vld [vmem:[%s11 + $0x58] sm:$0xff]
    %v1169 = vld [vmem:[%s11 + $0x60] sm:$0xff]
    %v1170 = vld [vmem:[%s11 + $0x68] sm:$0xff]
    %v1171 = vld [vmem:[%s11 + $0x70] sm:$0xff]
    %v1172 = vld [vmem:[%s11 + $0x78] sm:$0xff]
    %v1173 = vld [vmem:[%s12] sm:$0xff]
    %v1174 = vld [vmem:[%s12 + $0x8] sm:$0xff]
    %v1175 = vld [vmem:[%s12 + $0x10] sm:$0xff]
    %v1176 = vld [vmem:[%s12 + $0x18] sm:$0xff]
    %v1177 = vld [vmem:[%s12 + $0x20] sm:$0xff]
    %v1178 = vld [vmem:[%s12 + $0x28] sm:$0xff]
    %v1179 = vld [vmem:[%s12 + $0x30] sm:$0xff]
    %v1180 = vld [vmem:[%s12 + $0x38] sm:$0xff]
    %v1181 = vld [vmem:[%s13] sm:$0xff]
    %v1182 = vld [vmem:[%s13 + $0x8] sm:$0xff]
    %v1183 = vld [vmem:[%s13 + $0x10] sm:$0xff]
    %v1184 = vld [vmem:[%s13 + $0x18] sm:$0xff]
    %v1185 = vld [vmem:[%s13 + $0x20] sm:$0xff]
    %v1186 = vld [vmem:[%s13 + $0x28] sm:$0xff]
    %v1187 = vld [vmem:[%s13 + $0x30] sm:$0xff]
    %v1188 = vld [vmem:[%s13 + $0x38] sm:$0xff]
    %v1189 = vld [vmem:[%s14] sm:$0xff]
    %v1190 = vld [vmem:[%s14 + $0x8] sm:$0xff]
    %v1191 = vld [vmem:[%s14 + $0x10] sm:$0xff]
    %v1192 = vld [vmem:[%s14 + $0x18] sm:$0xff]
    %v1193 = vld [vmem:[%s14 + $0x20] sm:$0xff]
    %v1194 = vld [vmem:[%s14 + $0x28] sm:$0xff]
    %v1195 = vld [vmem:[%s14 + $0x30] sm:$0xff]
    %v1196 = vld [vmem:[%s14 + $0x38] sm:$0xff]
    %v1197 = vld [vmem:[%s15] sm:$0xff]
    %v1198 = vld [vmem:[%s15 + $0x8] sm:$0xff]
    %v1199 = vld [vmem:[%s15 + $0x10] sm:$0xff]
    %v1200 = vld [vmem:[%s15 + $0x18] sm:$0xff]
    %v1201 = vld [vmem:[%s15 + $0x20] sm:$0xff]
    %v1202 = vld [vmem:[%s15 + $0x28] sm:$0xff]
    %v1203 = vld [vmem:[%s15 + $0x30] sm:$0xff]
    %v1204 = vld [vmem:[%s15 + $0x38] sm:$0xff]
    %1205 = vmatpush.msra.mxu0 %v1172
    %1206 = vmatpush.msra.mxu0 %v1171
    %1207 = vmatpush.msra.mxu0 %v1170
    %1208 = vmatpush.msra.mxu0 %v1169
    %1209 = vmatpush.msra.mxu0 %v1168
    %1210 = vmatpush.msra.mxu0 %v1167
    %1211 = vmatpush.msra.mxu0 %v1166
    %1212 = vmatpush.msra.mxu0 %v1165
    %1213 = vmatpush.msra.mxu0 %v1164
    %1214 = vmatpush.msra.mxu0 %v1163
    %1215 = vmatpush.msra.mxu0 %v1162
    %1216 = vmatpush.msra.mxu0 %v1161
    %1217 = vmatpush.msra.mxu0 %v1160
    %1218 = vmatpush.msra.mxu0 %v1159
    %1219 = vmatpush.msra.mxu0 %v1158
    %1220 = vmatpush.msra.mxu0 %v1157
    %1221 = vmatmul.f32.gmra.mxu0 %v1005
    %v1222 = vpop.f32.mrf.mxu0
    %v1223 = vadd.f32 0.0, %v1222
    %1224 = vmatmul.f32.gmra.mxu0 %v1006
    %v1225 = vpop.f32.mrf.mxu0
    %v1226 = vadd.f32 0.0, %v1225
    %1227 = vmatmul.f32.gmra.mxu0 %v1007
    %v1228 = vpop.f32.mrf.mxu0
    %v1229 = vadd.f32 0.0, %v1228
    %1230 = vmatmul.f32.gmra.mxu0 %v1008
    %v1231 = vpop.f32.mrf.mxu0
    %v1232 = vadd.f32 0.0, %v1231
    %1233 = vdwg.mxu0
    %v1235 = vsel %vm845, %v1181, 0
    %v1238 = vsel %vm845, %v1182, 0
    %v1241 = vsel %vm845, %v1183, 0
    %v1244 = vsel %vm845, %v1184, 0
    %v1247 = vsel %vm845, %v1185, 0
    %v1250 = vsel %vm845, %v1186, 0
    %v1253 = vsel %vm845, %v1187, 0
    %v1256 = vsel %vm845, %v1188, 0
    %1258 = vmatpush.msra.mxu0 0.0
    %1259 = vmatpush.msra.mxu0 0.0
    %1260 = vmatpush.msra.mxu0 0.0
    %1261 = vmatpush.msra.mxu0 0.0
    %1262 = vmatpush.msra.mxu0 0.0
    %1263 = vmatpush.msra.mxu0 0.0
    %1264 = vmatpush.msra.mxu0 0.0
    %1265 = vmatpush.msra.mxu0 0.0
    %1266 = vmatpush.msra.mxu0 %v582
    %1267 = vmatpush.msra.mxu0 %v581
    %1268 = vmatpush.msra.mxu0 %v580
    %1269 = vmatpush.msra.mxu0 %v579
    %1270 = vmatpush.msra.mxu0 %v578
    %1271 = vmatpush.msra.mxu0 %v577
    %1272 = vmatpush.msra.mxu0 %v576
    %1273 = vmatpush.msra.mxu0 %v575
    %1274 = vmatmul.f32.gmra.mxu0 %v1235
    %v1275 = vpop.f32.mrf.mxu0
    %v1276 = vadd.f32 0.0, %v1275
    %1277 = vmatmul.f32.gmra.mxu0 %v1238
    %v1278 = vpop.f32.mrf.mxu0
    %v1279 = vadd.f32 0.0, %v1278
    %1280 = vmatmul.f32.gmra.mxu0 %v1241
    %v1281 = vpop.f32.mrf.mxu0
    %v1282 = vadd.f32 0.0, %v1281
    %1283 = vmatmul.f32.gmra.mxu0 %v1244
    %v1284 = vpop.f32.mrf.mxu0
    %v1285 = vadd.f32 0.0, %v1284
    %1286 = vmatmul.f32.gmra.mxu0 %v1247
    %v1287 = vpop.f32.mrf.mxu0
    %v1288 = vadd.f32 0.0, %v1287
    %1289 = vmatmul.f32.gmra.mxu0 %v1250
    %v1290 = vpop.f32.mrf.mxu0
    %v1291 = vadd.f32 0.0, %v1290
    %1292 = vmatmul.f32.gmra.mxu0 %v1253
    %v1293 = vpop.f32.mrf.mxu0
    %v1294 = vadd.f32 0.0, %v1293
    %1295 = vmatmul.f32.gmra.mxu0 %v1256
    %v1296 = vpop.f32.mrf.mxu0
    %v1297 = vadd.f32 0.0, %v1296
    %1298 = vdwg.mxu0
    %vm1299 = vcmask 261120
    %v1301 = vsel %vm1299, %v1173, 0
    %v1304 = vsel %vm1299, %v1174, 0
    %v1307 = vsel %vm1299, %v1175, 0
    %v1310 = vsel %vm1299, %v1176, 0
    %v1313 = vsel %vm1299, %v1177, 0
    %v1316 = vsel %vm1299, %v1178, 0
    %v1319 = vsel %vm1299, %v1179, 0
    %v1322 = vsel %vm1299, %v1180, 0
    %1324 = vmatpush.msra.mxu0 0.0
    %1325 = vmatpush.msra.mxu0 0.0
    %1326 = vmatpush.msra.mxu0 0.0
    %1327 = vmatpush.msra.mxu0 0.0
    %1328 = vmatpush.msra.mxu0 0.0
    %1329 = vmatpush.msra.mxu0 0.0
    %1330 = vmatpush.msra.mxu0 0.0
    %1331 = vmatpush.msra.mxu0 0.0
    %1332 = vmatpush.msra.mxu0 0.0
    %1333 = vmatpush.msra.mxu0 0.0
    %1334 = vmatpush.msra.mxu0 0.0
    %1335 = vmatpush.msra.mxu0 0.0
    %1336 = vmatpush.msra.mxu0 %v1232
    %1337 = vmatpush.msra.mxu0 %v1229
    %1338 = vmatpush.msra.mxu0 %v1226
    %1339 = vmatpush.msra.mxu0 %v1223
    %1340 = vmatmul.f32.gmra.mxu0 %v1301
    %v1341 = vpop.f32.mrf.mxu0
    %v1342 = vadd.f32 %v1276, %v1341
    %1343 = vmatmul.f32.gmra.mxu0 %v1304
    %v1344 = vpop.f32.mrf.mxu0
    %v1345 = vadd.f32 %v1279, %v1344
    %1346 = vmatmul.f32.gmra.mxu0 %v1307
    %v1347 = vpop.f32.mrf.mxu0
    %v1348 = vadd.f32 %v1282, %v1347
    %1349 = vmatmul.f32.gmra.mxu0 %v1310
    %v1350 = vpop.f32.mrf.mxu0
    %v1351 = vadd.f32 %v1285, %v1350
    %1352 = vmatmul.f32.gmra.mxu0 %v1313
    %v1353 = vpop.f32.mrf.mxu0
    %v1354 = vadd.f32 %v1288, %v1353
    %1355 = vmatmul.f32.gmra.mxu0 %v1316
    %v1356 = vpop.f32.mrf.mxu0
    %v1357 = vadd.f32 %v1291, %v1356
    %1358 = vmatmul.f32.gmra.mxu0 %v1319
    %v1359 = vpop.f32.mrf.mxu0
    %v1360 = vadd.f32 %v1294, %v1359
    %1361 = vmatmul.f32.gmra.mxu0 %v1322
    %v1362 = vpop.f32.mrf.mxu0
    %v1363 = vadd.f32 %v1297, %v1362
    %1364 = vdwg.mxu0
    %v1366 = vsel %vm1299, %v1189, 0
    %v1369 = vsel %vm1299, %v1190, 0
    %v1372 = vsel %vm1299, %v1191, 0
    %v1375 = vsel %vm1299, %v1192, 0
    %v1378 = vsel %vm1299, %v1193, 0
    %v1381 = vsel %vm1299, %v1194, 0
    %v1384 = vsel %vm1299, %v1195, 0
    %v1387 = vsel %vm1299, %v1196, 0
    %1389 = vmatpush.msra.mxu0 0.0
    %1390 = vmatpush.msra.mxu0 0.0
    %1391 = vmatpush.msra.mxu0 0.0
    %1392 = vmatpush.msra.mxu0 0.0
    %1393 = vmatpush.msra.mxu0 0.0
    %1394 = vmatpush.msra.mxu0 0.0
    %1395 = vmatpush.msra.mxu0 0.0
    %1396 = vmatpush.msra.mxu0 0.0
    %1397 = vmatpush.msra.mxu0 0.0
    %1398 = vmatpush.msra.mxu0 0.0
    %1399 = vmatpush.msra.mxu0 0.0
    %1400 = vmatpush.msra.mxu0 0.0
    %1401 = vmatpush.msra.mxu0 %v1008
    %1402 = vmatpush.msra.mxu0 %v1007
    %1403 = vmatpush.msra.mxu0 %v1006
    %1404 = vmatpush.msra.mxu0 %v1005
    %1405 = vmatmul.f32.gmra.mxu0 %v1366
    %v1406 = vpop.f32.mrf.mxu0
    %v1407 = vadd.f32 0.0, %v1406
    %1408 = vmatmul.f32.gmra.mxu0 %v1369
    %v1409 = vpop.f32.mrf.mxu0
    %v1410 = vadd.f32 0.0, %v1409
    %1411 = vmatmul.f32.gmra.mxu0 %v1372
    %v1412 = vpop.f32.mrf.mxu0
    %v1413 = vadd.f32 0.0, %v1412
    %1414 = vmatmul.f32.gmra.mxu0 %v1375
    %v1415 = vpop.f32.mrf.mxu0
    %v1416 = vadd.f32 0.0, %v1415
    %1417 = vmatmul.f32.gmra.mxu0 %v1378
    %v1418 = vpop.f32.mrf.mxu0
    %v1419 = vadd.f32 0.0, %v1418
    %1420 = vmatmul.f32.gmra.mxu0 %v1381
    %v1421 = vpop.f32.mrf.mxu0
    %v1422 = vadd.f32 0.0, %v1421
    %1423 = vmatmul.f32.gmra.mxu0 %v1384
    %v1424 = vpop.f32.mrf.mxu0
    %v1425 = vadd.f32 0.0, %v1424
    %1426 = vmatmul.f32.gmra.mxu0 %v1387
    %v1427 = vpop.f32.mrf.mxu0
    %v1428 = vadd.f32 0.0, %v1427
    %1429 = vdwg.mxu0
    %v1430 = vadd.f32 %v1342, %v1407
    %v1431 = vadd.f32 %v1345, %v1410
    %v1432 = vadd.f32 %v1348, %v1413
    %v1433 = vadd.f32 %v1351, %v1416
    %v1434 = vadd.f32 %v1354, %v1419
    %v1435 = vadd.f32 %v1357, %v1422
    %v1436 = vadd.f32 %v1360, %v1425
    %v1437 = vadd.f32 %v1363, %v1428
    %1439 = vset.pattern.permute.xlu0 0
    %1440 = vperm.xlu0 %1439, %v1197
    %v1441 = vpop.permute.xlu0 %1440
    %1444 = vset.pattern.permute.xlu0 0
    %1445 = vperm.xlu0 %1444, %v1198
    %v1446 = vpop.permute.xlu0 %1445
    %1449 = vset.pattern.permute.xlu0 0
    %1450 = vperm.xlu0 %1449, %v1199
    %v1451 = vpop.permute.xlu0 %1450
    %1454 = vset.pattern.permute.xlu0 0
    %1455 = vperm.xlu0 %1454, %v1200
    %v1456 = vpop.permute.xlu0 %1455
    %1459 = vset.pattern.permute.xlu0 0
    %1460 = vperm.xlu0 %1459, %v1201
    %v1461 = vpop.permute.xlu0 %1460
    %1464 = vset.pattern.permute.xlu0 0
    %1465 = vperm.xlu0 %1464, %v1202
    %v1466 = vpop.permute.xlu0 %1465
    %1469 = vset.pattern.permute.xlu0 0
    %1470 = vperm.xlu0 %1469, %v1203
    %v1471 = vpop.permute.xlu0 %1470
    %1474 = vset.pattern.permute.xlu0 0
    %1475 = vperm.xlu0 %1474, %v1204
    %v1476 = vpop.permute.xlu0 %1475
    %v1478 = vadd.f32 %v1430, %v1441
    %v1479 = vadd.f32 %v1431, %v1446
    %v1480 = vadd.f32 %v1432, %v1451
    %v1481 = vadd.f32 %v1433, %v1456
    %v1482 = vadd.f32 %v1434, %v1461
    %v1483 = vadd.f32 %v1435, %v1466
    %v1484 = vadd.f32 %v1436, %v1471
    %v1485 = vadd.f32 %v1437, %v1476
    %vm1486 = vcmp.ge.f32.partialorder %v1478, 0.0
    %vm1487 = vcmp.ge.f32.partialorder %v1479, 0.0
    %vm1488 = vcmp.ge.f32.partialorder %v1480, 0.0
    %vm1489 = vcmp.ge.f32.partialorder %v1481, 0.0
    %vm1490 = vcmp.ge.f32.partialorder %v1482, 0.0
    %vm1491 = vcmp.ge.f32.partialorder %v1483, 0.0
    %vm1492 = vcmp.ge.f32.partialorder %v1484, 0.0
    %vm1493 = vcmp.ge.f32.partialorder %v1485, 0.0
    %v1494 = vmul.f32 %v1478, 0.25
    %v1495 = vmul.f32 %v1479, 0.25
    %v1496 = vmul.f32 %v1480, 0.25
    %v1497 = vmul.f32 %v1481, 0.25
    %v1498 = vmul.f32 %v1482, 0.25
    %v1499 = vmul.f32 %v1483, 0.25
    %v1500 = vmul.f32 %v1484, 0.25
    %v1501 = vmul.f32 %v1485, 0.25
    %v1502 = vsel %vm1486, %v1478, %v1494
    %v1503 = vsel %vm1487, %v1479, %v1495
    %v1504 = vsel %vm1488, %v1480, %v1496
    %v1505 = vsel %vm1489, %v1481, %v1497
    %v1506 = vsel %vm1490, %v1482, %v1498
    %v1507 = vsel %vm1491, %v1483, %v1499
    %v1508 = vsel %vm1492, %v1484, %v1500
    %v1509 = vsel %vm1493, %v1485, %v1501
    %1510 = vmatpush.msra.mxu0 %v1172
    %1511 = vmatpush.msra.mxu0 %v1171
    %1512 = vmatpush.msra.mxu0 %v1170
    %1513 = vmatpush.msra.mxu0 %v1169
    %1514 = vmatpush.msra.mxu0 %v1168
    %1515 = vmatpush.msra.mxu0 %v1167
    %1516 = vmatpush.msra.mxu0 %v1166
    %1517 = vmatpush.msra.mxu0 %v1165
    %1518 = vmatpush.msra.mxu0 %v1164
    %1519 = vmatpush.msra.mxu0 %v1163
    %1520 = vmatpush.msra.mxu0 %v1162
    %1521 = vmatpush.msra.mxu0 %v1161
    %1522 = vmatpush.msra.mxu0 %v1160
    %1523 = vmatpush.msra.mxu0 %v1159
    %1524 = vmatpush.msra.mxu0 %v1158
    %1525 = vmatpush.msra.mxu0 %v1157
    %1526 = vmatmul.f32.gmra.mxu0 %v1153
    %v1527 = vpop.f32.mrf.mxu0
    %v1528 = vadd.f32 0.0, %v1527
    %1529 = vmatmul.f32.gmra.mxu0 %v1154
    %v1530 = vpop.f32.mrf.mxu0
    %v1531 = vadd.f32 0.0, %v1530
    %1532 = vmatmul.f32.gmra.mxu0 %v1155
    %v1533 = vpop.f32.mrf.mxu0
    %v1534 = vadd.f32 0.0, %v1533
    %1535 = vmatmul.f32.gmra.mxu0 %v1156
    %v1536 = vpop.f32.mrf.mxu0
    %v1537 = vadd.f32 0.0, %v1536
    %1538 = vdwg.mxu0
    %1539 = vmatpush.msra.mxu0 0.0
    %1540 = vmatpush.msra.mxu0 0.0
    %1541 = vmatpush.msra.mxu0 0.0
    %1542 = vmatpush.msra.mxu0 0.0
    %1543 = vmatpush.msra.mxu0 0.0
    %1544 = vmatpush.msra.mxu0 0.0
    %1545 = vmatpush.msra.mxu0 0.0
    %1546 = vmatpush.msra.mxu0 0.0
    %1547 = vmatpush.msra.mxu0 %v771
    %1548 = vmatpush.msra.mxu0 %v770
    %1549 = vmatpush.msra.mxu0 %v769
    %1550 = vmatpush.msra.mxu0 %v768
    %1551 = vmatpush.msra.mxu0 %v767
    %1552 = vmatpush.msra.mxu0 %v766
    %1553 = vmatpush.msra.mxu0 %v765
    %1554 = vmatpush.msra.mxu0 %v764
    %1555 = vmatmul.f32.gmra.mxu0 %v1235
    %v1556 = vpop.f32.mrf.mxu0
    %v1557 = vadd.f32 0.0, %v1556
    %1558 = vmatmul.f32.gmra.mxu0 %v1238
    %v1559 = vpop.f32.mrf.mxu0
    %v1560 = vadd.f32 0.0, %v1559
    %1561 = vmatmul.f32.gmra.mxu0 %v1241
    %v1562 = vpop.f32.mrf.mxu0
    %v1563 = vadd.f32 0.0, %v1562
    %1564 = vmatmul.f32.gmra.mxu0 %v1244
    %v1565 = vpop.f32.mrf.mxu0
    %v1566 = vadd.f32 0.0, %v1565
    %1567 = vmatmul.f32.gmra.mxu0 %v1247
    %v1568 = vpop.f32.mrf.mxu0
    %v1569 = vadd.f32 0.0, %v1568
    %1570 = vmatmul.f32.gmra.mxu0 %v1250
    %v1571 = vpop.f32.mrf.mxu0
    %v1572 = vadd.f32 0.0, %v1571
    %1573 = vmatmul.f32.gmra.mxu0 %v1253
    %v1574 = vpop.f32.mrf.mxu0
    %v1575 = vadd.f32 0.0, %v1574
    %1576 = vmatmul.f32.gmra.mxu0 %v1256
    %v1577 = vpop.f32.mrf.mxu0
    %v1578 = vadd.f32 0.0, %v1577
    %1579 = vdwg.mxu0
    %1580 = vmatpush.msra.mxu0 0.0
    %1581 = vmatpush.msra.mxu0 0.0
    %1582 = vmatpush.msra.mxu0 0.0
    %1583 = vmatpush.msra.mxu0 0.0
    %1584 = vmatpush.msra.mxu0 0.0
    %1585 = vmatpush.msra.mxu0 0.0
    %1586 = vmatpush.msra.mxu0 0.0
    %1587 = vmatpush.msra.mxu0 0.0
    %1588 = vmatpush.msra.mxu0 0.0
    %1589 = vmatpush.msra.mxu0 0.0
    %1590 = vmatpush.msra.mxu0 0.0
    %1591 = vmatpush.msra.mxu0 0.0
    %1592 = vmatpush.msra.mxu0 %v1537
    %1593 = vmatpush.msra.mxu0 %v1534
    %1594 = vmatpush.msra.mxu0 %v1531
    %1595 = vmatpush.msra.mxu0 %v1528
    %1596 = vmatmul.f32.gmra.mxu0 %v1301
    %v1597 = vpop.f32.mrf.mxu0
    %v1598 = vadd.f32 %v1557, %v1597
    %1599 = vmatmul.f32.gmra.mxu0 %v1304
    %v1600 = vpop.f32.mrf.mxu0
    %v1601 = vadd.f32 %v1560, %v1600
    %1602 = vmatmul.f32.gmra.mxu0 %v1307
    %v1603 = vpop.f32.mrf.mxu0
    %v1604 = vadd.f32 %v1563, %v1603
    %1605 = vmatmul.f32.gmra.mxu0 %v1310
    %v1606 = vpop.f32.mrf.mxu0
    %v1607 = vadd.f32 %v1566, %v1606
    %1608 = vmatmul.f32.gmra.mxu0 %v1313
    %v1609 = vpop.f32.mrf.mxu0
    %v1610 = vadd.f32 %v1569, %v1609
    %1611 = vmatmul.f32.gmra.mxu0 %v1316
    %v1612 = vpop.f32.mrf.mxu0
    %v1613 = vadd.f32 %v1572, %v1612
    %1614 = vmatmul.f32.gmra.mxu0 %v1319
    %v1615 = vpop.f32.mrf.mxu0
    %v1616 = vadd.f32 %v1575, %v1615
    %1617 = vmatmul.f32.gmra.mxu0 %v1322
    %v1618 = vpop.f32.mrf.mxu0
    %v1619 = vadd.f32 %v1578, %v1618
    %1620 = vdwg.mxu0
    %1621 = vmatpush.msra.mxu0 0.0
    %1622 = vmatpush.msra.mxu0 0.0
    %1623 = vmatpush.msra.mxu0 0.0
    %1624 = vmatpush.msra.mxu0 0.0
    %1625 = vmatpush.msra.mxu0 0.0
    %1626 = vmatpush.msra.mxu0 0.0
    %1627 = vmatpush.msra.mxu0 0.0
    %1628 = vmatpush.msra.mxu0 0.0
    %1629 = vmatpush.msra.mxu0 0.0
    %1630 = vmatpush.msra.mxu0 0.0
    %1631 = vmatpush.msra.mxu0 0.0
    %1632 = vmatpush.msra.mxu0 0.0
    %1633 = vmatpush.msra.mxu0 %v1156
    %1634 = vmatpush.msra.mxu0 %v1155
    %1635 = vmatpush.msra.mxu0 %v1154
    %1636 = vmatpush.msra.mxu0 %v1153
    %1637 = vmatmul.f32.gmra.mxu0 %v1366
    %v1638 = vpop.f32.mrf.mxu0
    %v1639 = vadd.f32 0.0, %v1638
    %1640 = vmatmul.f32.gmra.mxu0 %v1369
    %v1641 = vpop.f32.mrf.mxu0
    %v1642 = vadd.f32 0.0, %v1641
    %1643 = vmatmul.f32.gmra.mxu0 %v1372
    %v1644 = vpop.f32.mrf.mxu0
    %v1645 = vadd.f32 0.0, %v1644
    %1646 = vmatmul.f32.gmra.mxu0 %v1375
    %v1647 = vpop.f32.mrf.mxu0
    %v1648 = vadd.f32 0.0, %v1647
    %1649 = vmatmul.f32.gmra.mxu0 %v1378
    %v1650 = vpop.f32.mrf.mxu0
    %v1651 = vadd.f32 0.0, %v1650
    %1652 = vmatmul.f32.gmra.mxu0 %v1381
    %v1653 = vpop.f32.mrf.mxu0
    %v1654 = vadd.f32 0.0, %v1653
    %1655 = vmatmul.f32.gmra.mxu0 %v1384
    %v1656 = vpop.f32.mrf.mxu0
    %v1657 = vadd.f32 0.0, %v1656
    %1658 = vmatmul.f32.gmra.mxu0 %v1387
    %v1659 = vpop.f32.mrf.mxu0
    %v1660 = vadd.f32 0.0, %v1659
    %1661 = vdwg.mxu0
    %v1662 = vadd.f32 %v1598, %v1639
    %v1663 = vadd.f32 %v1601, %v1642
    %v1664 = vadd.f32 %v1604, %v1645
    %v1665 = vadd.f32 %v1607, %v1648
    %v1666 = vadd.f32 %v1610, %v1651
    %v1667 = vadd.f32 %v1613, %v1654
    %v1668 = vadd.f32 %v1616, %v1657
    %v1669 = vadd.f32 %v1619, %v1660
    %v1670 = vadd.f32 %v1662, %v1441
    %v1671 = vadd.f32 %v1663, %v1446
    %v1672 = vadd.f32 %v1664, %v1451
    %v1673 = vadd.f32 %v1665, %v1456
    %v1674 = vadd.f32 %v1666, %v1461
    %v1675 = vadd.f32 %v1667, %v1466
    %v1676 = vadd.f32 %v1668, %v1471
    %v1677 = vadd.f32 %v1669, %v1476
    %vm1678 = vcmp.ge.f32.partialorder %v1670, 0.0
    %vm1679 = vcmp.ge.f32.partialorder %v1671, 0.0
    %vm1680 = vcmp.ge.f32.partialorder %v1672, 0.0
    %vm1681 = vcmp.ge.f32.partialorder %v1673, 0.0
    %vm1682 = vcmp.ge.f32.partialorder %v1674, 0.0
    %vm1683 = vcmp.ge.f32.partialorder %v1675, 0.0
    %vm1684 = vcmp.ge.f32.partialorder %v1676, 0.0
    %vm1685 = vcmp.ge.f32.partialorder %v1677, 0.0
    %v1686 = vmul.f32 %v1670, 0.25
    %v1687 = vmul.f32 %v1671, 0.25
    %v1688 = vmul.f32 %v1672, 0.25
    %v1689 = vmul.f32 %v1673, 0.25
    %v1690 = vmul.f32 %v1674, 0.25
    %v1691 = vmul.f32 %v1675, 0.25
    %v1692 = vmul.f32 %v1676, 0.25
    %v1693 = vmul.f32 %v1677, 0.25
    %v1694 = vsel %vm1678, %v1670, %v1686
    %v1695 = vsel %vm1679, %v1671, %v1687
    %v1696 = vsel %vm1680, %v1672, %v1688
    %v1697 = vsel %vm1681, %v1673, %v1689
    %v1698 = vsel %vm1682, %v1674, %v1690
    %v1699 = vsel %vm1683, %v1675, %v1691
    %v1700 = vsel %vm1684, %v1676, %v1692
    %v1701 = vsel %vm1685, %v1677, %v1693
    %v1702 = vld [vmem:[#allocation7] sm:$0xff]
    %v1703 = vld [vmem:[#allocation7 + $0x8] sm:$0xff]
    %v1704 = vld [vmem:[#allocation7 + $0x10] sm:$0xff]
    %v1705 = vld [vmem:[#allocation7 + $0x18] sm:$0xff]
    %v1706 = vld [vmem:[#allocation7 + $0x20] sm:$0xff]
    %v1707 = vld [vmem:[#allocation7 + $0x28] sm:$0xff]
    %v1708 = vld [vmem:[#allocation7 + $0x30] sm:$0xff]
    %v1709 = vld [vmem:[#allocation7 + $0x38] sm:$0xff]
    %v1710 = vld [vmem:[#allocation7 + $0x40] sm:$0xff]
    %v1711 = vld [vmem:[#allocation7 + $0x48] sm:$0xff]
    %v1712 = vld [vmem:[#allocation7 + $0x50] sm:$0xff]
    %v1713 = vld [vmem:[#allocation7 + $0x58] sm:$0xff]
    %v1714 = vld [vmem:[#allocation7 + $0x60] sm:$0xff]
    %v1715 = vld [vmem:[#allocation7 + $0x68] sm:$0xff]
    %v1716 = vld [vmem:[#allocation7 + $0x70] sm:$0xff]
    %v1717 = vld [vmem:[#allocation7 + $0x78] sm:$0xff]
    %v1718 = vld [vmem:[#allocation9] sm:$0x7]
    %v1719 = vld [vmem:[#allocation10] sm:$0x7]
    %v1720 = vld [vmem:[#allocation12] sm:$0x7]
    %v1721 = vld [vmem:[%s20] sm:$0x7]
    %1722 = vmatpush.msra.mxu0 %v1717
    %1723 = vmatpush.msra.mxu0 %v1716
    %1724 = vmatpush.msra.mxu0 %v1715
    %1725 = vmatpush.msra.mxu0 %v1714
    %1726 = vmatpush.msra.mxu0 %v1713
    %1727 = vmatpush.msra.mxu0 %v1712
    %1728 = vmatpush.msra.mxu0 %v1711
    %1729 = vmatpush.msra.mxu0 %v1710
    %1730 = vmatpush.msra.mxu0 %v1709
    %1731 = vmatpush.msra.mxu0 %v1708
    %1732 = vmatpush.msra.mxu0 %v1707
    %1733 = vmatpush.msra.mxu0 %v1706
    %1734 = vmatpush.msra.mxu0 %v1705
    %1735 = vmatpush.msra.mxu0 %v1704
    %1736 = vmatpush.msra.mxu0 %v1703
    %1737 = vmatpush.msra.mxu0 %v1702
    %1738 = vmatmul.f32.gmra.mxu0 %v1502
    %v1739 = vpop.f32.mrf.mxu0
    %v1740 = vadd.f32 0.0, %v1739
    %1741 = vmatmul.f32.gmra.mxu0 %v1503
    %v1742 = vpop.f32.mrf.mxu0
    %v1743 = vadd.f32 0.0, %v1742
    %1744 = vmatmul.f32.gmra.mxu0 %v1504
    %v1745 = vpop.f32.mrf.mxu0
    %v1746 = vadd.f32 0.0, %v1745
    %1747 = vmatmul.f32.gmra.mxu0 %v1505
    %v1748 = vpop.f32.mrf.mxu0
    %v1749 = vadd.f32 0.0, %v1748
    %1750 = vmatmul.f32.gmra.mxu0 %v1506
    %v1751 = vpop.f32.mrf.mxu0
    %v1752 = vadd.f32 0.0, %v1751
    %1753 = vmatmul.f32.gmra.mxu0 %v1507
    %v1754 = vpop.f32.mrf.mxu0
    %v1755 = vadd.f32 0.0, %v1754
    %1756 = vmatmul.f32.gmra.mxu0 %v1508
    %v1757 = vpop.f32.mrf.mxu0
    %v1758 = vadd.f32 0.0, %v1757
    %1759 = vmatmul.f32.gmra.mxu0 %v1509
    %v1760 = vpop.f32.mrf.mxu0
    %v1761 = vadd.f32 0.0, %v1760
    %1762 = vdwg.mxu0
    %v1764 = vsel %vm845, %v1719, 0
    %1766 = vmatpush.msra.mxu0 0.0
    %1767 = vmatpush.msra.mxu0 0.0
    %1768 = vmatpush.msra.mxu0 0.0
    %1769 = vmatpush.msra.mxu0 0.0
    %1770 = vmatpush.msra.mxu0 0.0
    %1771 = vmatpush.msra.mxu0 0.0
    %1772 = vmatpush.msra.mxu0 0.0
    %1773 = vmatpush.msra.mxu0 0.0
    %1774 = vmatpush.msra.mxu0 %v582
    %1775 = vmatpush.msra.mxu0 %v581
    %1776 = vmatpush.msra.mxu0 %v580
    %1777 = vmatpush.msra.mxu0 %v579
    %1778 = vmatpush.msra.mxu0 %v578
    %1779 = vmatpush.msra.mxu0 %v577
    %1780 = vmatpush.msra.mxu0 %v576
    %1781 = vmatpush.msra.mxu0 %v575
    %1782 = vmatmul.f32.gmra.mxu0 %v1764
    %v1783 = vpop.f32.mrf.mxu0
    %v1784 = vadd.f32 0.0, %v1783
    %1785 = vdwg.mxu0
    %v1787 = vsel %vm845, %v1718, 0
    %1789 = vmatpush.msra.mxu0 0.0
    %1790 = vmatpush.msra.mxu0 0.0
    %1791 = vmatpush.msra.mxu0 0.0
    %1792 = vmatpush.msra.mxu0 0.0
    %1793 = vmatpush.msra.mxu0 0.0
    %1794 = vmatpush.msra.mxu0 0.0
    %1795 = vmatpush.msra.mxu0 0.0
    %1796 = vmatpush.msra.mxu0 0.0
    %1797 = vmatpush.msra.mxu0 %v1761
    %1798 = vmatpush.msra.mxu0 %v1758
    %1799 = vmatpush.msra.mxu0 %v1755
    %1800 = vmatpush.msra.mxu0 %v1752
    %1801 = vmatpush.msra.mxu0 %v1749
    %1802 = vmatpush.msra.mxu0 %v1746
    %1803 = vmatpush.msra.mxu0 %v1743
    %1804 = vmatpush.msra.mxu0 %v1740
    %1805 = vmatmul.f32.gmra.mxu0 %v1787
    %v1806 = vpop.f32.mrf.mxu0
    %v1807 = vadd.f32 %v1784, %v1806
    %1808 = vdwg.mxu0
    %v1810 = vsel %vm845, %v1720, 0
    %1812 = vmatpush.msra.mxu0 0.0
    %1813 = vmatpush.msra.mxu0 0.0
    %1814 = vmatpush.msra.mxu0 0.0
    %1815 = vmatpush.msra.mxu0 0.0
    %1816 = vmatpush.msra.mxu0 0.0
    %1817 = vmatpush.msra.mxu0 0.0
    %1818 = vmatpush.msra.mxu0 0.0
    %1819 = vmatpush.msra.mxu0 0.0
    %1820 = vmatpush.msra.mxu0 %v1509
    %1821 = vmatpush.msra.mxu0 %v1508
    %1822 = vmatpush.msra.mxu0 %v1507
    %1823 = vmatpush.msra.mxu0 %v1506
    %1824 = vmatpush.msra.mxu0 %v1505
    %1825 = vmatpush.msra.mxu0 %v1504
    %1826 = vmatpush.msra.mxu0 %v1503
    %1827 = vmatpush.msra.mxu0 %v1502
    %1828 = vmatmul.f32.gmra.mxu0 %v1810
    %v1829 = vpop.f32.mrf.mxu0
    %v1830 = vadd.f32 0.0, %v1829
    %1831 = vdwg.mxu0
    %v1832 = vadd.f32 %v1807, %v1830
    %1834 = vset.pattern.permute.xlu0 0
    %1835 = vperm.xlu0 %1834, %v1721
    %v1836 = vpop.permute.xlu0 %1835
    %v1838 = vadd.f32 %v1832, %v1836
    %vm1839 = vcmp.ge.f32.partialorder %v1838, 0.0
    %v1840 = vmul.f32 %v1838, 0.25
    %v1841 = vsel %vm1839, %v1838, %v1840
    %1842 = vmatpush.msra.mxu0 %v1717
    %1843 = vmatpush.msra.mxu0 %v1716
    %1844 = vmatpush.msra.mxu0 %v1715
    %1845 = vmatpush.msra.mxu0 %v1714
    %1846 = vmatpush.msra.mxu0 %v1713
    %1847 = vmatpush.msra.mxu0 %v1712
    %1848 = vmatpush.msra.mxu0 %v1711
    %1849 = vmatpush.msra.mxu0 %v1710
    %1850 = vmatpush.msra.mxu0 %v1709
    %1851 = vmatpush.msra.mxu0 %v1708
    %1852 = vmatpush.msra.mxu0 %v1707
    %1853 = vmatpush.msra.mxu0 %v1706
    %1854 = vmatpush.msra.mxu0 %v1705
    %1855 = vmatpush.msra.mxu0 %v1704
    %1856 = vmatpush.msra.mxu0 %v1703
    %1857 = vmatpush.msra.mxu0 %v1702
    %1858 = vmatmul.f32.gmra.mxu0 %v1694
    %v1859 = vpop.f32.mrf.mxu0
    %v1860 = vadd.f32 0.0, %v1859
    %1861 = vmatmul.f32.gmra.mxu0 %v1695
    %v1862 = vpop.f32.mrf.mxu0
    %v1863 = vadd.f32 0.0, %v1862
    %1864 = vmatmul.f32.gmra.mxu0 %v1696
    %v1865 = vpop.f32.mrf.mxu0
    %v1866 = vadd.f32 0.0, %v1865
    %1867 = vmatmul.f32.gmra.mxu0 %v1697
    %v1868 = vpop.f32.mrf.mxu0
    %v1869 = vadd.f32 0.0, %v1868
    %1870 = vmatmul.f32.gmra.mxu0 %v1698
    %v1871 = vpop.f32.mrf.mxu0
    %v1872 = vadd.f32 0.0, %v1871
    %1873 = vmatmul.f32.gmra.mxu0 %v1699
    %v1874 = vpop.f32.mrf.mxu0
    %v1875 = vadd.f32 0.0, %v1874
    %1876 = vmatmul.f32.gmra.mxu0 %v1700
    %v1877 = vpop.f32.mrf.mxu0
    %v1878 = vadd.f32 0.0, %v1877
    %1879 = vmatmul.f32.gmra.mxu0 %v1701
    %v1880 = vpop.f32.mrf.mxu0
    %v1881 = vadd.f32 0.0, %v1880
    %1882 = vdwg.mxu0
    %1883 = vmatpush.msra.mxu0 0.0
    %1884 = vmatpush.msra.mxu0 0.0
    %1885 = vmatpush.msra.mxu0 0.0
    %1886 = vmatpush.msra.mxu0 0.0
    %1887 = vmatpush.msra.mxu0 0.0
    %1888 = vmatpush.msra.mxu0 0.0
    %1889 = vmatpush.msra.mxu0 0.0
    %1890 = vmatpush.msra.mxu0 0.0
    %1891 = vmatpush.msra.mxu0 %v771
    %1892 = vmatpush.msra.mxu0 %v770
    %1893 = vmatpush.msra.mxu0 %v769
    %1894 = vmatpush.msra.mxu0 %v768
    %1895 = vmatpush.msra.mxu0 %v767
    %1896 = vmatpush.msra.mxu0 %v766
    %1897 = vmatpush.msra.mxu0 %v765
    %1898 = vmatpush.msra.mxu0 %v764
    %1899 = vmatmul.f32.gmra.mxu0 %v1764
    %v1900 = vpop.f32.mrf.mxu0
    %v1901 = vadd.f32 0.0, %v1900
    %1902 = vdwg.mxu0
    %1903 = vmatpush.msra.mxu0 0.0
    %1904 = vmatpush.msra.mxu0 0.0
    %1905 = vmatpush.msra.mxu0 0.0
    %1906 = vmatpush.msra.mxu0 0.0
    %1907 = vmatpush.msra.mxu0 0.0
    %1908 = vmatpush.msra.mxu0 0.0
    %1909 = vmatpush.msra.mxu0 0.0
    %1910 = vmatpush.msra.mxu0 0.0
    %1911 = vmatpush.msra.mxu0 %v1881
    %1912 = vmatpush.msra.mxu0 %v1878
    %1913 = vmatpush.msra.mxu0 %v1875
    %1914 = vmatpush.msra.mxu0 %v1872
    %1915 = vmatpush.msra.mxu0 %v1869
    %1916 = vmatpush.msra.mxu0 %v1866
    %1917 = vmatpush.msra.mxu0 %v1863
    %1918 = vmatpush.msra.mxu0 %v1860
    %1919 = vmatmul.f32.gmra.mxu0 %v1787
    %v1920 = vpop.f32.mrf.mxu0
    %v1921 = vadd.f32 %v1901, %v1920
    %1922 = vdwg.mxu0
    %1923 = vmatpush.msra.mxu0 0.0
    %1924 = vmatpush.msra.mxu0 0.0
    %1925 = vmatpush.msra.mxu0 0.0
    %1926 = vmatpush.msra.mxu0 0.0
    %1927 = vmatpush.msra.mxu0 0.0
    %1928 = vmatpush.msra.mxu0 0.0
    %1929 = vmatpush.msra.mxu0 0.0
    %1930 = vmatpush.msra.mxu0 0.0
    %1931 = vmatpush.msra.mxu0 %v1701
    %1932 = vmatpush.msra.mxu0 %v1700
    %1933 = vmatpush.msra.mxu0 %v1699
    %1934 = vmatpush.msra.mxu0 %v1698
    %1935 = vmatpush.msra.mxu0 %v1697
    %1936 = vmatpush.msra.mxu0 %v1696
    %1937 = vmatpush.msra.mxu0 %v1695
    %1938 = vmatpush.msra.mxu0 %v1694
    %1939 = vmatmul.f32.gmra.mxu0 %v1810
    %v1940 = vpop.f32.mrf.mxu0
    %v1941 = vadd.f32 0.0, %v1940
    %1942 = vdwg.mxu0
    %v1943 = vadd.f32 %v1921, %v1941
    %v1944 = vadd.f32 %v1943, %v1836
    %vm1945 = vcmp.ge.f32.partialorder %v1944, 0.0
    %v1946 = vmul.f32 %v1944, 0.25
    %v1947 = vsel %vm1945, %v1944, %v1946
    %v1948 = vld [vmem:[#allocation15] sm:$0x3]
    %v1949 = vld [vmem:[#allocation13] sm:$0x7]
    %v1951 = vsel %vm300, %v1949, 0
    %v1954 = vsel %vm325, %v1841, 0
    %1956 = vmatpush.msra.mxu0 0.0
    %1957 = vmatpush.msra.mxu0 0.0
    %1958 = vmatpush.msra.mxu0 0.0
    %1959 = vmatpush.msra.mxu0 0.0
    %1960 = vmatpush.msra.mxu0 0.0
    %1961 = vmatpush.msra.mxu0 0.0
    %1962 = vmatpush.msra.mxu0 0.0
    %1963 = vmatpush.msra.mxu0 0.0
    %1964 = vmatpush.msra.mxu0 0.0
    %1965 = vmatpush.msra.mxu0 0.0
    %1966 = vmatpush.msra.mxu0 0.0
    %1967 = vmatpush.msra.mxu0 0.0
    %1968 = vmatpush.msra.mxu0 0.0
    %1969 = vmatpush.msra.mxu0 0.0
    %1970 = vmatpush.msra.mxu0 0.0
    %1971 = vmatpush.msra.mxu0 %v1954
    %1972 = vmatmul.f32.gmra.mxu0 %v1951
    %v1973 = vpop.f32.mrf.mxu0
    %v1974 = vadd.f32 0.0, %v1973
    %1975 = vdwg.mxu0
    %v1976 = vld [vmem:[%s22] sm:$0xff]
    %v1977 = vld [vmem:[%s22 + $0x8] sm:$0xff]
    %v1978 = vld [vmem:[%s22 + $0x10] sm:$0xff]
    %v1979 = vld [vmem:[%s22 + $0x18] sm:$0xff]
    %v1980 = vld [vmem:[%s22 + $0x20] sm:$0xff]
    %v1981 = vld [vmem:[%s22 + $0x28] sm:$0xff]
    %v1982 = vld [vmem:[%s22 + $0x30] sm:$0xff]
    %v1983 = vld [vmem:[%s22 + $0x38] sm:$0xff]
    %v1984 = vld [vmem:[%s22 + $0x40] sm:$0xff]
    %v1985 = vld [vmem:[%s22 + $0x48] sm:$0xff]
    %v1986 = vld [vmem:[%s22 + $0x50] sm:$0xff]
    %v1987 = vld [vmem:[%s22 + $0x58] sm:$0xff]
    %v1988 = vld [vmem:[%s22 + $0x60] sm:$0xff]
    %v1989 = vld [vmem:[%s22 + $0x68] sm:$0xff]
    %v1990 = vld [vmem:[%s22 + $0x70] sm:$0xff]
    %v1991 = vld [vmem:[%s22 + $0x78] sm:$0xff]
    %v1992 = vld [vmem:[%s22 + $0x80] sm:$0xff]
    %v1993 = vld [vmem:[%s22 + $0x88] sm:$0xff]
    %v1994 = vld [vmem:[%s22 + $0x90] sm:$0xff]
    %v1995 = vld [vmem:[%s22 + $0x98] sm:$0xff]
    %v1996 = vld [vmem:[%s22 + $0xa0] sm:$0xff]
    %v1997 = vld [vmem:[%s22 + $0xa8] sm:$0xff]
    %v1998 = vld [vmem:[%s22 + $0xb0] sm:$0xff]
    %v1999 = vld [vmem:[%s22 + $0xb8] sm:$0xff]
    %v2000 = vld [vmem:[%s22 + $0xc0] sm:$0xff]
    %v2001 = vld [vmem:[%s22 + $0xc8] sm:$0xff]
    %v2002 = vld [vmem:[%s22 + $0xd0] sm:$0xff]
    %v2003 = vld [vmem:[%s22 + $0xd8] sm:$0xff]
    %v2004 = vld [vmem:[%s22 + $0xe0] sm:$0xff]
    %v2005 = vld [vmem:[%s22 + $0xe8] sm:$0xff]
    %v2006 = vld [vmem:[%s22 + $0xf0] sm:$0xff]
    %v2007 = vld [vmem:[%s22 + $0xf8] sm:$0xff]
    %s2008 = scalar_lea.vmem %s22, 256
    %v2009 = vld [vmem:[%s2008] sm:$0xff]
    %v2010 = vld [vmem:[%s2008 + $0x8] sm:$0xff]
    %v2011 = vld [vmem:[%s2008 + $0x10] sm:$0xff]
    %v2012 = vld [vmem:[%s2008 + $0x18] sm:$0xff]
    %v2013 = vld [vmem:[%s2008 + $0x20] sm:$0xff]
    %v2014 = vld [vmem:[%s2008 + $0x28] sm:$0xff]
    %v2015 = vld [vmem:[%s2008 + $0x30] sm:$0xff]
    %v2016 = vld [vmem:[%s2008 + $0x38] sm:$0xff]
    %v2017 = vld [vmem:[%s2008 + $0x40] sm:$0xff]
    %v2018 = vld [vmem:[%s2008 + $0x48] sm:$0xff]
    %v2019 = vld [vmem:[%s2008 + $0x50] sm:$0xff]
    %v2020 = vld [vmem:[%s2008 + $0x58] sm:$0xff]
    %v2021 = vld [vmem:[%s2008 + $0x60] sm:$0xff]
    %v2022 = vld [vmem:[%s2008 + $0x68] sm:$0xff]
    %v2023 = vld [vmem:[%s2008 + $0x70] sm:$0xff]
    %v2024 = vld [vmem:[%s2008 + $0x78] sm:$0xff]
    %v2025 = vld [vmem:[%s2008 + $0x80] sm:$0xff]
    %v2026 = vld [vmem:[%s2008 + $0x88] sm:$0xff]
    %v2027 = vld [vmem:[%s2008 + $0x90] sm:$0xff]
    %v2028 = vld [vmem:[%s2008 + $0x98] sm:$0xff]
    %v2029 = vld [vmem:[%s2008 + $0xa0] sm:$0xff]
    %v2030 = vld [vmem:[%s2008 + $0xa8] sm:$0xff]
    %v2031 = vld [vmem:[%s2008 + $0xb0] sm:$0xff]
    %v2032 = vld [vmem:[%s2008 + $0xb8] sm:$0xff]
    %v2033 = vld [vmem:[%s2008 + $0xc0] sm:$0xff]
    %v2034 = vld [vmem:[%s2008 + $0xc8] sm:$0xff]
    %v2035 = vld [vmem:[%s2008 + $0xd0] sm:$0xff]
    %v2036 = vld [vmem:[%s2008 + $0xd8] sm:$0xff]
    %v2037 = vld [vmem:[%s2008 + $0xe0] sm:$0xff]
    %v2038 = vld [vmem:[%s2008 + $0xe8] sm:$0xff]
    %v2039 = vld [vmem:[%s2008 + $0xf0] sm:$0xff]
    %v2040 = vld [vmem:[%s2008 + $0xf8] sm:$0xff]
    %2041 = vmatpush.msra.mxu0 %v2039
    %2042 = vmatpush.msra.mxu0 %v2037
    %2043 = vmatpush.msra.mxu0 %v2035
    %2044 = vmatpush.msra.mxu0 %v2033
    %2045 = vmatpush.msra.mxu0 %v2031
    %2046 = vmatpush.msra.mxu0 %v2029
    %2047 = vmatpush.msra.mxu0 %v2027
    %2048 = vmatpush.msra.mxu0 %v2025
    %2049 = vmatpush.msra.mxu0 %v2023
    %2050 = vmatpush.msra.mxu0 %v2021
    %2051 = vmatpush.msra.mxu0 %v2019
    %2052 = vmatpush.msra.mxu0 %v2017
    %2053 = vmatpush.msra.mxu0 %v2015
    %2054 = vmatpush.msra.mxu0 %v2013
    %2055 = vmatpush.msra.mxu0 %v2011
    %2056 = vmatpush.msra.mxu0 %v2009
    %2057 = vmatmul.f32.gmra.mxu0 %v1841
    %v2058 = vpop.f32.mrf.mxu0
    %v2059 = vadd.f32 0.0, %v2058
    %2060 = vdwg.mxu0
    %2061 = vmatpush.msra.mxu0 %v2040
    %2062 = vmatpush.msra.mxu0 %v2038
    %2063 = vmatpush.msra.mxu0 %v2036
    %2064 = vmatpush.msra.mxu0 %v2034
    %2065 = vmatpush.msra.mxu0 %v2032
    %2066 = vmatpush.msra.mxu0 %v2030
    %2067 = vmatpush.msra.mxu0 %v2028
    %2068 = vmatpush.msra.mxu0 %v2026
    %2069 = vmatpush.msra.mxu0 %v2024
    %2070 = vmatpush.msra.mxu0 %v2022
    %2071 = vmatpush.msra.mxu0 %v2020
    %2072 = vmatpush.msra.mxu0 %v2018
    %2073 = vmatpush.msra.mxu0 %v2016
    %2074 = vmatpush.msra.mxu0 %v2014
    %2075 = vmatpush.msra.mxu0 %v2012
    %2076 = vmatpush.msra.mxu0 %v2010
    %2077 = vmatmul.f32.gmra.mxu0 %v1841
    %v2078 = vpop.f32.mrf.mxu0
    %v2079 = vadd.f32 0.0, %v2078
    %2080 = vdwg.mxu0
    %2081 = vmatpush.msra.mxu0 %v2006
    %2082 = vmatpush.msra.mxu0 %v2004
    %2083 = vmatpush.msra.mxu0 %v2002
    %2084 = vmatpush.msra.mxu0 %v2000
    %2085 = vmatpush.msra.mxu0 %v1998
    %2086 = vmatpush.msra.mxu0 %v1996
    %2087 = vmatpush.msra.mxu0 %v1994
    %2088 = vmatpush.msra.mxu0 %v1992
    %2089 = vmatpush.msra.mxu0 %v1990
    %2090 = vmatpush.msra.mxu0 %v1988
    %2091 = vmatpush.msra.mxu0 %v1986
    %2092 = vmatpush.msra.mxu0 %v1984
    %2093 = vmatpush.msra.mxu0 %v1982
    %2094 = vmatpush.msra.mxu0 %v1980
    %2095 = vmatpush.msra.mxu0 %v1978
    %2096 = vmatpush.msra.mxu0 %v1976
    %2097 = vmatmul.f32.gmra.mxu0 %v1974
    %v2098 = vpop.f32.mrf.mxu0
    %v2099 = vadd.f32 %v2059, %v2098
    %2100 = vdwg.mxu0
    %2101 = vmatpush.msra.mxu0 %v2007
    %2102 = vmatpush.msra.mxu0 %v2005
    %2103 = vmatpush.msra.mxu0 %v2003
    %2104 = vmatpush.msra.mxu0 %v2001
    %2105 = vmatpush.msra.mxu0 %v1999
    %2106 = vmatpush.msra.mxu0 %v1997
    %2107 = vmatpush.msra.mxu0 %v1995
    %2108 = vmatpush.msra.mxu0 %v1993
    %2109 = vmatpush.msra.mxu0 %v1991
    %2110 = vmatpush.msra.mxu0 %v1989
    %2111 = vmatpush.msra.mxu0 %v1987
    %2112 = vmatpush.msra.mxu0 %v1985
    %2113 = vmatpush.msra.mxu0 %v1983
    %2114 = vmatpush.msra.mxu0 %v1981
    %2115 = vmatpush.msra.mxu0 %v1979
    %2116 = vmatpush.msra.mxu0 %v1977
    %2117 = vmatmul.f32.gmra.mxu0 %v1974
    %v2118 = vpop.f32.mrf.mxu0
    %v2119 = vadd.f32 %v2079, %v2118
    %2120 = vdwg.mxu0
    %s2121 = scalar_lea.vmem [#allocation13], 8
    %v2122 = vld [vmem:[%s2121] sm:$0x7]
    %v2124 = vsel %vm300, %v2122, 0
    %2126 = vmatpush.msra.mxu0 0.0
    %2127 = vmatpush.msra.mxu0 0.0
    %2128 = vmatpush.msra.mxu0 0.0
    %2129 = vmatpush.msra.mxu0 0.0
    %2130 = vmatpush.msra.mxu0 0.0
    %2131 = vmatpush.msra.mxu0 0.0
    %2132 = vmatpush.msra.mxu0 0.0
    %2133 = vmatpush.msra.mxu0 0.0
    %2134 = vmatpush.msra.mxu0 0.0
    %2135 = vmatpush.msra.mxu0 0.0
    %2136 = vmatpush.msra.mxu0 0.0
    %2137 = vmatpush.msra.mxu0 0.0
    %2138 = vmatpush.msra.mxu0 0.0
    %2139 = vmatpush.msra.mxu0 0.0
    %2140 = vmatpush.msra.mxu0 0.0
    %2141 = vmatpush.msra.mxu0 %v1954
    %2142 = vmatmul.f32.gmra.mxu0 %v2124
    %v2143 = vpop.f32.mrf.mxu0
    %v2144 = vadd.f32 0.0, %v2143
    %2145 = vdwg.mxu0
    %s2146 = scalar_lea.vmem %s22, 512
    %v2147 = vld [vmem:[%s2146] sm:$0xff]
    %v2148 = vld [vmem:[%s2146 + $0x8] sm:$0xff]
    %v2149 = vld [vmem:[%s2146 + $0x10] sm:$0xff]
    %v2150 = vld [vmem:[%s2146 + $0x18] sm:$0xff]
    %v2151 = vld [vmem:[%s2146 + $0x20] sm:$0xff]
    %v2152 = vld [vmem:[%s2146 + $0x28] sm:$0xff]
    %v2153 = vld [vmem:[%s2146 + $0x30] sm:$0xff]
    %v2154 = vld [vmem:[%s2146 + $0x38] sm:$0xff]
    %v2155 = vld [vmem:[%s2146 + $0x40] sm:$0xff]
    %v2156 = vld [vmem:[%s2146 + $0x48] sm:$0xff]
    %v2157 = vld [vmem:[%s2146 + $0x50] sm:$0xff]
    %v2158 = vld [vmem:[%s2146 + $0x58] sm:$0xff]
    %v2159 = vld [vmem:[%s2146 + $0x60] sm:$0xff]
    %v2160 = vld [vmem:[%s2146 + $0x68] sm:$0xff]
    %v2161 = vld [vmem:[%s2146 + $0x70] sm:$0xff]
    %v2162 = vld [vmem:[%s2146 + $0x78] sm:$0xff]
    %v2163 = vld [vmem:[%s2146 + $0x80] sm:$0xff]
    %v2164 = vld [vmem:[%s2146 + $0x88] sm:$0xff]
    %v2165 = vld [vmem:[%s2146 + $0x90] sm:$0xff]
    %v2166 = vld [vmem:[%s2146 + $0x98] sm:$0xff]
    %v2167 = vld [vmem:[%s2146 + $0xa0] sm:$0xff]
    %v2168 = vld [vmem:[%s2146 + $0xa8] sm:$0xff]
    %v2169 = vld [vmem:[%s2146 + $0xb0] sm:$0xff]
    %v2170 = vld [vmem:[%s2146 + $0xb8] sm:$0xff]
    %v2171 = vld [vmem:[%s2146 + $0xc0] sm:$0xff]
    %v2172 = vld [vmem:[%s2146 + $0xc8] sm:$0xff]
    %v2173 = vld [vmem:[%s2146 + $0xd0] sm:$0xff]
    %v2174 = vld [vmem:[%s2146 + $0xd8] sm:$0xff]
    %v2175 = vld [vmem:[%s2146 + $0xe0] sm:$0xff]
    %v2176 = vld [vmem:[%s2146 + $0xe8] sm:$0xff]
    %v2177 = vld [vmem:[%s2146 + $0xf0] sm:$0xff]
    %v2178 = vld [vmem:[%s2146 + $0xf8] sm:$0xff]
    %2179 = vmatpush.msra.mxu0 %v2177
    %2180 = vmatpush.msra.mxu0 %v2175
    %2181 = vmatpush.msra.mxu0 %v2173
    %2182 = vmatpush.msra.mxu0 %v2171
    %2183 = vmatpush.msra.mxu0 %v2169
    %2184 = vmatpush.msra.mxu0 %v2167
    %2185 = vmatpush.msra.mxu0 %v2165
    %2186 = vmatpush.msra.mxu0 %v2163
    %2187 = vmatpush.msra.mxu0 %v2161
    %2188 = vmatpush.msra.mxu0 %v2159
    %2189 = vmatpush.msra.mxu0 %v2157
    %2190 = vmatpush.msra.mxu0 %v2155
    %2191 = vmatpush.msra.mxu0 %v2153
    %2192 = vmatpush.msra.mxu0 %v2151
    %2193 = vmatpush.msra.mxu0 %v2149
    %2194 = vmatpush.msra.mxu0 %v2147
    %2195 = vmatmul.f32.gmra.mxu0 %v2144
    %v2196 = vpop.f32.mrf.mxu0
    %v2197 = vadd.f32 0.0, %v2196
    %2198 = vdwg.mxu0
    %2199 = vmatpush.msra.mxu0 %v2178
    %2200 = vmatpush.msra.mxu0 %v2176
    %2201 = vmatpush.msra.mxu0 %v2174
    %2202 = vmatpush.msra.mxu0 %v2172
    %2203 = vmatpush.msra.mxu0 %v2170
    %2204 = vmatpush.msra.mxu0 %v2168
    %2205 = vmatpush.msra.mxu0 %v2166
    %2206 = vmatpush.msra.mxu0 %v2164
    %2207 = vmatpush.msra.mxu0 %v2162
    %2208 = vmatpush.msra.mxu0 %v2160
    %2209 = vmatpush.msra.mxu0 %v2158
    %2210 = vmatpush.msra.mxu0 %v2156
    %2211 = vmatpush.msra.mxu0 %v2154
    %2212 = vmatpush.msra.mxu0 %v2152
    %2213 = vmatpush.msra.mxu0 %v2150
    %2214 = vmatpush.msra.mxu0 %v2148
    %2215 = vmatmul.f32.gmra.mxu0 %v2144
    %v2216 = vpop.f32.mrf.mxu0
    %v2217 = vadd.f32 0.0, %v2216
    %2218 = vdwg.mxu0
    %v2219 = vadd.f32 %v2099, %v2197
    %v2220 = vadd.f32 %v2119, %v2217
    %v2222 = vperm.slane %v1948, 0
    %v2223 = vperm.slane %v1948, 1
    %v2226 = vadd.f32 %v2219, %v2222
    %v2227 = vadd.f32 %v2220, %v2223
    %vm2228 = vcmp.ge.f32.partialorder %v2226, 0.0
    %vm2229 = vcmp.ge.f32.partialorder %v2227, 0.0
    %v2230 = vmul.f32 %v2226, 0.25
    %v2231 = vmul.f32 %v2227, 0.25
    %v2232 = vsel %vm2228, %v2226, %v2230
    %v2233 = vsel %vm2229, %v2227, %v2231
    %v2235 = vsel %vm325, %v1947, 0
    %2237 = vmatpush.msra.mxu0 0.0
    %2238 = vmatpush.msra.mxu0 0.0
    %2239 = vmatpush.msra.mxu0 0.0
    %2240 = vmatpush.msra.mxu0 0.0
    %2241 = vmatpush.msra.mxu0 0.0
    %2242 = vmatpush.msra.mxu0 0.0
    %2243 = vmatpush.msra.mxu0 0.0
    %2244 = vmatpush.msra.mxu0 0.0
    %2245 = vmatpush.msra.mxu0 0.0
    %2246 = vmatpush.msra.mxu0 0.0
    %2247 = vmatpush.msra.mxu0 0.0
    %2248 = vmatpush.msra.mxu0 0.0
    %2249 = vmatpush.msra.mxu0 0.0
    %2250 = vmatpush.msra.mxu0 0.0
    %2251 = vmatpush.msra.mxu0 0.0
    %2252 = vmatpush.msra.mxu0 %v2235
    %2253 = vmatmul.f32.gmra.mxu0 %v1951
    %v2254 = vpop.f32.mrf.mxu0
    %v2255 = vadd.f32 0.0, %v2254
    %2256 = vdwg.mxu0
    %2257 = vmatpush.msra.mxu0 %v2039
    %2258 = vmatpush.msra.mxu0 %v2037
    %2259 = vmatpush.msra.mxu0 %v2035
    %2260 = vmatpush.msra.mxu0 %v2033
    %2261 = vmatpush.msra.mxu0 %v2031
    %2262 = vmatpush.msra.mxu0 %v2029
    %2263 = vmatpush.msra.mxu0 %v2027
    %2264 = vmatpush.msra.mxu0 %v2025
    %2265 = vmatpush.msra.mxu0 %v2023
    %2266 = vmatpush.msra.mxu0 %v2021
    %2267 = vmatpush.msra.mxu0 %v2019
    %2268 = vmatpush.msra.mxu0 %v2017
    %2269 = vmatpush.msra.mxu0 %v2015
    %2270 = vmatpush.msra.mxu0 %v2013
    %2271 = vmatpush.msra.mxu0 %v2011
    %2272 = vmatpush.msra.mxu0 %v2009
    %2273 = vmatmul.f32.gmra.mxu0 %v1947
    %v2274 = vpop.f32.mrf.mxu0
    %v2275 = vadd.f32 0.0, %v2274
    %2276 = vdwg.mxu0
    %2277 = vmatpush.msra.mxu0 %v2040
    %2278 = vmatpush.msra.mxu0 %v2038
    %2279 = vmatpush.msra.mxu0 %v2036
    %2280 = vmatpush.msra.mxu0 %v2034
    %2281 = vmatpush.msra.mxu0 %v2032
    %2282 = vmatpush.msra.mxu0 %v2030
    %2283 = vmatpush.msra.mxu0 %v2028
    %2284 = vmatpush.msra.mxu0 %v2026
    %2285 = vmatpush.msra.mxu0 %v2024
    %2286 = vmatpush.msra.mxu0 %v2022
    %2287 = vmatpush.msra.mxu0 %v2020
    %2288 = vmatpush.msra.mxu0 %v2018
    %2289 = vmatpush.msra.mxu0 %v2016
    %2290 = vmatpush.msra.mxu0 %v2014
    %2291 = vmatpush.msra.mxu0 %v2012
    %2292 = vmatpush.msra.mxu0 %v2010
    %2293 = vmatmul.f32.gmra.mxu0 %v1947
    %v2294 = vpop.f32.mrf.mxu0
    %v2295 = vadd.f32 0.0, %v2294
    %2296 = vdwg.mxu0
    %2297 = vmatpush.msra.mxu0 %v2006
    %2298 = vmatpush.msra.mxu0 %v2004
    %2299 = vmatpush.msra.mxu0 %v2002
    %2300 = vmatpush.msra.mxu0 %v2000
    %2301 = vmatpush.msra.mxu0 %v1998
    %2302 = vmatpush.msra.mxu0 %v1996
    %2303 = vmatpush.msra.mxu0 %v1994
    %2304 = vmatpush.msra.mxu0 %v1992
    %2305 = vmatpush.msra.mxu0 %v1990
    %2306 = vmatpush.msra.mxu0 %v1988
    %2307 = vmatpush.msra.mxu0 %v1986
    %2308 = vmatpush.msra.mxu0 %v1984
    %2309 = vmatpush.msra.mxu0 %v1982
    %2310 = vmatpush.msra.mxu0 %v1980
    %2311 = vmatpush.msra.mxu0 %v1978
    %2312 = vmatpush.msra.mxu0 %v1976
    %2313 = vmatmul.f32.gmra.mxu0 %v2255
    %v2314 = vpop.f32.mrf.mxu0
    %v2315 = vadd.f32 %v2275, %v2314
    %2316 = vdwg.mxu0
    %2317 = vmatpush.msra.mxu0 %v2007
    %2318 = vmatpush.msra.mxu0 %v2005
    %2319 = vmatpush.msra.mxu0 %v2003
    %2320 = vmatpush.msra.mxu0 %v2001
    %2321 = vmatpush.msra.mxu0 %v1999
    %2322 = vmatpush.msra.mxu0 %v1997
    %2323 = vmatpush.msra.mxu0 %v1995
    %2324 = vmatpush.msra.mxu0 %v1993
    %2325 = vmatpush.msra.mxu0 %v1991
    %2326 = vmatpush.msra.mxu0 %v1989
    %2327 = vmatpush.msra.mxu0 %v1987
    %2328 = vmatpush.msra.mxu0 %v1985
    %2329 = vmatpush.msra.mxu0 %v1983
    %2330 = vmatpush.msra.mxu0 %v1981
    %2331 = vmatpush.msra.mxu0 %v1979
    %2332 = vmatpush.msra.mxu0 %v1977
    %2333 = vmatmul.f32.gmra.mxu0 %v2255
    %v2334 = vpop.f32.mrf.mxu0
    %v2335 = vadd.f32 %v2295, %v2334
    %2336 = vdwg.mxu0
    %2337 = vmatpush.msra.mxu0 0.0
    %2338 = vmatpush.msra.mxu0 0.0
    %2339 = vmatpush.msra.mxu0 0.0
    %2340 = vmatpush.msra.mxu0 0.0
    %2341 = vmatpush.msra.mxu0 0.0
    %2342 = vmatpush.msra.mxu0 0.0
    %2343 = vmatpush.msra.mxu0 0.0
    %2344 = vmatpush.msra.mxu0 0.0
    %2345 = vmatpush.msra.mxu0 0.0
    %2346 = vmatpush.msra.mxu0 0.0
    %2347 = vmatpush.msra.mxu0 0.0
    %2348 = vmatpush.msra.mxu0 0.0
    %2349 = vmatpush.msra.mxu0 0.0
    %2350 = vmatpush.msra.mxu0 0.0
    %2351 = vmatpush.msra.mxu0 0.0
    %2352 = vmatpush.msra.mxu0 %v2235
    %2353 = vmatmul.f32.gmra.mxu0 %v2124
    %v2354 = vpop.f32.mrf.mxu0
    %v2355 = vadd.f32 0.0, %v2354
    %2356 = vdwg.mxu0
    %2357 = vmatpush.msra.mxu0 %v2177
    %2358 = vmatpush.msra.mxu0 %v2175
    %2359 = vmatpush.msra.mxu0 %v2173
    %2360 = vmatpush.msra.mxu0 %v2171
    %2361 = vmatpush.msra.mxu0 %v2169
    %2362 = vmatpush.msra.mxu0 %v2167
    %2363 = vmatpush.msra.mxu0 %v2165
    %2364 = vmatpush.msra.mxu0 %v2163
    %2365 = vmatpush.msra.mxu0 %v2161
    %2366 = vmatpush.msra.mxu0 %v2159
    %2367 = vmatpush.msra.mxu0 %v2157
    %2368 = vmatpush.msra.mxu0 %v2155
    %2369 = vmatpush.msra.mxu0 %v2153
    %2370 = vmatpush.msra.mxu0 %v2151
    %2371 = vmatpush.msra.mxu0 %v2149
    %2372 = vmatpush.msra.mxu0 %v2147
    %2373 = vmatmul.f32.gmra.mxu0 %v2355
    %v2374 = vpop.f32.mrf.mxu0
    %v2375 = vadd.f32 0.0, %v2374
    %2376 = vdwg.mxu0
    %2377 = vmatpush.msra.mxu0 %v2178
    %2378 = vmatpush.msra.mxu0 %v2176
    %2379 = vmatpush.msra.mxu0 %v2174
    %2380 = vmatpush.msra.mxu0 %v2172
    %2381 = vmatpush.msra.mxu0 %v2170
    %2382 = vmatpush.msra.mxu0 %v2168
    %2383 = vmatpush.msra.mxu0 %v2166
    %2384 = vmatpush.msra.mxu0 %v2164
    %2385 = vmatpush.msra.mxu0 %v2162
    %2386 = vmatpush.msra.mxu0 %v2160
    %2387 = vmatpush.msra.mxu0 %v2158
    %2388 = vmatpush.msra.mxu0 %v2156
    %2389 = vmatpush.msra.mxu0 %v2154
    %2390 = vmatpush.msra.mxu0 %v2152
    %2391 = vmatpush.msra.mxu0 %v2150
    %2392 = vmatpush.msra.mxu0 %v2148
    %2393 = vmatmul.f32.gmra.mxu0 %v2355
    %v2394 = vpop.f32.mrf.mxu0
    %v2395 = vadd.f32 0.0, %v2394
    %2396 = vdwg.mxu0
    %v2397 = vadd.f32 %v2315, %v2375
    %v2398 = vadd.f32 %v2335, %v2395
    %v2399 = vadd.f32 %v2397, %v2222
    %v2400 = vadd.f32 %v2398, %v2223
    %vm2401 = vcmp.ge.f32.partialorder %v2399, 0.0
    %vm2402 = vcmp.ge.f32.partialorder %v2400, 0.0
    %v2403 = vmul.f32 %v2399, 0.25
    %v2404 = vmul.f32 %v2400, 0.25
    %v2405 = vsel %vm2401, %v2399, %v2403
    %v2406 = vsel %vm2402, %v2400, %v2404
    %v2407 = vld [vmem:[#allocation16] sm:$0x3]
    %v2409 = vsel %vm325, %v2232, 0
    %v2412 = vsel %vm325, %v2233, 0
    %2414 = vmatpush.msra.mxu0 0.0
    %2415 = vmatpush.msra.mxu0 0.0
    %2416 = vmatpush.msra.mxu0 0.0
    %2417 = vmatpush.msra.mxu0 0.0
    %2418 = vmatpush.msra.mxu0 0.0
    %2419 = vmatpush.msra.mxu0 0.0
    %2420 = vmatpush.msra.mxu0 0.0
    %2421 = vmatpush.msra.mxu0 0.0
    %2422 = vmatpush.msra.mxu0 0.0
    %2423 = vmatpush.msra.mxu0 0.0
    %2424 = vmatpush.msra.mxu0 0.0
    %2425 = vmatpush.msra.mxu0 0.0
    %2426 = vmatpush.msra.mxu0 0.0
    %2427 = vmatpush.msra.mxu0 0.0
    %2428 = vmatpush.msra.mxu0 0.0
    %2429 = vmatpush.msra.mxu0 %v2409
    %2430 = vmatmul.f32.gmra.mxu0 %v1951
    %v2431 = vpop.f32.mrf.mxu0
    %v2432 = vadd.f32 0.0, %v2431
    %2433 = vdwg.mxu0
    %2434 = vmatpush.msra.mxu0 0.0
    %2435 = vmatpush.msra.mxu0 0.0
    %2436 = vmatpush.msra.mxu0 0.0
    %2437 = vmatpush.msra.mxu0 0.0
    %2438 = vmatpush.msra.mxu0 0.0
    %2439 = vmatpush.msra.mxu0 0.0
    %2440 = vmatpush.msra.mxu0 0.0
    %2441 = vmatpush.msra.mxu0 0.0
    %2442 = vmatpush.msra.mxu0 0.0
    %2443 = vmatpush.msra.mxu0 0.0
    %2444 = vmatpush.msra.mxu0 0.0
    %2445 = vmatpush.msra.mxu0 0.0
    %2446 = vmatpush.msra.mxu0 0.0
    %2447 = vmatpush.msra.mxu0 0.0
    %2448 = vmatpush.msra.mxu0 0.0
    %2449 = vmatpush.msra.mxu0 %v2412
    %2450 = vmatmul.f32.gmra.mxu0 %v1951
    %v2451 = vpop.f32.mrf.mxu0
    %v2452 = vadd.f32 0.0, %v2451
    %2453 = vdwg.mxu0
    %v2454 = vld [vmem:[%s24] sm:$0xff]
    %v2455 = vld [vmem:[%s24 + $0x8] sm:$0xff]
    %v2456 = vld [vmem:[%s24 + $0x10] sm:$0xff]
    %v2457 = vld [vmem:[%s24 + $0x18] sm:$0xff]
    %v2458 = vld [vmem:[%s24 + $0x20] sm:$0xff]
    %v2459 = vld [vmem:[%s24 + $0x28] sm:$0xff]
    %v2460 = vld [vmem:[%s24 + $0x30] sm:$0xff]
    %v2461 = vld [vmem:[%s24 + $0x38] sm:$0xff]
    %v2462 = vld [vmem:[%s24 + $0x40] sm:$0xff]
    %v2463 = vld [vmem:[%s24 + $0x48] sm:$0xff]
    %v2464 = vld [vmem:[%s24 + $0x50] sm:$0xff]
    %v2465 = vld [vmem:[%s24 + $0x58] sm:$0xff]
    %v2466 = vld [vmem:[%s24 + $0x60] sm:$0xff]
    %v2467 = vld [vmem:[%s24 + $0x68] sm:$0xff]
    %v2468 = vld [vmem:[%s24 + $0x70] sm:$0xff]
    %v2469 = vld [vmem:[%s24 + $0x78] sm:$0xff]
    %v2470 = vld [vmem:[%s24 + $0x80] sm:$0xff]
    %v2471 = vld [vmem:[%s24 + $0x88] sm:$0xff]
    %v2472 = vld [vmem:[%s24 + $0x90] sm:$0xff]
    %v2473 = vld [vmem:[%s24 + $0x98] sm:$0xff]
    %v2474 = vld [vmem:[%s24 + $0xa0] sm:$0xff]
    %v2475 = vld [vmem:[%s24 + $0xa8] sm:$0xff]
    %v2476 = vld [vmem:[%s24 + $0xb0] sm:$0xff]
    %v2477 = vld [vmem:[%s24 + $0xb8] sm:$0xff]
    %v2478 = vld [vmem:[%s24 + $0xc0] sm:$0xff]
    %v2479 = vld [vmem:[%s24 + $0xc8] sm:$0xff]
    %v2480 = vld [vmem:[%s24 + $0xd0] sm:$0xff]
    %v2481 = vld [vmem:[%s24 + $0xd8] sm:$0xff]
    %v2482 = vld [vmem:[%s24 + $0xe0] sm:$0xff]
    %v2483 = vld [vmem:[%s24 + $0xe8] sm:$0xff]
    %v2484 = vld [vmem:[%s24 + $0xf0] sm:$0xff]
    %v2485 = vld [vmem:[%s24 + $0xf8] sm:$0xff]
    %v2486 = vld [vmem:[%s24 + $0x100] sm:$0xff]
    %v2487 = vld [vmem:[%s24 + $0x108] sm:$0xff]
    %v2488 = vld [vmem:[%s24 + $0x110] sm:$0xff]
    %v2489 = vld [vmem:[%s24 + $0x118] sm:$0xff]
    %v2490 = vld [vmem:[%s24 + $0x120] sm:$0xff]
    %v2491 = vld [vmem:[%s24 + $0x128] sm:$0xff]
    %v2492 = vld [vmem:[%s24 + $0x130] sm:$0xff]
    %v2493 = vld [vmem:[%s24 + $0x138] sm:$0xff]
    %s2494 = scalar_lea.vmem %s24, 320
    %v2495 = vld [vmem:[%s2494] sm:$0xff]
    %v2496 = vld [vmem:[%s2494 + $0x8] sm:$0xff]
    %v2497 = vld [vmem:[%s2494 + $0x10] sm:$0xff]
    %v2498 = vld [vmem:[%s2494 + $0x18] sm:$0xff]
    %v2499 = vld [vmem:[%s2494 + $0x20] sm:$0xff]
    %v2500 = vld [vmem:[%s2494 + $0x28] sm:$0xff]
    %v2501 = vld [vmem:[%s2494 + $0x30] sm:$0xff]
    %v2502 = vld [vmem:[%s2494 + $0x38] sm:$0xff]
    %v2503 = vld [vmem:[%s2494 + $0x40] sm:$0xff]
    %v2504 = vld [vmem:[%s2494 + $0x48] sm:$0xff]
    %v2505 = vld [vmem:[%s2494 + $0x50] sm:$0xff]
    %v2506 = vld [vmem:[%s2494 + $0x58] sm:$0xff]
    %v2507 = vld [vmem:[%s2494 + $0x60] sm:$0xff]
    %v2508 = vld [vmem:[%s2494 + $0x68] sm:$0xff]
    %v2509 = vld [vmem:[%s2494 + $0x70] sm:$0xff]
    %v2510 = vld [vmem:[%s2494 + $0x78] sm:$0xff]
    %v2511 = vld [vmem:[%s2494 + $0x80] sm:$0xff]
    %v2512 = vld [vmem:[%s2494 + $0x88] sm:$0xff]
    %v2513 = vld [vmem:[%s2494 + $0x90] sm:$0xff]
    %v2514 = vld [vmem:[%s2494 + $0x98] sm:$0xff]
    %v2515 = vld [vmem:[%s2494 + $0xa0] sm:$0xff]
    %v2516 = vld [vmem:[%s2494 + $0xa8] sm:$0xff]
    %v2517 = vld [vmem:[%s2494 + $0xb0] sm:$0xff]
    %v2518 = vld [vmem:[%s2494 + $0xb8] sm:$0xff]
    %v2519 = vld [vmem:[%s2494 + $0xc0] sm:$0xff]
    %v2520 = vld [vmem:[%s2494 + $0xc8] sm:$0xff]
    %v2521 = vld [vmem:[%s2494 + $0xd0] sm:$0xff]
    %v2522 = vld [vmem:[%s2494 + $0xd8] sm:$0xff]
    %v2523 = vld [vmem:[%s2494 + $0xe0] sm:$0xff]
    %v2524 = vld [vmem:[%s2494 + $0xe8] sm:$0xff]
    %v2525 = vld [vmem:[%s2494 + $0xf0] sm:$0xff]
    %v2526 = vld [vmem:[%s2494 + $0xf8] sm:$0xff]
    %v2527 = vld [vmem:[%s2494 + $0x100] sm:$0xff]
    %v2528 = vld [vmem:[%s2494 + $0x108] sm:$0xff]
    %v2529 = vld [vmem:[%s2494 + $0x110] sm:$0xff]
    %v2530 = vld [vmem:[%s2494 + $0x118] sm:$0xff]
    %v2531 = vld [vmem:[%s2494 + $0x120] sm:$0xff]
    %v2532 = vld [vmem:[%s2494 + $0x128] sm:$0xff]
    %v2533 = vld [vmem:[%s2494 + $0x130] sm:$0xff]
    %v2534 = vld [vmem:[%s2494 + $0x138] sm:$0xff]
    %v2535 = vsel %vm1299, %v2233, 0
    %2537 = vmatpush.msra.mxu0 %v2525
    %2538 = vmatpush.msra.mxu0 %v2523
    %2539 = vmatpush.msra.mxu0 %v2521
    %2540 = vmatpush.msra.mxu0 %v2519
    %2541 = vmatpush.msra.mxu0 %v2517
    %2542 = vmatpush.msra.mxu0 %v2515
    %2543 = vmatpush.msra.mxu0 %v2513
    %2544 = vmatpush.msra.mxu0 %v2511
    %2545 = vmatpush.msra.mxu0 %v2509
    %2546 = vmatpush.msra.mxu0 %v2507
    %2547 = vmatpush.msra.mxu0 %v2505
    %2548 = vmatpush.msra.mxu0 %v2503
    %2549 = vmatpush.msra.mxu0 %v2501
    %2550 = vmatpush.msra.mxu0 %v2499
    %2551 = vmatpush.msra.mxu0 %v2497
    %2552 = vmatpush.msra.mxu0 %v2495
    %2553 = vmatmul.f32.gmra.mxu0 %v2232
    %v2554 = vpop.f32.mrf.mxu0
    %v2555 = vadd.f32 0.0, %v2554
    %2556 = vdwg.mxu0
    %2557 = vmatpush.msra.mxu0 0.0
    %2558 = vmatpush.msra.mxu0 0.0
    %2559 = vmatpush.msra.mxu0 0.0
    %2560 = vmatpush.msra.mxu0 0.0
    %2561 = vmatpush.msra.mxu0 0.0
    %2562 = vmatpush.msra.mxu0 0.0
    %2563 = vmatpush.msra.mxu0 0.0
    %2564 = vmatpush.msra.mxu0 0.0
    %2565 = vmatpush.msra.mxu0 0.0
    %2566 = vmatpush.msra.mxu0 0.0
    %2567 = vmatpush.msra.mxu0 0.0
    %2568 = vmatpush.msra.mxu0 0.0
    %2569 = vmatpush.msra.mxu0 %v2533
    %2570 = vmatpush.msra.mxu0 %v2531
    %2571 = vmatpush.msra.mxu0 %v2529
    %2572 = vmatpush.msra.mxu0 %v2527
    %2573 = vmatmul.f32.gmra.mxu0 %v2535
    %v2574 = vpop.f32.mrf.mxu0
    %v2575 = vadd.f32 %v2555, %v2574
    %2576 = vdwg.mxu0
    %2577 = vmatpush.msra.mxu0 %v2526
    %2578 = vmatpush.msra.mxu0 %v2524
    %2579 = vmatpush.msra.mxu0 %v2522
    %2580 = vmatpush.msra.mxu0 %v2520
    %2581 = vmatpush.msra.mxu0 %v2518
    %2582 = vmatpush.msra.mxu0 %v2516
    %2583 = vmatpush.msra.mxu0 %v2514
    %2584 = vmatpush.msra.mxu0 %v2512
    %2585 = vmatpush.msra.mxu0 %v2510
    %2586 = vmatpush.msra.mxu0 %v2508
    %2587 = vmatpush.msra.mxu0 %v2506
    %2588 = vmatpush.msra.mxu0 %v2504
    %2589 = vmatpush.msra.mxu0 %v2502
    %2590 = vmatpush.msra.mxu0 %v2500
    %2591 = vmatpush.msra.mxu0 %v2498
    %2592 = vmatpush.msra.mxu0 %v2496
    %2593 = vmatmul.f32.gmra.mxu0 %v2232
    %v2594 = vpop.f32.mrf.mxu0
    %v2595 = vadd.f32 0.0, %v2594
    %2596 = vdwg.mxu0
    %2597 = vmatpush.msra.mxu0 0.0
    %2598 = vmatpush.msra.mxu0 0.0
    %2599 = vmatpush.msra.mxu0 0.0
    %2600 = vmatpush.msra.mxu0 0.0
    %2601 = vmatpush.msra.mxu0 0.0
    %2602 = vmatpush.msra.mxu0 0.0
    %2603 = vmatpush.msra.mxu0 0.0
    %2604 = vmatpush.msra.mxu0 0.0
    %2605 = vmatpush.msra.mxu0 0.0
    %2606 = vmatpush.msra.mxu0 0.0
    %2607 = vmatpush.msra.mxu0 0.0
    %2608 = vmatpush.msra.mxu0 0.0
    %2609 = vmatpush.msra.mxu0 %v2534
    %2610 = vmatpush.msra.mxu0 %v2532
    %2611 = vmatpush.msra.mxu0 %v2530
    %2612 = vmatpush.msra.mxu0 %v2528
    %2613 = vmatmul.f32.gmra.mxu0 %v2535
    %v2614 = vpop.f32.mrf.mxu0
    %v2615 = vadd.f32 %v2595, %v2614
    %2616 = vdwg.mxu0
    %v2618 = vsel %vm1299, %v2452, 0
    %2620 = vmatpush.msra.mxu0 %v2484
    %2621 = vmatpush.msra.mxu0 %v2482
    %2622 = vmatpush.msra.mxu0 %v2480
    %2623 = vmatpush.msra.mxu0 %v2478
    %2624 = vmatpush.msra.mxu0 %v2476
    %2625 = vmatpush.msra.mxu0 %v2474
    %2626 = vmatpush.msra.mxu0 %v2472
    %2627 = vmatpush.msra.mxu0 %v2470
    %2628 = vmatpush.msra.mxu0 %v2468
    %2629 = vmatpush.msra.mxu0 %v2466
    %2630 = vmatpush.msra.mxu0 %v2464
    %2631 = vmatpush.msra.mxu0 %v2462
    %2632 = vmatpush.msra.mxu0 %v2460
    %2633 = vmatpush.msra.mxu0 %v2458
    %2634 = vmatpush.msra.mxu0 %v2456
    %2635 = vmatpush.msra.mxu0 %v2454
    %2636 = vmatmul.f32.gmra.mxu0 %v2432
    %v2637 = vpop.f32.mrf.mxu0
    %v2638 = vadd.f32 %v2575, %v2637
    %2639 = vdwg.mxu0
    %2640 = vmatpush.msra.mxu0 0.0
    %2641 = vmatpush.msra.mxu0 0.0
    %2642 = vmatpush.msra.mxu0 0.0
    %2643 = vmatpush.msra.mxu0 0.0
    %2644 = vmatpush.msra.mxu0 0.0
    %2645 = vmatpush.msra.mxu0 0.0
    %2646 = vmatpush.msra.mxu0 0.0
    %2647 = vmatpush.msra.mxu0 0.0
    %2648 = vmatpush.msra.mxu0 0.0
    %2649 = vmatpush.msra.mxu0 0.0
    %2650 = vmatpush.msra.mxu0 0.0
    %2651 = vmatpush.msra.mxu0 0.0
    %2652 = vmatpush.msra.mxu0 %v2492
    %2653 = vmatpush.msra.mxu0 %v2490
    %2654 = vmatpush.msra.mxu0 %v2488
    %2655 = vmatpush.msra.mxu0 %v2486
    %2656 = vmatmul.f32.gmra.mxu0 %v2618
    %v2657 = vpop.f32.mrf.mxu0
    %v2658 = vadd.f32 %v2638, %v2657
    %2659 = vdwg.mxu0
    %2660 = vmatpush.msra.mxu0 %v2485
    %2661 = vmatpush.msra.mxu0 %v2483
    %2662 = vmatpush.msra.mxu0 %v2481
    %2663 = vmatpush.msra.mxu0 %v2479
    %2664 = vmatpush.msra.mxu0 %v2477
    %2665 = vmatpush.msra.mxu0 %v2475
    %2666 = vmatpush.msra.mxu0 %v2473
    %2667 = vmatpush.msra.mxu0 %v2471
    %2668 = vmatpush.msra.mxu0 %v2469
    %2669 = vmatpush.msra.mxu0 %v2467
    %2670 = vmatpush.msra.mxu0 %v2465
    %2671 = vmatpush.msra.mxu0 %v2463
    %2672 = vmatpush.msra.mxu0 %v2461
    %2673 = vmatpush.msra.mxu0 %v2459
    %2674 = vmatpush.msra.mxu0 %v2457
    %2675 = vmatpush.msra.mxu0 %v2455
    %2676 = vmatmul.f32.gmra.mxu0 %v2432
    %v2677 = vpop.f32.mrf.mxu0
    %v2678 = vadd.f32 %v2615, %v2677
    %2679 = vdwg.mxu0
    %2680 = vmatpush.msra.mxu0 0.0
    %2681 = vmatpush.msra.mxu0 0.0
    %2682 = vmatpush.msra.mxu0 0.0
    %2683 = vmatpush.msra.mxu0 0.0
    %2684 = vmatpush.msra.mxu0 0.0
    %2685 = vmatpush.msra.mxu0 0.0
    %2686 = vmatpush.msra.mxu0 0.0
    %2687 = vmatpush.msra.mxu0 0.0
    %2688 = vmatpush.msra.mxu0 0.0
    %2689 = vmatpush.msra.mxu0 0.0
    %2690 = vmatpush.msra.mxu0 0.0
    %2691 = vmatpush.msra.mxu0 0.0
    %2692 = vmatpush.msra.mxu0 %v2493
    %2693 = vmatpush.msra.mxu0 %v2491
    %2694 = vmatpush.msra.mxu0 %v2489
    %2695 = vmatpush.msra.mxu0 %v2487
    %2696 = vmatmul.f32.gmra.mxu0 %v2618
    %v2697 = vpop.f32.mrf.mxu0
    %v2698 = vadd.f32 %v2678, %v2697
    %2699 = vdwg.mxu0
    %2700 = vmatpush.msra.mxu0 0.0
    %2701 = vmatpush.msra.mxu0 0.0
    %2702 = vmatpush.msra.mxu0 0.0
    %2703 = vmatpush.msra.mxu0 0.0
    %2704 = vmatpush.msra.mxu0 0.0
    %2705 = vmatpush.msra.mxu0 0.0
    %2706 = vmatpush.msra.mxu0 0.0
    %2707 = vmatpush.msra.mxu0 0.0
    %2708 = vmatpush.msra.mxu0 0.0
    %2709 = vmatpush.msra.mxu0 0.0
    %2710 = vmatpush.msra.mxu0 0.0
    %2711 = vmatpush.msra.mxu0 0.0
    %2712 = vmatpush.msra.mxu0 0.0
    %2713 = vmatpush.msra.mxu0 0.0
    %2714 = vmatpush.msra.mxu0 0.0
    %2715 = vmatpush.msra.mxu0 %v2409
    %2716 = vmatmul.f32.gmra.mxu0 %v2124
    %v2717 = vpop.f32.mrf.mxu0
    %v2718 = vadd.f32 0.0, %v2717
    %2719 = vdwg.mxu0
    %2720 = vmatpush.msra.mxu0 0.0
    %2721 = vmatpush.msra.mxu0 0.0
    %2722 = vmatpush.msra.mxu0 0.0
    %2723 = vmatpush.msra.mxu0 0.0
    %2724 = vmatpush.msra.mxu0 0.0
    %2725 = vmatpush.msra.mxu0 0.0
    %2726 = vmatpush.msra.mxu0 0.0
    %2727 = vmatpush.msra.mxu0 0.0
    %2728 = vmatpush.msra.mxu0 0.0
    %2729 = vmatpush.msra.mxu0 0.0
    %2730 = vmatpush.msra.mxu0 0.0
    %2731 = vmatpush.msra.mxu0 0.0
    %2732 = vmatpush.msra.mxu0 0.0
    %2733 = vmatpush.msra.mxu0 0.0
    %2734 = vmatpush.msra.mxu0 0.0
    %2735 = vmatpush.msra.mxu0 %v2412
    %2736 = vmatmul.f32.gmra.mxu0 %v2124
    %v2737 = vpop.f32.mrf.mxu0
    %v2738 = vadd.f32 0.0, %v2737
    %2739 = vdwg.mxu0
    %s2740 = scalar_lea.vmem %s24, 640
    %v2741 = vld [vmem:[%s2740] sm:$0xff]
    %v2742 = vld [vmem:[%s2740 + $0x8] sm:$0xff]
    %v2743 = vld [vmem:[%s2740 + $0x10] sm:$0xff]
    %v2744 = vld [vmem:[%s2740 + $0x18] sm:$0xff]
    %v2745 = vld [vmem:[%s2740 + $0x20] sm:$0xff]
    %v2746 = vld [vmem:[%s2740 + $0x28] sm:$0xff]
    %v2747 = vld [vmem:[%s2740 + $0x30] sm:$0xff]
    %v2748 = vld [vmem:[%s2740 + $0x38] sm:$0xff]
    %v2749 = vld [vmem:[%s2740 + $0x40] sm:$0xff]
    %v2750 = vld [vmem:[%s2740 + $0x48] sm:$0xff]
    %v2751 = vld [vmem:[%s2740 + $0x50] sm:$0xff]
    %v2752 = vld [vmem:[%s2740 + $0x58] sm:$0xff]
    %v2753 = vld [vmem:[%s2740 + $0x60] sm:$0xff]
    %v2754 = vld [vmem:[%s2740 + $0x68] sm:$0xff]
    %v2755 = vld [vmem:[%s2740 + $0x70] sm:$0xff]
    %v2756 = vld [vmem:[%s2740 + $0x78] sm:$0xff]
    %v2757 = vld [vmem:[%s2740 + $0x80] sm:$0xff]
    %v2758 = vld [vmem:[%s2740 + $0x88] sm:$0xff]
    %v2759 = vld [vmem:[%s2740 + $0x90] sm:$0xff]
    %v2760 = vld [vmem:[%s2740 + $0x98] sm:$0xff]
    %v2761 = vld [vmem:[%s2740 + $0xa0] sm:$0xff]
    %v2762 = vld [vmem:[%s2740 + $0xa8] sm:$0xff]
    %v2763 = vld [vmem:[%s2740 + $0xb0] sm:$0xff]
    %v2764 = vld [vmem:[%s2740 + $0xb8] sm:$0xff]
    %v2765 = vld [vmem:[%s2740 + $0xc0] sm:$0xff]
    %v2766 = vld [vmem:[%s2740 + $0xc8] sm:$0xff]
    %v2767 = vld [vmem:[%s2740 + $0xd0] sm:$0xff]
    %v2768 = vld [vmem:[%s2740 + $0xd8] sm:$0xff]
    %v2769 = vld [vmem:[%s2740 + $0xe0] sm:$0xff]
    %v2770 = vld [vmem:[%s2740 + $0xe8] sm:$0xff]
    %v2771 = vld [vmem:[%s2740 + $0xf0] sm:$0xff]
    %v2772 = vld [vmem:[%s2740 + $0xf8] sm:$0xff]
    %v2773 = vld [vmem:[%s2740 + $0x100] sm:$0xff]
    %v2774 = vld [vmem:[%s2740 + $0x108] sm:$0xff]
    %v2775 = vld [vmem:[%s2740 + $0x110] sm:$0xff]
    %v2776 = vld [vmem:[%s2740 + $0x118] sm:$0xff]
    %v2777 = vld [vmem:[%s2740 + $0x120] sm:$0xff]
    %v2778 = vld [vmem:[%s2740 + $0x128] sm:$0xff]
    %v2779 = vld [vmem:[%s2740 + $0x130] sm:$0xff]
    %v2780 = vld [vmem:[%s2740 + $0x138] sm:$0xff]
    %v2782 = vsel %vm1299, %v2738, 0
    %2784 = vmatpush.msra.mxu0 %v2771
    %2785 = vmatpush.msra.mxu0 %v2769
    %2786 = vmatpush.msra.mxu0 %v2767
    %2787 = vmatpush.msra.mxu0 %v2765
    %2788 = vmatpush.msra.mxu0 %v2763
    %2789 = vmatpush.msra.mxu0 %v2761
    %2790 = vmatpush.msra.mxu0 %v2759
    %2791 = vmatpush.msra.mxu0 %v2757
    %2792 = vmatpush.msra.mxu0 %v2755
    %2793 = vmatpush.msra.mxu0 %v2753
    %2794 = vmatpush.msra.mxu0 %v2751
    %2795 = vmatpush.msra.mxu0 %v2749
    %2796 = vmatpush.msra.mxu0 %v2747
    %2797 = vmatpush.msra.mxu0 %v2745
    %2798 = vmatpush.msra.mxu0 %v2743
    %2799 = vmatpush.msra.mxu0 %v2741
    %2800 = vmatmul.f32.gmra.mxu0 %v2718
    %v2801 = vpop.f32.mrf.mxu0
    %v2802 = vadd.f32 0.0, %v2801
    %2803 = vdwg.mxu0
    %2804 = vmatpush.msra.mxu0 0.0
    %2805 = vmatpush.msra.mxu0 0.0
    %2806 = vmatpush.msra.mxu0 0.0
    %2807 = vmatpush.msra.mxu0 0.0
    %2808 = vmatpush.msra.mxu0 0.0
    %2809 = vmatpush.msra.mxu0 0.0
    %2810 = vmatpush.msra.mxu0 0.0
    %2811 = vmatpush.msra.mxu0 0.0
    %2812 = vmatpush.msra.mxu0 0.0
    %2813 = vmatpush.msra.mxu0 0.0
    %2814 = vmatpush.msra.mxu0 0.0
    %2815 = vmatpush.msra.mxu0 0.0
    %2816 = vmatpush.msra.mxu0 %v2779
    %2817 = vmatpush.msra.mxu0 %v2777
    %2818 = vmatpush.msra.mxu0 %v2775
    %2819 = vmatpush.msra.mxu0 %v2773
    %2820 = vmatmul.f32.gmra.mxu0 %v2782
    %v2821 = vpop.f32.mrf.mxu0
    %v2822 = vadd.f32 %v2802, %v2821
    %2823 = vdwg.mxu0
    %2824 = vmatpush.msra.mxu0 %v2772
    %2825 = vmatpush.msra.mxu0 %v2770
    %2826 = vmatpush.msra.mxu0 %v2768
    %2827 = vmatpush.msra.mxu0 %v2766
    %2828 = vmatpush.msra.mxu0 %v2764
    %2829 = vmatpush.msra.mxu0 %v2762
    %2830 = vmatpush.msra.mxu0 %v2760
    %2831 = vmatpush.msra.mxu0 %v2758
    %2832 = vmatpush.msra.mxu0 %v2756
    %2833 = vmatpush.msra.mxu0 %v2754
    %2834 = vmatpush.msra.mxu0 %v2752
    %2835 = vmatpush.msra.mxu0 %v2750
    %2836 = vmatpush.msra.mxu0 %v2748
    %2837 = vmatpush.msra.mxu0 %v2746
    %2838 = vmatpush.msra.mxu0 %v2744
    %2839 = vmatpush.msra.mxu0 %v2742
    %2840 = vmatmul.f32.gmra.mxu0 %v2718
    %v2841 = vpop.f32.mrf.mxu0
    %v2842 = vadd.f32 0.0, %v2841
    %2843 = vdwg.mxu0
    %2844 = vmatpush.msra.mxu0 0.0
    %2845 = vmatpush.msra.mxu0 0.0
    %2846 = vmatpush.msra.mxu0 0.0
    %2847 = vmatpush.msra.mxu0 0.0
    %2848 = vmatpush.msra.mxu0 0.0
    %2849 = vmatpush.msra.mxu0 0.0
    %2850 = vmatpush.msra.mxu0 0.0
    %2851 = vmatpush.msra.mxu0 0.0
    %2852 = vmatpush.msra.mxu0 0.0
    %2853 = vmatpush.msra.mxu0 0.0
    %2854 = vmatpush.msra.mxu0 0.0
    %2855 = vmatpush.msra.mxu0 0.0
    %2856 = vmatpush.msra.mxu0 %v2780
    %2857 = vmatpush.msra.mxu0 %v2778
    %2858 = vmatpush.msra.mxu0 %v2776
    %2859 = vmatpush.msra.mxu0 %v2774
    %2860 = vmatmul.f32.gmra.mxu0 %v2782
    %v2861 = vpop.f32.mrf.mxu0
    %v2862 = vadd.f32 %v2842, %v2861
    %2863 = vdwg.mxu0
    %v2864 = vadd.f32 %v2658, %v2822
    %v2865 = vadd.f32 %v2698, %v2862
    %v2867 = vperm.slane %v2407, 0
    %v2868 = vperm.slane %v2407, 1
    %v2871 = vadd.f32 %v2864, %v2867
    %v2872 = vadd.f32 %v2865, %v2868
    %vm2873 = vcmp.ge.f32.partialorder %v2871, 0.0
    %vm2874 = vcmp.ge.f32.partialorder %v2872, 0.0
    %v2875 = vmul.f32 %v2871, 0.25
    %v2876 = vmul.f32 %v2872, 0.25
    %v2877 = vsel %vm2873, %v2871, %v2875
    %v2878 = vsel %vm2874, %v2872, %v2876
    %v2879 = vadd.f32 %v2877, %v2232
    %v2880 = vadd.f32 %v2878, %v2233
    %v2882 = vsel %vm325, %v2405, 0
    %v2885 = vsel %vm325, %v2406, 0
    %2887 = vmatpush.msra.mxu0 0.0
    %2888 = vmatpush.msra.mxu0 0.0
    %2889 = vmatpush.msra.mxu0 0.0
    %2890 = vmatpush.msra.mxu0 0.0
    %2891 = vmatpush.msra.mxu0 0.0
    %2892 = vmatpush.msra.mxu0 0.0
    %2893 = vmatpush.msra.mxu0 0.0
    %2894 = vmatpush.msra.mxu0 0.0
    %2895 = vmatpush.msra.mxu0 0.0
    %2896 = vmatpush.msra.mxu0 0.0
    %2897 = vmatpush.msra.mxu0 0.0
    %2898 = vmatpush.msra.mxu0 0.0
    %2899 = vmatpush.msra.mxu0 0.0
    %2900 = vmatpush.msra.mxu0 0.0
    %2901 = vmatpush.msra.mxu0 0.0
    %2902 = vmatpush.msra.mxu0 %v2882
    %2903 = vmatmul.f32.gmra.mxu0 %v1951
    %v2904 = vpop.f32.mrf.mxu0
    %v2905 = vadd.f32 0.0, %v2904
    %2906 = vdwg.mxu0
    %2907 = vmatpush.msra.mxu0 0.0
    %2908 = vmatpush.msra.mxu0 0.0
    %2909 = vmatpush.msra.mxu0 0.0
    %2910 = vmatpush.msra.mxu0 0.0
    %2911 = vmatpush.msra.mxu0 0.0
    %2912 = vmatpush.msra.mxu0 0.0
    %2913 = vmatpush.msra.mxu0 0.0
    %2914 = vmatpush.msra.mxu0 0.0
    %2915 = vmatpush.msra.mxu0 0.0
    %2916 = vmatpush.msra.mxu0 0.0
    %2917 = vmatpush.msra.mxu0 0.0
    %2918 = vmatpush.msra.mxu0 0.0
    %2919 = vmatpush.msra.mxu0 0.0
    %2920 = vmatpush.msra.mxu0 0.0
    %2921 = vmatpush.msra.mxu0 0.0
    %2922 = vmatpush.msra.mxu0 %v2885
    %2923 = vmatmul.f32.gmra.mxu0 %v1951
    %v2924 = vpop.f32.mrf.mxu0
    %v2925 = vadd.f32 0.0, %v2924
    %2926 = vdwg.mxu0
    %v2927 = vsel %vm1299, %v2406, 0
    %2929 = vmatpush.msra.mxu0 %v2525
    %2930 = vmatpush.msra.mxu0 %v2523
    %2931 = vmatpush.msra.mxu0 %v2521
    %2932 = vmatpush.msra.mxu0 %v2519
    %2933 = vmatpush.msra.mxu0 %v2517
    %2934 = vmatpush.msra.mxu0 %v2515
    %2935 = vmatpush.msra.mxu0 %v2513
    %2936 = vmatpush.msra.mxu0 %v2511
    %2937 = vmatpush.msra.mxu0 %v2509
    %2938 = vmatpush.msra.mxu0 %v2507
    %2939 = vmatpush.msra.mxu0 %v2505
    %2940 = vmatpush.msra.mxu0 %v2503
    %2941 = vmatpush.msra.mxu0 %v2501
    %2942 = vmatpush.msra.mxu0 %v2499
    %2943 = vmatpush.msra.mxu0 %v2497
    %2944 = vmatpush.msra.mxu0 %v2495
    %2945 = vmatmul.f32.gmra.mxu0 %v2405
    %v2946 = vpop.f32.mrf.mxu0
    %v2947 = vadd.f32 0.0, %v2946
    %2948 = vdwg.mxu0
    %2949 = vmatpush.msra.mxu0 0.0
    %2950 = vmatpush.msra.mxu0 0.0
    %2951 = vmatpush.msra.mxu0 0.0
    %2952 = vmatpush.msra.mxu0 0.0
    %2953 = vmatpush.msra.mxu0 0.0
    %2954 = vmatpush.msra.mxu0 0.0
    %2955 = vmatpush.msra.mxu0 0.0
    %2956 = vmatpush.msra.mxu0 0.0
    %2957 = vmatpush.msra.mxu0 0.0
    %2958 = vmatpush.msra.mxu0 0.0
    %2959 = vmatpush.msra.mxu0 0.0
    %2960 = vmatpush.msra.mxu0 0.0
    %2961 = vmatpush.msra.mxu0 %v2533
    %2962 = vmatpush.msra.mxu0 %v2531
    %2963 = vmatpush.msra.mxu0 %v2529
    %2964 = vmatpush.msra.mxu0 %v2527
    %2965 = vmatmul.f32.gmra.mxu0 %v2927
    %v2966 = vpop.f32.mrf.mxu0
    %v2967 = vadd.f32 %v2947, %v2966
    %2968 = vdwg.mxu0
    %2969 = vmatpush.msra.mxu0 %v2526
    %2970 = vmatpush.msra.mxu0 %v2524
    %2971 = vmatpush.msra.mxu0 %v2522
    %2972 = vmatpush.msra.mxu0 %v2520
    %2973 = vmatpush.msra.mxu0 %v2518
    %2974 = vmatpush.msra.mxu0 %v2516
    %2975 = vmatpush.msra.mxu0 %v2514
    %2976 = vmatpush.msra.mxu0 %v2512
    %2977 = vmatpush.msra.mxu0 %v2510
    %2978 = vmatpush.msra.mxu0 %v2508
    %2979 = vmatpush.msra.mxu0 %v2506
    %2980 = vmatpush.msra.mxu0 %v2504
    %2981 = vmatpush.msra.mxu0 %v2502
    %2982 = vmatpush.msra.mxu0 %v2500
    %2983 = vmatpush.msra.mxu0 %v2498
    %2984 = vmatpush.msra.mxu0 %v2496
    %2985 = vmatmul.f32.gmra.mxu0 %v2405
    %v2986 = vpop.f32.mrf.mxu0
    %v2987 = vadd.f32 0.0, %v2986
    %2988 = vdwg.mxu0
    %2989 = vmatpush.msra.mxu0 0.0
    %2990 = vmatpush.msra.mxu0 0.0
    %2991 = vmatpush.msra.mxu0 0.0
    %2992 = vmatpush.msra.mxu0 0.0
    %2993 = vmatpush.msra.mxu0 0.0
    %2994 = vmatpush.msra.mxu0 0.0
    %2995 = vmatpush.msra.mxu0 0.0
    %2996 = vmatpush.msra.mxu0 0.0
    %2997 = vmatpush.msra.mxu0 0.0
    %2998 = vmatpush.msra.mxu0 0.0
    %2999 = vmatpush.msra.mxu0 0.0
    %3000 = vmatpush.msra.mxu0 0.0
    %3001 = vmatpush.msra.mxu0 %v2534
    %3002 = vmatpush.msra.mxu0 %v2532
    %3003 = vmatpush.msra.mxu0 %v2530
    %3004 = vmatpush.msra.mxu0 %v2528
    %3005 = vmatmul.f32.gmra.mxu0 %v2927
    %v3006 = vpop.f32.mrf.mxu0
    %v3007 = vadd.f32 %v2987, %v3006
    %3008 = vdwg.mxu0
    %v3010 = vsel %vm1299, %v2925, 0
    %3012 = vmatpush.msra.mxu0 %v2484
    %3013 = vmatpush.msra.mxu0 %v2482
    %3014 = vmatpush.msra.mxu0 %v2480
    %3015 = vmatpush.msra.mxu0 %v2478
    %3016 = vmatpush.msra.mxu0 %v2476
    %3017 = vmatpush.msra.mxu0 %v2474
    %3018 = vmatpush.msra.mxu0 %v2472
    %3019 = vmatpush.msra.mxu0 %v2470
    %3020 = vmatpush.msra.mxu0 %v2468
    %3021 = vmatpush.msra.mxu0 %v2466
    %3022 = vmatpush.msra.mxu0 %v2464
    %3023 = vmatpush.msra.mxu0 %v2462
    %3024 = vmatpush.msra.mxu0 %v2460
    %3025 = vmatpush.msra.mxu0 %v2458
    %3026 = vmatpush.msra.mxu0 %v2456
    %3027 = vmatpush.msra.mxu0 %v2454
    %3028 = vmatmul.f32.gmra.mxu0 %v2905
    %v3029 = vpop.f32.mrf.mxu0
    %v3030 = vadd.f32 %v2967, %v3029
    %3031 = vdwg.mxu0
    %3032 = vmatpush.msra.mxu0 0.0
    %3033 = vmatpush.msra.mxu0 0.0
    %3034 = vmatpush.msra.mxu0 0.0
    %3035 = vmatpush.msra.mxu0 0.0
    %3036 = vmatpush.msra.mxu0 0.0
    %3037 = vmatpush.msra.mxu0 0.0
    %3038 = vmatpush.msra.mxu0 0.0
    %3039 = vmatpush.msra.mxu0 0.0
    %3040 = vmatpush.msra.mxu0 0.0
    %3041 = vmatpush.msra.mxu0 0.0
    %3042 = vmatpush.msra.mxu0 0.0
    %3043 = vmatpush.msra.mxu0 0.0
    %3044 = vmatpush.msra.mxu0 %v2492
    %3045 = vmatpush.msra.mxu0 %v2490
    %3046 = vmatpush.msra.mxu0 %v2488
    %3047 = vmatpush.msra.mxu0 %v2486
    %3048 = vmatmul.f32.gmra.mxu0 %v3010
    %v3049 = vpop.f32.mrf.mxu0
    %v3050 = vadd.f32 %v3030, %v3049
    %3051 = vdwg.mxu0
    %3052 = vmatpush.msra.mxu0 %v2485
    %3053 = vmatpush.msra.mxu0 %v2483
    %3054 = vmatpush.msra.mxu0 %v2481
    %3055 = vmatpush.msra.mxu0 %v2479
    %3056 = vmatpush.msra.mxu0 %v2477
    %3057 = vmatpush.msra.mxu0 %v2475
    %3058 = vmatpush.msra.mxu0 %v2473
    %3059 = vmatpush.msra.mxu0 %v2471
    %3060 = vmatpush.msra.mxu0 %v2469
    %3061 = vmatpush.msra.mxu0 %v2467
    %3062 = vmatpush.msra.mxu0 %v2465
    %3063 = vmatpush.msra.mxu0 %v2463
    %3064 = vmatpush.msra.mxu0 %v2461
    %3065 = vmatpush.msra.mxu0 %v2459
    %3066 = vmatpush.msra.mxu0 %v2457
    %3067 = vmatpush.msra.mxu0 %v2455
    %3068 = vmatmul.f32.gmra.mxu0 %v2905
    %v3069 = vpop.f32.mrf.mxu0
    %v3070 = vadd.f32 %v3007, %v3069
    %3071 = vdwg.mxu0
    %3072 = vmatpush.msra.mxu0 0.0
    %3073 = vmatpush.msra.mxu0 0.0
    %3074 = vmatpush.msra.mxu0 0.0
    %3075 = vmatpush.msra.mxu0 0.0
    %3076 = vmatpush.msra.mxu0 0.0
    %3077 = vmatpush.msra.mxu0 0.0
    %3078 = vmatpush.msra.mxu0 0.0
    %3079 = vmatpush.msra.mxu0 0.0
    %3080 = vmatpush.msra.mxu0 0.0
    %3081 = vmatpush.msra.mxu0 0.0
    %3082 = vmatpush.msra.mxu0 0.0
    %3083 = vmatpush.msra.mxu0 0.0
    %3084 = vmatpush.msra.mxu0 %v2493
    %3085 = vmatpush.msra.mxu0 %v2491
    %3086 = vmatpush.msra.mxu0 %v2489
    %3087 = vmatpush.msra.mxu0 %v2487
    %3088 = vmatmul.f32.gmra.mxu0 %v3010
    %v3089 = vpop.f32.mrf.mxu0
    %v3090 = vadd.f32 %v3070, %v3089
    %3091 = vdwg.mxu0
    %3092 = vmatpush.msra.mxu0 0.0
    %3093 = vmatpush.msra.mxu0 0.0
    %3094 = vmatpush.msra.mxu0 0.0
    %3095 = vmatpush.msra.mxu0 0.0
    %3096 = vmatpush.msra.mxu0 0.0
    %3097 = vmatpush.msra.mxu0 0.0
    %3098 = vmatpush.msra.mxu0 0.0
    %3099 = vmatpush.msra.mxu0 0.0
    %3100 = vmatpush.msra.mxu0 0.0
    %3101 = vmatpush.msra.mxu0 0.0
    %3102 = vmatpush.msra.mxu0 0.0
    %3103 = vmatpush.msra.mxu0 0.0
    %3104 = vmatpush.msra.mxu0 0.0
    %3105 = vmatpush.msra.mxu0 0.0
    %3106 = vmatpush.msra.mxu0 0.0
    %3107 = vmatpush.msra.mxu0 %v2882
    %3108 = vmatmul.f32.gmra.mxu0 %v2124
    %v3109 = vpop.f32.mrf.mxu0
    %v3110 = vadd.f32 0.0, %v3109
    %3111 = vdwg.mxu0
    %3112 = vmatpush.msra.mxu0 0.0
    %3113 = vmatpush.msra.mxu0 0.0
    %3114 = vmatpush.msra.mxu0 0.0
    %3115 = vmatpush.msra.mxu0 0.0
    %3116 = vmatpush.msra.mxu0 0.0
    %3117 = vmatpush.msra.mxu0 0.0
    %3118 = vmatpush.msra.mxu0 0.0
    %3119 = vmatpush.msra.mxu0 0.0
    %3120 = vmatpush.msra.mxu0 0.0
    %3121 = vmatpush.msra.mxu0 0.0
    %3122 = vmatpush.msra.mxu0 0.0
    %3123 = vmatpush.msra.mxu0 0.0
    %3124 = vmatpush.msra.mxu0 0.0
    %3125 = vmatpush.msra.mxu0 0.0
    %3126 = vmatpush.msra.mxu0 0.0
    %3127 = vmatpush.msra.mxu0 %v2885
    %3128 = vmatmul.f32.gmra.mxu0 %v2124
    %v3129 = vpop.f32.mrf.mxu0
    %v3130 = vadd.f32 0.0, %v3129
    %3131 = vdwg.mxu0
    %v3133 = vsel %vm1299, %v3130, 0
    %3135 = vmatpush.msra.mxu0 %v2771
    %3136 = vmatpush.msra.mxu0 %v2769
    %3137 = vmatpush.msra.mxu0 %v2767
    %3138 = vmatpush.msra.mxu0 %v2765
    %3139 = vmatpush.msra.mxu0 %v2763
    %3140 = vmatpush.msra.mxu0 %v2761
    %3141 = vmatpush.msra.mxu0 %v2759
    %3142 = vmatpush.msra.mxu0 %v2757
    %3143 = vmatpush.msra.mxu0 %v2755
    %3144 = vmatpush.msra.mxu0 %v2753
    %3145 = vmatpush.msra.mxu0 %v2751
    %3146 = vmatpush.msra.mxu0 %v2749
    %3147 = vmatpush.msra.mxu0 %v2747
    %3148 = vmatpush.msra.mxu0 %v2745
    %3149 = vmatpush.msra.mxu0 %v2743
    %3150 = vmatpush.msra.mxu0 %v2741
    %3151 = vmatmul.f32.gmra.mxu0 %v3110
    %v3152 = vpop.f32.mrf.mxu0
    %v3153 = vadd.f32 0.0, %v3152
    %3154 = vdwg.mxu0
    %3155 = vmatpush.msra.mxu0 0.0
    %3156 = vmatpush.msra.mxu0 0.0
    %3157 = vmatpush.msra.mxu0 0.0
    %3158 = vmatpush.msra.mxu0 0.0
    %3159 = vmatpush.msra.mxu0 0.0
    %3160 = vmatpush.msra.mxu0 0.0
    %3161 = vmatpush.msra.mxu0 0.0
    %3162 = vmatpush.msra.mxu0 0.0
    %3163 = vmatpush.msra.mxu0 0.0
    %3164 = vmatpush.msra.mxu0 0.0
    %3165 = vmatpush.msra.mxu0 0.0
    %3166 = vmatpush.msra.mxu0 0.0
    %3167 = vmatpush.msra.mxu0 %v2779
    %3168 = vmatpush.msra.mxu0 %v2777
    %3169 = vmatpush.msra.mxu0 %v2775
    %3170 = vmatpush.msra.mxu0 %v2773
    %3171 = vmatmul.f32.gmra.mxu0 %v3133
    %v3172 = vpop.f32.mrf.mxu0
    %v3173 = vadd.f32 %v3153, %v3172
    %3174 = vdwg.mxu0
    %3175 = vmatpush.msra.mxu0 %v2772
    %3176 = vmatpush.msra.mxu0 %v2770
    %3177 = vmatpush.msra.mxu0 %v2768
    %3178 = vmatpush.msra.mxu0 %v2766
    %3179 = vmatpush.msra.mxu0 %v2764
    %3180 = vmatpush.msra.mxu0 %v2762
    %3181 = vmatpush.msra.mxu0 %v2760
    %3182 = vmatpush.msra.mxu0 %v2758
    %3183 = vmatpush.msra.mxu0 %v2756
    %3184 = vmatpush.msra.mxu0 %v2754
    %3185 = vmatpush.msra.mxu0 %v2752
    %3186 = vmatpush.msra.mxu0 %v2750
    %3187 = vmatpush.msra.mxu0 %v2748
    %3188 = vmatpush.msra.mxu0 %v2746
    %3189 = vmatpush.msra.mxu0 %v2744
    %3190 = vmatpush.msra.mxu0 %v2742
    %3191 = vmatmul.f32.gmra.mxu0 %v3110
    %v3192 = vpop.f32.mrf.mxu0
    %v3193 = vadd.f32 0.0, %v3192
    %3194 = vdwg.mxu0
    %3195 = vmatpush.msra.mxu0 0.0
    %3196 = vmatpush.msra.mxu0 0.0
    %3197 = vmatpush.msra.mxu0 0.0
    %3198 = vmatpush.msra.mxu0 0.0
    %3199 = vmatpush.msra.mxu0 0.0
    %3200 = vmatpush.msra.mxu0 0.0
    %3201 = vmatpush.msra.mxu0 0.0
    %3202 = vmatpush.msra.mxu0 0.0
    %3203 = vmatpush.msra.mxu0 0.0
    %3204 = vmatpush.msra.mxu0 0.0
    %3205 = vmatpush.msra.mxu0 0.0
    %3206 = vmatpush.msra.mxu0 0.0
    %3207 = vmatpush.msra.mxu0 %v2780
    %3208 = vmatpush.msra.mxu0 %v2778
    %3209 = vmatpush.msra.mxu0 %v2776
    %3210 = vmatpush.msra.mxu0 %v2774
    %3211 = vmatmul.f32.gmra.mxu0 %v3133
    %v3212 = vpop.f32.mrf.mxu0
    %v3213 = vadd.f32 %v3193, %v3212
    %3214 = vdwg.mxu0
    %v3215 = vadd.f32 %v3050, %v3173
    %v3216 = vadd.f32 %v3090, %v3213
    %v3217 = vadd.f32 %v3215, %v2867
    %v3218 = vadd.f32 %v3216, %v2868
    %vm3219 = vcmp.ge.f32.partialorder %v3217, 0.0
    %vm3220 = vcmp.ge.f32.partialorder %v3218, 0.0
    %v3221 = vmul.f32 %v3217, 0.25
    %v3222 = vmul.f32 %v3218, 0.25
    %v3223 = vsel %vm3219, %v3217, %v3221
    %v3224 = vsel %vm3220, %v3218, %v3222
    %v3225 = vadd.f32 %v3223, %v2405
    %v3226 = vadd.f32 %v3224, %v2406
    %v3229 = vrot.slane %v2880, 4
    %vm3230 = vcmask 1043456
    %v3231 = vsel %vm3230, %v2879, %v3229
    %vm3233 = vcmask 260100
    %vm3234 = vmor %vm3233, %vm325
    %3235 = vst.msk [vmem:[%s26] sm:$0x77] %vm3234, %v3231
    %v3238 = vrot.slane %v3226, 4
    %v3239 = vsel %vm3230, %v3225, %v3238
    %s3241 = scalar_lea.vmem %s26, 8
    %3242 = vst.msk [vmem:[%s3241] sm:$0x77] %vm3234, %v3239
    // Predicated region
    $region146: #{model_forward.1} parent=1 // pred_check
      _
    $region147: #{model_forward.1} parent=1 // pred_check_branch
      %3244 = sbr.rel (0) target = $region149
    $region148: #{model_forward.1} parent=1 // pred_region
      _
    $region149: #{model_forward.1} parent=1 // pred_fallthru
      _
    // Predicated region
    $region150: #{model_forward.1} parent=1 // pred_check
      _
    $region151: #{model_forward.1} parent=1 // pred_check_branch
      %3246 = sbr.rel (0) target = $region153
    $region152: #{model_forward.1} parent=1 // pred_region
      _
    $region153: #{model_forward.1} parent=1 // pred_fallthru
      _
    %3247 = vsyncpa [#allocation3], 1
    %3248 = vsyncpa [#allocation5], 1
    %3249 = vsyncpa [#allocation8], 1
    %3250 = vsyncpa [#allocation11], 1
    %3251 = vsyncpa [#allocation14], 1
    %3252 = vsyncpa [#allocation17], 1

</llo_original>
